<compile_context>
chip_gen: v7x
topology: tpu7x:2x2x1
jax: 0.10.0
libtpu: 0.0.40
codegen_flags: <defaults>
</compile_context>

<pallas_src>
import functools
import math

import jax
import jax.numpy as jnp
from jax import lax
from jax.experimental import pallas as pl
from jax.experimental.pallas import tpu as pltpu

_LN_EPS = 1e-5


# ----------------------------- kernel helpers -------------------------------
def _layernorm(x, g, b):
    mu = jnp.mean(x, axis=-1, keepdims=True)
    var = jnp.mean((x - mu) ** 2, axis=-1, keepdims=True)
    return (x - mu) * lax.rsqrt(var + _LN_EPS) * g + b


def _gelu_tanh(x):
    # tanh-approx GELU (PyTorch GELU(approximate='tanh')).  Max abs error vs
    # the exact erf GELU used by nn.GELU() is ~1e-3, inside the test
    # tolerance; jnp.tanh runs on the EUP slot (free under MXU work).
    c = math.sqrt(2.0 / math.pi)
    return 0.5 * x * (1.0 + jnp.tanh(c * (x + 0.044715 * (x * x * x))))


# ------------------------------- the kernel ---------------------------------
def encoder_block_kernel(x_ref,
                         g1_ref, be1_ref,
                         wqkv_ref, bqkv_ref,
                         wot_ref, bo_ref,
                         g2_ref, be2_ref,
                         w1t_ref, bm1_ref,
                         w2t_ref, bm2_ref,
                         o_ref,
                         *, num_heads, block_b, seq):
    E = o_ref.shape[-1]
    hd = E // num_heads
    n_rows = block_b * seq

    # Residual stream in f32; all matmul operands bf16 with f32 accumulation.
    x = x_ref[...].astype(jnp.float32).reshape(n_rows, E)

    # ----- self-attention branch:  x + Wo @ MHA(LN1(x)) -----
    xn = _layernorm(x, g1_ref[...], be1_ref[...])
    # Fused QKV projection; 1/sqrt(hd) is already folded into the Q columns
    # of wqkv / bqkv at pack time.
    qkv = jnp.dot(xn.astype(jnp.bfloat16), wqkv_ref[...],
                  preferred_element_type=jnp.float32) + bqkv_ref[...]
    q2 = qkv[:, :E].astype(jnp.bfloat16)
    k2 = qkv[:, E:2 * E].astype(jnp.bfloat16)
    v2 = qkv[:, 2 * E:].astype(jnp.bfloat16)

    # Per-head attention, batched over block_b sequences with a rank-3
    # dot_general (single leading batch dim).  Head outputs are concatenated
    # along the lane axis so the output projection gets one lane-dense bf16
    # (n_rows, E) operand — no masked stores into an f32 scratch.
    head_outs = []
    for h in range(num_heads):
        c0 = h * hd
        qh = q2[:, c0:c0 + hd].reshape(block_b, seq, hd)
        kh = k2[:, c0:c0 + hd].reshape(block_b, seq, hd)
        vh = v2[:, c0:c0 + hd].reshape(block_b, seq, hd)
        s = jnp.einsum("bqd,bkd->bqk", qh, kh,
                       preferred_element_type=jnp.float32)
        s = s - jnp.max(s, axis=-1, keepdims=True)
        p = jnp.exp(s)
        p = p * pl.reciprocal(jnp.sum(p, axis=-1, keepdims=True), approx=True)
        oh = jnp.einsum("bqk,bkd->bqd", p.astype(jnp.bfloat16), vh,
                        preferred_element_type=jnp.float32)
        head_outs.append(oh.reshape(n_rows, hd).astype(jnp.bfloat16))

    attn_concat = jnp.concatenate(head_outs, axis=-1)          # (n_rows, E) bf16
    attn_out = jnp.dot(attn_concat, wot_ref[...],
                       preferred_element_type=jnp.float32) + bo_ref[...]
    # TODO(synk): nn.Dropout is stochastic at train time; identity here (eval mode).
    x = x + attn_out

    # ----- MLP branch:  x + Lin2(GELU(Lin1(LN2(x)))) -----
    xn2 = _layernorm(x, g2_ref[...], be2_ref[...])
    h1 = jnp.dot(xn2.astype(jnp.bfloat16), w1t_ref[...],
                 preferred_element_type=jnp.float32) + bm1_ref[...]
    h1 = _gelu_tanh(h1).astype(jnp.bfloat16)          # bf16 operand for 2nd matmul
    h2 = jnp.dot(h1, w2t_ref[...],
                 preferred_element_type=jnp.float32) + bm2_ref[...]

    o_ref[...] = (x + h2).reshape(block_b, seq, E).astype(o_ref.dtype)


# ------------------------------- wrappers ------------------------------------
_BUFFERED_WEIGHTS_OK = True   # flipped off if this jax rejects pipeline_mode=Buffered(1)


def _vmem_limit_bytes(frac=0.75):
    """Derive the VMEM budget from the actual chip instead of hardcoding."""
    fallback = 64 * 1024 * 1024
    try:
        cap = getattr(pltpu.get_tpu_info(), "vmem_capacity_bytes", None)
    except Exception:
        cap = None
    cap = cap or fallback
    return int(min(max(cap * frac, 32 * 1024 * 1024), 100 * 1024 * 1024))


def _weight_spec(shape, buffered):
    if buffered:
        # Constant-index weights: single buffer (no double-buffering of
        # never-changing blocks) -> halves weight VMEM footprint.
        return pl.BlockSpec(shape, lambda i: (0, 0), pipeline_mode=pl.Buffered(1))
    return pl.BlockSpec(shape, lambda i: (0, 0))


def encoder_block(x, P, num_heads, block_b=1):
    global _BUFFERED_WEIGHTS_OK
    B, S, E = x.shape
    assert B % block_b == 0, "block_b must divide the batch size"
    assert E % num_heads == 0, "emb_dim must be divisible by num_heads"

    inputs = (x,
              P["g1"], P["b1"],
              P["wqkvt"], P["bqkv"],
              P["wot"], P["bo"],
              P["g2"], P["b2"],
              P["w1t"], P["bm1"], P["w2t"], P["bm2"])

    kern = functools.partial(encoder_block_kernel, num_heads=num_heads,
                             block_b=block_b, seq=S)

    def run(buffered):
        in_specs = [pl.BlockSpec((block_b, S, E), lambda i: (i, 0, 0))]
        in_specs += [_weight_spec(a.shape, buffered) for a in inputs[1:]]
        return pl.pallas_call(
            kern,
            out_shape=jax.ShapeDtypeStruct((B, S, E), x.dtype),
            grid_spec=pltpu.PrefetchScalarGridSpec(
                num_scalar_prefetch=0,
                grid=(B // block_b,),       # keep >= 2 so v7x uses both TCs
                in_specs=in_specs,
                out_specs=pl.BlockSpec((block_b, S, E), lambda i: (i, 0, 0)),
            ),
            compiler_params=pltpu.CompilerParams(
                dimension_semantics=("parallel",),
                vmem_limit_bytes=_vmem_limit_bytes(),
            ),
        )(*inputs)

    if _BUFFERED_WEIGHTS_OK:
        try:
            out = run(True)
            jax.block_until_ready(out)
            return out
        except Exception:
            _BUFFERED_WEIGHTS_OK = False     # older jax: fall back, still correct
    return run(False)


def transformer_encoder(x, packed_params, num_heads, block_b=1):
    for P in packed_params:
        x = encoder_block(x, P, num_heads, block_b=block_b)
    return x


# --------------------------- deterministic params ----------------------------
def init_layer_params(key, emb_dim, mlp_ratio):
    """PyTorch-layout f32 parameters (ground truth for the reference)."""
    hid = mlp_ratio * emb_dim
    ks = jax.random.split(key, 8)
    rnd = lambda k, shape, s: (s * jax.random.normal(k, shape)).astype(jnp.float32)
    return dict(
        in_proj_w=rnd(ks[0], (3 * emb_dim, emb_dim), 0.08),   # (3E, E), rows = q,k,v
        in_proj_b=rnd(ks[1], (3 * emb_dim,), 0.01),
        out_proj_w=rnd(ks[2], (emb_dim, emb_dim), 0.08),      # torch (out, in)
        out_proj_b=rnd(ks[3], (emb_dim,), 0.01),
        lin1_w=rnd(ks[4], (hid, emb_dim), 0.08),
        lin1_b=rnd(ks[5], (hid,), 0.01),
        lin2_w=rnd(ks[6], (emb_dim, hid), 0.08),
        lin2_b=rnd(ks[7], (emb_dim,), 0.01),
    )


def pack_layer_params(P, num_heads):
    """Kernel-ready params: pre-transposed (in,out), fused QKV with the
    1/sqrt(head_dim) attention scale folded into the Q columns, bf16 weights."""
    E = P["out_proj_w"].shape[0]
    hd = E // num_heads
    scale = 1.0 / math.sqrt(hd)
    wq, wk, wv = jnp.split(P["in_proj_w"], 3, axis=0)
    bq, bk, bv = jnp.split(P["in_proj_b"], 3, axis=0)
    wqkvt = jnp.concatenate([wq.T * scale, wk.T, wv.T], axis=1)          # (E, 3E)
    bqkv = jnp.concatenate([bq * scale, bk, bv]).reshape(1, -1).astype(jnp.float32)
    row = lambda a: a.reshape(1, -1).astype(jnp.float32)
    bf = lambda a: a.astype(jnp.bfloat16)
    return dict(
        g1=jnp.ones((1, E), jnp.float32), b1=jnp.zeros((1, E), jnp.float32),
        wqkvt=bf(wqkvt), bqkv=bqkv,
        wot=bf(P["out_proj_w"].T), bo=row(P["out_proj_b"]),
        g2=jnp.ones((1, E), jnp.float32), b2=jnp.zeros((1, E), jnp.float32),
        w1t=bf(P["lin1_w"].T), bm1=row(P["lin1_b"]),
        w2t=bf(P["lin2_w"].T), bm2=row(P["lin2_b"]),
    )


# --------------------------- pure-JAX reference ------------------------------
def _ref_block(x, P, num_heads):
    B, S, E = x.shape
    hd = E // num_heads

    def ln(v):  # gamma=1, beta=0 (PyTorch default init)
        mu = v.mean(-1, keepdims=True)
        var = ((v - mu) ** 2).mean(-1, keepdims=True)
        return (v - mu) / jnp.sqrt(var + _LN_EPS)

    wq, wk, wv = jnp.split(P["in_proj_w"], 3, axis=0)
    bq, bk, bv = jnp.split(P["in_proj_b"], 3, axis=0)
    xn = ln(x)
    q = xn @ wq.T + bq
    k = xn @ wk.T + bk
    v = xn @ wv.T + bv
    q = q.reshape(B, S, num_heads, hd).transpose(0, 2, 1, 3)
    k = k.reshape(B, S, num_heads, hd).transpose(0, 2, 1, 3)
    v = v.reshape(B, S, num_heads, hd).transpose(0, 2, 1, 3)
    s = jnp.einsum("bhqd,bhkd->bhqk", q, k) / jnp.sqrt(jnp.float32(hd))
    p = jax.nn.softmax(s, axis=-1)
    o = jnp.einsum("bhqk,bhkd->bhqd", p, v).transpose(0, 2, 1, 3).reshape(B, S, E)
    o = o @ P["out_proj_w"].T + P["out_proj_b"]
    x = x + o
    xn2 = ln(x)
    h = jax.nn.gelu(xn2 @ P["lin1_w"].T + P["lin1_b"], approximate=False)
    h = h @ P["lin2_w"].T + P["lin2_b"]
    return x + h


def transformer_encoder_ref(x, params_list, num_heads):
    for P in params_list:
        x = _ref_block(x, P, num_heads)
    return x


# ----------------------------------- main ------------------------------------
if __name__ == "__main__":
    config = {"emb_dim": 32, "num_heads": 4, "num_layers": 2, "mlp_ratio": 4, "dropout": 0.1}
    B, S = 4, 8
    block_b = 2   # grid = B//block_b = 2 (even -> both v7x TCs busy); at real
                  # shapes pick block_b so block_b*S is a multiple of 256 (v6e/v7x)
                  # or 128 (v5e).

    key = jax.random.PRNGKey(0)
    kx, kp = jax.random.split(key)
    x = jax.random.normal(kx, (B, S, config["emb_dim"]), dtype=jnp.float32)

    layer_keys = jax.random.split(kp, config["num_layers"])
    raw_params = [init_layer_params(k, config["emb_dim"], config["mlp_ratio"])
                  for k in layer_keys]
    packed_params = [pack_layer_params(P, config["num_heads"]) for P in raw_params]

    out = transformer_encoder(x, packed_params, config["num_heads"], block_b=block_b)
    out = jax.block_until_ready(out)

    ref = transformer_encoder_ref(x, raw_params, config["num_heads"])
    assert out.shape == x.shape and out.dtype == x.dtype
    # Tolerance covers bf16 matmul operands + tanh-approx GELU vs exact f32 ref.
    if not jnp.allclose(out, ref, atol=3e-2, rtol=3e-2):
        raise AssertionError(
            f"mismatch vs reference, max abs diff = {float(jnp.max(jnp.abs(out - ref)))}")

    print("KERNEL_OK")
</pallas_src>

<mosaic_0001>
module attributes {stable_mosaic.version = 11 : i64} {
  func.func @encoder_block_kernel(%arg0: i32, %arg1: memref<2x8x32xf32, #tpu.memory_space<vmem>>, %arg2: memref<1x32xf32, #tpu.memory_space<vmem>>, %arg3: memref<1x32xf32, #tpu.memory_space<vmem>>, %arg4: memref<32x96xbf16, #tpu.memory_space<vmem>>, %arg5: memref<1x96xf32, #tpu.memory_space<vmem>>, %arg6: memref<32x32xbf16, #tpu.memory_space<vmem>>, %arg7: memref<1x32xf32, #tpu.memory_space<vmem>>, %arg8: memref<1x32xf32, #tpu.memory_space<vmem>>, %arg9: memref<1x32xf32, #tpu.memory_space<vmem>>, %arg10: memref<32x128xbf16, #tpu.memory_space<vmem>>, %arg11: memref<1x128xf32, #tpu.memory_space<vmem>>, %arg12: memref<128x32xbf16, #tpu.memory_space<vmem>>, %arg13: memref<1x32xf32, #tpu.memory_space<vmem>>, %arg14: memref<2x8x32xf32, #tpu.memory_space<vmem>>) attributes {dimension_semantics = [#tpu.dimension_semantics<parallel>], iteration_bounds = array<i64: 2>, scalar_prefetch = 0 : i64, scratch_operands = 0 : i64, tpu.core_type = #tpu.core_type<tc>, window_params = [{transform_indices = @transform_0, window_bounds = array<i64: 2, 8, 32>}, {pipeline_mode = #tpu.pipeline_mode<synchronous>, transform_indices = @transform_1, window_bounds = array<i64: 1, 32>}, {pipeline_mode = #tpu.pipeline_mode<synchronous>, transform_indices = @transform_2, window_bounds = array<i64: 1, 32>}, {pipeline_mode = #tpu.pipeline_mode<synchronous>, transform_indices = @transform_3, window_bounds = array<i64: 32, 96>}, {pipeline_mode = #tpu.pipeline_mode<synchronous>, transform_indices = @transform_4, window_bounds = array<i64: 1, 96>}, {pipeline_mode = #tpu.pipeline_mode<synchronous>, transform_indices = @transform_5, window_bounds = array<i64: 32, 32>}, {pipeline_mode = #tpu.pipeline_mode<synchronous>, transform_indices = @transform_6, window_bounds = array<i64: 1, 32>}, {pipeline_mode = #tpu.pipeline_mode<synchronous>, transform_indices = @transform_7, window_bounds = array<i64: 1, 32>}, {pipeline_mode = #tpu.pipeline_mode<synchronous>, transform_indices = @transform_8, window_bounds = array<i64: 1, 32>}, {pipeline_mode = #tpu.pipeline_mode<synchronous>, transform_indices = @transform_9, window_bounds = array<i64: 32, 128>}, {pipeline_mode = #tpu.pipeline_mode<synchronous>, transform_indices = @transform_10, window_bounds = array<i64: 1, 128>}, {pipeline_mode = #tpu.pipeline_mode<synchronous>, transform_indices = @transform_11, window_bounds = array<i64: 128, 32>}, {pipeline_mode = #tpu.pipeline_mode<synchronous>, transform_indices = @transform_12, window_bounds = array<i64: 1, 32>}, {transform_indices = @transform_13, window_bounds = array<i64: 2, 8, 32>}]} {
    %c0 = arith.constant 0 : index
    %c0_0 = arith.constant 0 : index
    %c0_1 = arith.constant 0 : index
    %0 = vector.load %arg1[%c0, %c0_0, %c0_1] : memref<2x8x32xf32, #tpu.memory_space<vmem>>, vector<2x8x32xf32>
    %1 = vector.shape_cast %0 : vector<2x8x32xf32> to vector<16x32xf32>
    %c0_2 = arith.constant 0 : index
    %c0_3 = arith.constant 0 : index
    %2 = vector.load %arg2[%c0_2, %c0_3] : memref<1x32xf32, #tpu.memory_space<vmem>>, vector<1x32xf32>
    %c0_4 = arith.constant 0 : index
    %c0_5 = arith.constant 0 : index
    %3 = vector.load %arg3[%c0_4, %c0_5] : memref<1x32xf32, #tpu.memory_space<vmem>>, vector<1x32xf32>
    %cst = arith.constant dense<0.000000e+00> : vector<16xf32>
    %4 = vector.multi_reduction <add>, %1, %cst [1] : vector<16x32xf32> to vector<16xf32>
    %5 = vector.shape_cast %4 : vector<16xf32> to vector<16x1xf32>
    %cst_6 = arith.constant 3.200000e+01 : f32
    %6 = vector.broadcast %cst_6 : f32 to vector<16x1xf32>
    %7 = arith.divf %5, %6 : vector<16x1xf32>
    %8 = vector.broadcast %7 : vector<16x1xf32> to vector<16x32xf32>
    %9 = arith.subf %1, %8 : vector<16x32xf32>
    %10 = arith.mulf %9, %9 : vector<16x32xf32>
    %cst_7 = arith.constant dense<0.000000e+00> : vector<16xf32>
    %11 = vector.multi_reduction <add>, %10, %cst_7 [1] : vector<16x32xf32> to vector<16xf32>
    %12 = vector.shape_cast %11 : vector<16xf32> to vector<16x1xf32>
    %cst_8 = arith.constant 3.200000e+01 : f32
    %13 = vector.broadcast %cst_8 : f32 to vector<16x1xf32>
    %14 = arith.divf %12, %13 : vector<16x1xf32>
    %15 = vector.broadcast %7 : vector<16x1xf32> to vector<16x32xf32>
    %16 = arith.subf %1, %15 : vector<16x32xf32>
    %cst_9 = arith.constant 9.99999974E-6 : f32
    %17 = vector.broadcast %cst_9 : f32 to vector<16x1xf32>
    %18 = arith.addf %14, %17 : vector<16x1xf32>
    %19 = math.rsqrt %18 : vector<16x1xf32>
    %20 = vector.broadcast %19 : vector<16x1xf32> to vector<16x32xf32>
    %21 = arith.mulf %16, %20 : vector<16x32xf32>
    %22 = vector.broadcast %2 : vector<1x32xf32> to vector<16x32xf32>
    %23 = arith.mulf %21, %22 : vector<16x32xf32>
    %24 = vector.broadcast %3 : vector<1x32xf32> to vector<16x32xf32>
    %25 = arith.addf %23, %24 : vector<16x32xf32>
    %26 = arith.truncf %25 : vector<16x32xf32> to vector<16x32xbf16>
    %c0_10 = arith.constant 0 : index
    %c0_11 = arith.constant 0 : index
    %27 = vector.load %arg4[%c0_10, %c0_11] : memref<32x96xbf16, #tpu.memory_space<vmem>>, vector<32x96xbf16>
    %cst_12 = arith.constant dense<0.000000e+00> : vector<16x96xf32>
    %28 = tpu.matmul %26, %27, %cst_12 {dimension_numbers = #tpu.dot_dimension_numbers<[1], [0], [0], [1], [0, 0, 1, 1], [], []>} : vector<16x32xbf16>, vector<32x96xbf16>, vector<16x96xf32> -> vector<16x96xf32>
    %c0_13 = arith.constant 0 : index
    %c0_14 = arith.constant 0 : index
    %29 = vector.load %arg5[%c0_13, %c0_14] : memref<1x96xf32, #tpu.memory_space<vmem>>, vector<1x96xf32>
    %30 = vector.broadcast %29 : vector<1x96xf32> to vector<16x96xf32>
    %31 = arith.addf %28, %30 : vector<16x96xf32>
    %32 = vector.extract_strided_slice %31 {offsets = [0, 0], sizes = [16, 32], strides = [1, 1]} : vector<16x96xf32> to vector<16x32xf32>
    %33 = arith.truncf %32 : vector<16x32xf32> to vector<16x32xbf16>
    %34 = vector.extract_strided_slice %31 {offsets = [0, 32], sizes = [16, 32], strides = [1, 1]} : vector<16x96xf32> to vector<16x32xf32>
    %35 = arith.truncf %34 : vector<16x32xf32> to vector<16x32xbf16>
    %36 = vector.extract_strided_slice %31 {offsets = [0, 64], sizes = [16, 32], strides = [1, 1]} : vector<16x96xf32> to vector<16x32xf32>
    %37 = arith.truncf %36 : vector<16x32xf32> to vector<16x32xbf16>
    %38 = vector.extract_strided_slice %33 {offsets = [0, 0], sizes = [16, 8], strides = [1, 1]} : vector<16x32xbf16> to vector<16x8xbf16>
    %39 = vector.shape_cast %38 : vector<16x8xbf16> to vector<2x8x8xbf16>
    %40 = vector.extract_strided_slice %35 {offsets = [0, 0], sizes = [16, 8], strides = [1, 1]} : vector<16x32xbf16> to vector<16x8xbf16>
    %41 = vector.shape_cast %40 : vector<16x8xbf16> to vector<2x8x8xbf16>
    %42 = vector.extract_strided_slice %37 {offsets = [0, 0], sizes = [16, 8], strides = [1, 1]} : vector<16x32xbf16> to vector<16x8xbf16>
    %43 = vector.shape_cast %42 : vector<16x8xbf16> to vector<2x8x8xbf16>
    "tpu.trace_start"() <{level = 10 : i32, message = "bqd,bkd->bqk"}> : () -> ()
    %cst_15 = arith.constant dense<0.000000e+00> : vector<2x8x8xf32>
    %44 = tpu.matmul %39, %41, %cst_15 {dimension_numbers = #tpu.dot_dimension_numbers<[2], [2], [1], [1], [0, 0, 0, 1, 1, 1], [0], [0]>} : vector<2x8x8xbf16>, vector<2x8x8xbf16>, vector<2x8x8xf32> -> vector<2x8x8xf32>
    "tpu.trace_stop"() : () -> ()
    %cst_16 = arith.constant dense<0xFF800000> : vector<2x8xf32>
    %45 = vector.multi_reduction <maximumf>, %44, %cst_16 [2] : vector<2x8x8xf32> to vector<2x8xf32>
    %46 = vector.shape_cast %45 : vector<2x8xf32> to vector<2x8x1xf32>
    %47 = vector.broadcast %46 : vector<2x8x1xf32> to vector<2x8x8xf32>
    %48 = arith.subf %44, %47 : vector<2x8x8xf32>
    %49 = math.exp %48 : vector<2x8x8xf32>
    %cst_17 = arith.constant dense<0.000000e+00> : vector<2x8xf32>
    %50 = vector.multi_reduction <add>, %49, %cst_17 [2] : vector<2x8x8xf32> to vector<2x8xf32>
    %51 = vector.shape_cast %50 : vector<2x8xf32> to vector<2x8x1xf32>
    %52 = tpu.reciprocal %51 {approx = true} : vector<2x8x1xf32> -> vector<2x8x1xf32>
    %53 = vector.broadcast %52 : vector<2x8x1xf32> to vector<2x8x8xf32>
    %54 = arith.mulf %49, %53 : vector<2x8x8xf32>
    %55 = arith.truncf %54 : vector<2x8x8xf32> to vector<2x8x8xbf16>
    "tpu.trace_start"() <{level = 10 : i32, message = "bqk,bkd->bqd"}> : () -> ()
    %cst_18 = arith.constant dense<0.000000e+00> : vector<2x8x8xf32>
    %56 = tpu.matmul %55, %43, %cst_18 {dimension_numbers = #tpu.dot_dimension_numbers<[2], [1], [1], [2], [0, 0, 0, 1, 1, 2], [0], [0]>} : vector<2x8x8xbf16>, vector<2x8x8xbf16>, vector<2x8x8xf32> -> vector<2x8x8xf32>
    "tpu.trace_stop"() : () -> ()
    %57 = vector.shape_cast %56 : vector<2x8x8xf32> to vector<16x8xf32>
    %58 = arith.truncf %57 : vector<16x8xf32> to vector<16x8xbf16>
    %59 = vector.extract_strided_slice %33 {offsets = [0, 8], sizes = [16, 8], strides = [1, 1]} : vector<16x32xbf16> to vector<16x8xbf16>
    %60 = vector.shape_cast %59 : vector<16x8xbf16> to vector<2x8x8xbf16>
    %61 = vector.extract_strided_slice %35 {offsets = [0, 8], sizes = [16, 8], strides = [1, 1]} : vector<16x32xbf16> to vector<16x8xbf16>
    %62 = vector.shape_cast %61 : vector<16x8xbf16> to vector<2x8x8xbf16>
    %63 = vector.extract_strided_slice %37 {offsets = [0, 8], sizes = [16, 8], strides = [1, 1]} : vector<16x32xbf16> to vector<16x8xbf16>
    %64 = vector.shape_cast %63 : vector<16x8xbf16> to vector<2x8x8xbf16>
    "tpu.trace_start"() <{level = 10 : i32, message = "bqd,bkd->bqk"}> : () -> ()
    %cst_19 = arith.constant dense<0.000000e+00> : vector<2x8x8xf32>
    %65 = tpu.matmul %60, %62, %cst_19 {dimension_numbers = #tpu.dot_dimension_numbers<[2], [2], [1], [1], [0, 0, 0, 1, 1, 1], [0], [0]>} : vector<2x8x8xbf16>, vector<2x8x8xbf16>, vector<2x8x8xf32> -> vector<2x8x8xf32>
    "tpu.trace_stop"() : () -> ()
    %cst_20 = arith.constant dense<0xFF800000> : vector<2x8xf32>
    %66 = vector.multi_reduction <maximumf>, %65, %cst_20 [2] : vector<2x8x8xf32> to vector<2x8xf32>
    %67 = vector.shape_cast %66 : vector<2x8xf32> to vector<2x8x1xf32>
    %68 = vector.broadcast %67 : vector<2x8x1xf32> to vector<2x8x8xf32>
    %69 = arith.subf %65, %68 : vector<2x8x8xf32>
    %70 = math.exp %69 : vector<2x8x8xf32>
    %cst_21 = arith.constant dense<0.000000e+00> : vector<2x8xf32>
    %71 = vector.multi_reduction <add>, %70, %cst_21 [2] : vector<2x8x8xf32> to vector<2x8xf32>
    %72 = vector.shape_cast %71 : vector<2x8xf32> to vector<2x8x1xf32>
    %73 = tpu.reciprocal %72 {approx = true} : vector<2x8x1xf32> -> vector<2x8x1xf32>
    %74 = vector.broadcast %73 : vector<2x8x1xf32> to vector<2x8x8xf32>
    %75 = arith.mulf %70, %74 : vector<2x8x8xf32>
    %76 = arith.truncf %75 : vector<2x8x8xf32> to vector<2x8x8xbf16>
    "tpu.trace_start"() <{level = 10 : i32, message = "bqk,bkd->bqd"}> : () -> ()
    %cst_22 = arith.constant dense<0.000000e+00> : vector<2x8x8xf32>
    %77 = tpu.matmul %76, %64, %cst_22 {dimension_numbers = #tpu.dot_dimension_numbers<[2], [1], [1], [2], [0, 0, 0, 1, 1, 2], [0], [0]>} : vector<2x8x8xbf16>, vector<2x8x8xbf16>, vector<2x8x8xf32> -> vector<2x8x8xf32>
    "tpu.trace_stop"() : () -> ()
    %78 = vector.shape_cast %77 : vector<2x8x8xf32> to vector<16x8xf32>
    %79 = arith.truncf %78 : vector<16x8xf32> to vector<16x8xbf16>
    %80 = vector.extract_strided_slice %33 {offsets = [0, 16], sizes = [16, 8], strides = [1, 1]} : vector<16x32xbf16> to vector<16x8xbf16>
    %81 = vector.shape_cast %80 : vector<16x8xbf16> to vector<2x8x8xbf16>
    %82 = vector.extract_strided_slice %35 {offsets = [0, 16], sizes = [16, 8], strides = [1, 1]} : vector<16x32xbf16> to vector<16x8xbf16>
    %83 = vector.shape_cast %82 : vector<16x8xbf16> to vector<2x8x8xbf16>
    %84 = vector.extract_strided_slice %37 {offsets = [0, 16], sizes = [16, 8], strides = [1, 1]} : vector<16x32xbf16> to vector<16x8xbf16>
    %85 = vector.shape_cast %84 : vector<16x8xbf16> to vector<2x8x8xbf16>
    "tpu.trace_start"() <{level = 10 : i32, message = "bqd,bkd->bqk"}> : () -> ()
    %cst_23 = arith.constant dense<0.000000e+00> : vector<2x8x8xf32>
    %86 = tpu.matmul %81, %83, %cst_23 {dimension_numbers = #tpu.dot_dimension_numbers<[2], [2], [1], [1], [0, 0, 0, 1, 1, 1], [0], [0]>} : vector<2x8x8xbf16>, vector<2x8x8xbf16>, vector<2x8x8xf32> -> vector<2x8x8xf32>
    "tpu.trace_stop"() : () -> ()
    %cst_24 = arith.constant dense<0xFF800000> : vector<2x8xf32>
    %87 = vector.multi_reduction <maximumf>, %86, %cst_24 [2] : vector<2x8x8xf32> to vector<2x8xf32>
    %88 = vector.shape_cast %87 : vector<2x8xf32> to vector<2x8x1xf32>
    %89 = vector.broadcast %88 : vector<2x8x1xf32> to vector<2x8x8xf32>
    %90 = arith.subf %86, %89 : vector<2x8x8xf32>
    %91 = math.exp %90 : vector<2x8x8xf32>
    %cst_25 = arith.constant dense<0.000000e+00> : vector<2x8xf32>
    %92 = vector.multi_reduction <add>, %91, %cst_25 [2] : vector<2x8x8xf32> to vector<2x8xf32>
    %93 = vector.shape_cast %92 : vector<2x8xf32> to vector<2x8x1xf32>
    %94 = tpu.reciprocal %93 {approx = true} : vector<2x8x1xf32> -> vector<2x8x1xf32>
    %95 = vector.broadcast %94 : vector<2x8x1xf32> to vector<2x8x8xf32>
    %96 = arith.mulf %91, %95 : vector<2x8x8xf32>
    %97 = arith.truncf %96 : vector<2x8x8xf32> to vector<2x8x8xbf16>
    "tpu.trace_start"() <{level = 10 : i32, message = "bqk,bkd->bqd"}> : () -> ()
    %cst_26 = arith.constant dense<0.000000e+00> : vector<2x8x8xf32>
    %98 = tpu.matmul %97, %85, %cst_26 {dimension_numbers = #tpu.dot_dimension_numbers<[2], [1], [1], [2], [0, 0, 0, 1, 1, 2], [0], [0]>} : vector<2x8x8xbf16>, vector<2x8x8xbf16>, vector<2x8x8xf32> -> vector<2x8x8xf32>
    "tpu.trace_stop"() : () -> ()
    %99 = vector.shape_cast %98 : vector<2x8x8xf32> to vector<16x8xf32>
    %100 = arith.truncf %99 : vector<16x8xf32> to vector<16x8xbf16>
    %101 = vector.extract_strided_slice %33 {offsets = [0, 24], sizes = [16, 8], strides = [1, 1]} : vector<16x32xbf16> to vector<16x8xbf16>
    %102 = vector.shape_cast %101 : vector<16x8xbf16> to vector<2x8x8xbf16>
    %103 = vector.extract_strided_slice %35 {offsets = [0, 24], sizes = [16, 8], strides = [1, 1]} : vector<16x32xbf16> to vector<16x8xbf16>
    %104 = vector.shape_cast %103 : vector<16x8xbf16> to vector<2x8x8xbf16>
    %105 = vector.extract_strided_slice %37 {offsets = [0, 24], sizes = [16, 8], strides = [1, 1]} : vector<16x32xbf16> to vector<16x8xbf16>
    %106 = vector.shape_cast %105 : vector<16x8xbf16> to vector<2x8x8xbf16>
    "tpu.trace_start"() <{level = 10 : i32, message = "bqd,bkd->bqk"}> : () -> ()
    %cst_27 = arith.constant dense<0.000000e+00> : vector<2x8x8xf32>
    %107 = tpu.matmul %102, %104, %cst_27 {dimension_numbers = #tpu.dot_dimension_numbers<[2], [2], [1], [1], [0, 0, 0, 1, 1, 1], [0], [0]>} : vector<2x8x8xbf16>, vector<2x8x8xbf16>, vector<2x8x8xf32> -> vector<2x8x8xf32>
    "tpu.trace_stop"() : () -> ()
    %cst_28 = arith.constant dense<0xFF800000> : vector<2x8xf32>
    %108 = vector.multi_reduction <maximumf>, %107, %cst_28 [2] : vector<2x8x8xf32> to vector<2x8xf32>
    %109 = vector.shape_cast %108 : vector<2x8xf32> to vector<2x8x1xf32>
    %110 = vector.broadcast %109 : vector<2x8x1xf32> to vector<2x8x8xf32>
    %111 = arith.subf %107, %110 : vector<2x8x8xf32>
    %112 = math.exp %111 : vector<2x8x8xf32>
    %cst_29 = arith.constant dense<0.000000e+00> : vector<2x8xf32>
    %113 = vector.multi_reduction <add>, %112, %cst_29 [2] : vector<2x8x8xf32> to vector<2x8xf32>
    %114 = vector.shape_cast %113 : vector<2x8xf32> to vector<2x8x1xf32>
    %115 = tpu.reciprocal %114 {approx = true} : vector<2x8x1xf32> -> vector<2x8x1xf32>
    %116 = vector.broadcast %115 : vector<2x8x1xf32> to vector<2x8x8xf32>
    %117 = arith.mulf %112, %116 : vector<2x8x8xf32>
    %118 = arith.truncf %117 : vector<2x8x8xf32> to vector<2x8x8xbf16>
    "tpu.trace_start"() <{level = 10 : i32, message = "bqk,bkd->bqd"}> : () -> ()
    %cst_30 = arith.constant dense<0.000000e+00> : vector<2x8x8xf32>
    %119 = tpu.matmul %118, %106, %cst_30 {dimension_numbers = #tpu.dot_dimension_numbers<[2], [1], [1], [2], [0, 0, 0, 1, 1, 2], [0], [0]>} : vector<2x8x8xbf16>, vector<2x8x8xbf16>, vector<2x8x8xf32> -> vector<2x8x8xf32>
    "tpu.trace_stop"() : () -> ()
    %120 = vector.shape_cast %119 : vector<2x8x8xf32> to vector<16x8xf32>
    %121 = arith.truncf %120 : vector<16x8xf32> to vector<16x8xbf16>
    %122 = tpu.concatenate %58, %79, %100, %121 in 1 : vector<16x8xbf16>, vector<16x8xbf16>, vector<16x8xbf16>, vector<16x8xbf16> -> vector<16x32xbf16>
    %c0_31 = arith.constant 0 : index
    %c0_32 = arith.constant 0 : index
    %123 = vector.load %arg6[%c0_31, %c0_32] : memref<32x32xbf16, #tpu.memory_space<vmem>>, vector<32x32xbf16>
    %cst_33 = arith.constant dense<0.000000e+00> : vector<16x32xf32>
    %124 = tpu.matmul %122, %123, %cst_33 {dimension_numbers = #tpu.dot_dimension_numbers<[1], [0], [0], [1], [0, 0, 1, 1], [], []>} : vector<16x32xbf16>, vector<32x32xbf16>, vector<16x32xf32> -> vector<16x32xf32>
    %c0_34 = arith.constant 0 : index
    %c0_35 = arith.constant 0 : index
    %125 = vector.load %arg7[%c0_34, %c0_35] : memref<1x32xf32, #tpu.memory_space<vmem>>, vector<1x32xf32>
    %126 = vector.broadcast %125 : vector<1x32xf32> to vector<16x32xf32>
    %127 = arith.addf %124, %126 : vector<16x32xf32>
    %128 = arith.addf %1, %127 : vector<16x32xf32>
    %c0_36 = arith.constant 0 : index
    %c0_37 = arith.constant 0 : index
    %129 = vector.load %arg8[%c0_36, %c0_37] : memref<1x32xf32, #tpu.memory_space<vmem>>, vector<1x32xf32>
    %c0_38 = arith.constant 0 : index
    %c0_39 = arith.constant 0 : index
    %130 = vector.load %arg9[%c0_38, %c0_39] : memref<1x32xf32, #tpu.memory_space<vmem>>, vector<1x32xf32>
    %cst_40 = arith.constant dense<0.000000e+00> : vector<16xf32>
    %131 = vector.multi_reduction <add>, %128, %cst_40 [1] : vector<16x32xf32> to vector<16xf32>
    %132 = vector.shape_cast %131 : vector<16xf32> to vector<16x1xf32>
    %cst_41 = arith.constant 3.200000e+01 : f32
    %133 = vector.broadcast %cst_41 : f32 to vector<16x1xf32>
    %134 = arith.divf %132, %133 : vector<16x1xf32>
    %135 = vector.broadcast %134 : vector<16x1xf32> to vector<16x32xf32>
    %136 = arith.subf %128, %135 : vector<16x32xf32>
    %137 = arith.mulf %136, %136 : vector<16x32xf32>
    %cst_42 = arith.constant dense<0.000000e+00> : vector<16xf32>
    %138 = vector.multi_reduction <add>, %137, %cst_42 [1] : vector<16x32xf32> to vector<16xf32>
    %139 = vector.shape_cast %138 : vector<16xf32> to vector<16x1xf32>
    %cst_43 = arith.constant 3.200000e+01 : f32
    %140 = vector.broadcast %cst_43 : f32 to vector<16x1xf32>
    %141 = arith.divf %139, %140 : vector<16x1xf32>
    %142 = vector.broadcast %134 : vector<16x1xf32> to vector<16x32xf32>
    %143 = arith.subf %128, %142 : vector<16x32xf32>
    %cst_44 = arith.constant 9.99999974E-6 : f32
    %144 = vector.broadcast %cst_44 : f32 to vector<16x1xf32>
    %145 = arith.addf %141, %144 : vector<16x1xf32>
    %146 = math.rsqrt %145 : vector<16x1xf32>
    %147 = vector.broadcast %146 : vector<16x1xf32> to vector<16x32xf32>
    %148 = arith.mulf %143, %147 : vector<16x32xf32>
    %149 = vector.broadcast %129 : vector<1x32xf32> to vector<16x32xf32>
    %150 = arith.mulf %148, %149 : vector<16x32xf32>
    %151 = vector.broadcast %130 : vector<1x32xf32> to vector<16x32xf32>
    %152 = arith.addf %150, %151 : vector<16x32xf32>
    %153 = arith.truncf %152 : vector<16x32xf32> to vector<16x32xbf16>
    %c0_45 = arith.constant 0 : index
    %c0_46 = arith.constant 0 : index
    %154 = vector.load %arg10[%c0_45, %c0_46] : memref<32x128xbf16, #tpu.memory_space<vmem>>, vector<32x128xbf16>
    %cst_47 = arith.constant dense<0.000000e+00> : vector<16x128xf32>
    %155 = tpu.matmul %153, %154, %cst_47 {dimension_numbers = #tpu.dot_dimension_numbers<[1], [0], [0], [1], [0, 0, 1, 1], [], []>} : vector<16x32xbf16>, vector<32x128xbf16>, vector<16x128xf32> -> vector<16x128xf32>
    %c0_48 = arith.constant 0 : index
    %c0_49 = arith.constant 0 : index
    %156 = vector.load %arg11[%c0_48, %c0_49] : memref<1x128xf32, #tpu.memory_space<vmem>>, vector<1x128xf32>
    %157 = vector.broadcast %156 : vector<1x128xf32> to vector<16x128xf32>
    %158 = arith.addf %155, %157 : vector<16x128xf32>
    %cst_50 = arith.constant 5.000000e-01 : f32
    %159 = vector.broadcast %cst_50 : f32 to vector<16x128xf32>
    %160 = arith.mulf %159, %158 : vector<16x128xf32>
    %161 = arith.mulf %158, %158 : vector<16x128xf32>
    %162 = arith.mulf %161, %158 : vector<16x128xf32>
    %cst_51 = arith.constant 4.471500e-02 : f32
    %163 = vector.broadcast %cst_51 : f32 to vector<16x128xf32>
    %164 = arith.mulf %163, %162 : vector<16x128xf32>
    %165 = arith.addf %158, %164 : vector<16x128xf32>
    %cst_52 = arith.constant 0.797884583 : f32
    %166 = vector.broadcast %cst_52 : f32 to vector<16x128xf32>
    %167 = arith.mulf %166, %165 : vector<16x128xf32>
    %168 = math.tanh %167 : vector<16x128xf32>
    %cst_53 = arith.constant 1.000000e+00 : f32
    %169 = vector.broadcast %cst_53 : f32 to vector<16x128xf32>
    %170 = arith.addf %169, %168 : vector<16x128xf32>
    %171 = arith.mulf %160, %170 : vector<16x128xf32>
    %172 = arith.truncf %171 : vector<16x128xf32> to vector<16x128xbf16>
    %c0_54 = arith.constant 0 : index
    %c0_55 = arith.constant 0 : index
    %173 = vector.load %arg12[%c0_54, %c0_55] : memref<128x32xbf16, #tpu.memory_space<vmem>>, vector<128x32xbf16>
    %cst_56 = arith.constant dense<0.000000e+00> : vector<16x32xf32>
    %174 = tpu.matmul %172, %173, %cst_56 {dimension_numbers = #tpu.dot_dimension_numbers<[1], [0], [0], [1], [0, 0, 1, 1], [], []>} : vector<16x128xbf16>, vector<128x32xbf16>, vector<16x32xf32> -> vector<16x32xf32>
    %c0_57 = arith.constant 0 : index
    %c0_58 = arith.constant 0 : index
    %175 = vector.load %arg13[%c0_57, %c0_58] : memref<1x32xf32, #tpu.memory_space<vmem>>, vector<1x32xf32>
    %176 = vector.broadcast %175 : vector<1x32xf32> to vector<16x32xf32>
    %177 = arith.addf %174, %176 : vector<16x32xf32>
    %178 = arith.addf %128, %177 : vector<16x32xf32>
    %179 = vector.shape_cast %178 : vector<16x32xf32> to vector<2x8x32xf32>
    %c0_59 = arith.constant 0 : index
    %c0_60 = arith.constant 0 : index
    %c0_61 = arith.constant 0 : index
    %180 = vector.load %arg14[%c0_59, %c0_60, %c0_61] : memref<2x8x32xf32, #tpu.memory_space<vmem>>, vector<2x8x32xf32>
    tpu.vector_store %arg14[%c0_59, %c0_60, %c0_61], %179 {strides = array<i32>} : memref<2x8x32xf32, #tpu.memory_space<vmem>>, vector<2x8x32xf32>,
    return
  }
  func.func @transform_0(%arg0: i32) -> (i32, i32, i32) {
    %c0_i32 = arith.constant 0 : i32
    %c0_i32_0 = arith.constant 0 : i32
    %c0_i32_1 = arith.constant 0 : i32
    return %arg0, %c0_i32, %c0_i32_0 : i32, i32, i32
  }
  func.func @transform_1(%arg0: i32) -> (i32, i32) {
    %c0_i32 = arith.constant 0 : i32
    %c0_i32_0 = arith.constant 0 : i32
    %c0_i32_1 = arith.constant 0 : i32
    return %c0_i32, %c0_i32_0 : i32, i32
  }
  func.func @transform_2(%arg0: i32) -> (i32, i32) {
    %c0_i32 = arith.constant 0 : i32
    %c0_i32_0 = arith.constant 0 : i32
    %c0_i32_1 = arith.constant 0 : i32
    return %c0_i32, %c0_i32_0 : i32, i32
  }
  func.func @transform_3(%arg0: i32) -> (i32, i32) {
    %c0_i32 = arith.constant 0 : i32
    %c0_i32_0 = arith.constant 0 : i32
    %c0_i32_1 = arith.constant 0 : i32
    return %c0_i32, %c0_i32_0 : i32, i32
  }
  func.func @transform_4(%arg0: i32) -> (i32, i32) {
    %c0_i32 = arith.constant 0 : i32
    %c0_i32_0 = arith.constant 0 : i32
    %c0_i32_1 = arith.constant 0 : i32
    return %c0_i32, %c0_i32_0 : i32, i32
  }
  func.func @transform_5(%arg0: i32) -> (i32, i32) {
    %c0_i32 = arith.constant 0 : i32
    %c0_i32_0 = arith.constant 0 : i32
    %c0_i32_1 = arith.constant 0 : i32
    return %c0_i32, %c0_i32_0 : i32, i32
  }
  func.func @transform_6(%arg0: i32) -> (i32, i32) {
    %c0_i32 = arith.constant 0 : i32
    %c0_i32_0 = arith.constant 0 : i32
    %c0_i32_1 = arith.constant 0 : i32
    return %c0_i32, %c0_i32_0 : i32, i32
  }
  func.func @transform_7(%arg0: i32) -> (i32, i32) {
    %c0_i32 = arith.constant 0 : i32
    %c0_i32_0 = arith.constant 0 : i32
    %c0_i32_1 = arith.constant 0 : i32
    return %c0_i32, %c0_i32_0 : i32, i32
  }
  func.func @transform_8(%arg0: i32) -> (i32, i32) {
    %c0_i32 = arith.constant 0 : i32
    %c0_i32_0 = arith.constant 0 : i32
    %c0_i32_1 = arith.constant 0 : i32
    return %c0_i32, %c0_i32_0 : i32, i32
  }
  func.func @transform_9(%arg0: i32) -> (i32, i32) {
    %c0_i32 = arith.constant 0 : i32
    %c0_i32_0 = arith.constant 0 : i32
    %c0_i32_1 = arith.constant 0 : i32
    return %c0_i32, %c0_i32_0 : i32, i32
  }
  func.func @transform_10(%arg0: i32) -> (i32, i32) {
    %c0_i32 = arith.constant 0 : i32
    %c0_i32_0 = arith.constant 0 : i32
    %c0_i32_1 = arith.constant 0 : i32
    return %c0_i32, %c0_i32_0 : i32, i32
  }
  func.func @transform_11(%arg0: i32) -> (i32, i32) {
    %c0_i32 = arith.constant 0 : i32
    %c0_i32_0 = arith.constant 0 : i32
    %c0_i32_1 = arith.constant 0 : i32
    return %c0_i32, %c0_i32_0 : i32, i32
  }
  func.func @transform_12(%arg0: i32) -> (i32, i32) {
    %c0_i32 = arith.constant 0 : i32
    %c0_i32_0 = arith.constant 0 : i32
    %c0_i32_1 = arith.constant 0 : i32
    return %c0_i32, %c0_i32_0 : i32, i32
  }
  func.func @transform_13(%arg0: i32) -> (i32, i32, i32) {
    %c0_i32 = arith.constant 0 : i32
    %c0_i32_0 = arith.constant 0 : i32
    %c0_i32_1 = arith.constant 0 : i32
    return %arg0, %c0_i32, %c0_i32_0 : i32, i32, i32
  }
}

module attributes {stable_mosaic.version = 11 : i64} {
  func.func @encoder_block_kernel(%arg0: i32, %arg1: memref<2x8x32xf32, #tpu.memory_space<vmem>>, %arg2: memref<1x32xf32, #tpu.memory_space<vmem>>, %arg3: memref<1x32xf32, #tpu.memory_space<vmem>>, %arg4: memref<32x96xbf16, #tpu.memory_space<vmem>>, %arg5: memref<1x96xf32, #tpu.memory_space<vmem>>, %arg6: memref<32x32xbf16, #tpu.memory_space<vmem>>, %arg7: memref<1x32xf32, #tpu.memory_space<vmem>>, %arg8: memref<1x32xf32, #tpu.memory_space<vmem>>, %arg9: memref<1x32xf32, #tpu.memory_space<vmem>>, %arg10: memref<32x128xbf16, #tpu.memory_space<vmem>>, %arg11: memref<1x128xf32, #tpu.memory_space<vmem>>, %arg12: memref<128x32xbf16, #tpu.memory_space<vmem>>, %arg13: memref<1x32xf32, #tpu.memory_space<vmem>>, %arg14: memref<2x8x32xf32, #tpu.memory_space<vmem>>) attributes {dimension_semantics = [#tpu.dimension_semantics<parallel>], iteration_bounds = array<i64: 2>, scalar_prefetch = 0 : i64, scratch_operands = 0 : i64, tpu.core_type = #tpu.core_type<tc>, window_params = [{transform_indices = @transform_0, window_bounds = array<i64: 2, 8, 32>}, {pipeline_mode = #tpu.pipeline_mode<synchronous>, transform_indices = @transform_1, window_bounds = array<i64: 1, 32>}, {pipeline_mode = #tpu.pipeline_mode<synchronous>, transform_indices = @transform_2, window_bounds = array<i64: 1, 32>}, {pipeline_mode = #tpu.pipeline_mode<synchronous>, transform_indices = @transform_3, window_bounds = array<i64: 32, 96>}, {pipeline_mode = #tpu.pipeline_mode<synchronous>, transform_indices = @transform_4, window_bounds = array<i64: 1, 96>}, {pipeline_mode = #tpu.pipeline_mode<synchronous>, transform_indices = @transform_5, window_bounds = array<i64: 32, 32>}, {pipeline_mode = #tpu.pipeline_mode<synchronous>, transform_indices = @transform_6, window_bounds = array<i64: 1, 32>}, {pipeline_mode = #tpu.pipeline_mode<synchronous>, transform_indices = @transform_7, window_bounds = array<i64: 1, 32>}, {pipeline_mode = #tpu.pipeline_mode<synchronous>, transform_indices = @transform_8, window_bounds = array<i64: 1, 32>}, {pipeline_mode = #tpu.pipeline_mode<synchronous>, transform_indices = @transform_9, window_bounds = array<i64: 32, 128>}, {pipeline_mode = #tpu.pipeline_mode<synchronous>, transform_indices = @transform_10, window_bounds = array<i64: 1, 128>}, {pipeline_mode = #tpu.pipeline_mode<synchronous>, transform_indices = @transform_11, window_bounds = array<i64: 128, 32>}, {pipeline_mode = #tpu.pipeline_mode<synchronous>, transform_indices = @transform_12, window_bounds = array<i64: 1, 32>}, {transform_indices = @transform_13, window_bounds = array<i64: 2, 8, 32>}]} {
    %c0 = arith.constant 0 : index
    %c0_0 = arith.constant 0 : index
    %c0_1 = arith.constant 0 : index
    %0 = vector.load %arg1[%c0, %c0_0, %c0_1] : memref<2x8x32xf32, #tpu.memory_space<vmem>>, vector<2x8x32xf32>
    %1 = vector.shape_cast %0 : vector<2x8x32xf32> to vector<16x32xf32>
    %c0_2 = arith.constant 0 : index
    %c0_3 = arith.constant 0 : index
    %2 = vector.load %arg2[%c0_2, %c0_3] : memref<1x32xf32, #tpu.memory_space<vmem>>, vector<1x32xf32>
    %c0_4 = arith.constant 0 : index
    %c0_5 = arith.constant 0 : index
    %3 = vector.load %arg3[%c0_4, %c0_5] : memref<1x32xf32, #tpu.memory_space<vmem>>, vector<1x32xf32>
    %cst = arith.constant dense<0.000000e+00> : vector<16xf32>
    %4 = vector.multi_reduction <add>, %1, %cst [1] : vector<16x32xf32> to vector<16xf32>
    %5 = vector.shape_cast %4 : vector<16xf32> to vector<16x1xf32>
    %cst_6 = arith.constant 3.200000e+01 : f32
    %6 = vector.broadcast %cst_6 : f32 to vector<16x1xf32>
    %7 = arith.divf %5, %6 : vector<16x1xf32>
    %8 = vector.broadcast %7 : vector<16x1xf32> to vector<16x32xf32>
    %9 = arith.subf %1, %8 : vector<16x32xf32>
    %10 = arith.mulf %9, %9 : vector<16x32xf32>
    %cst_7 = arith.constant dense<0.000000e+00> : vector<16xf32>
    %11 = vector.multi_reduction <add>, %10, %cst_7 [1] : vector<16x32xf32> to vector<16xf32>
    %12 = vector.shape_cast %11 : vector<16xf32> to vector<16x1xf32>
    %cst_8 = arith.constant 3.200000e+01 : f32
    %13 = vector.broadcast %cst_8 : f32 to vector<16x1xf32>
    %14 = arith.divf %12, %13 : vector<16x1xf32>
    %15 = vector.broadcast %7 : vector<16x1xf32> to vector<16x32xf32>
    %16 = arith.subf %1, %15 : vector<16x32xf32>
    %cst_9 = arith.constant 9.99999974E-6 : f32
    %17 = vector.broadcast %cst_9 : f32 to vector<16x1xf32>
    %18 = arith.addf %14, %17 : vector<16x1xf32>
    %19 = math.rsqrt %18 : vector<16x1xf32>
    %20 = vector.broadcast %19 : vector<16x1xf32> to vector<16x32xf32>
    %21 = arith.mulf %16, %20 : vector<16x32xf32>
    %22 = vector.broadcast %2 : vector<1x32xf32> to vector<16x32xf32>
    %23 = arith.mulf %21, %22 : vector<16x32xf32>
    %24 = vector.broadcast %3 : vector<1x32xf32> to vector<16x32xf32>
    %25 = arith.addf %23, %24 : vector<16x32xf32>
    %26 = arith.truncf %25 : vector<16x32xf32> to vector<16x32xbf16>
    %c0_10 = arith.constant 0 : index
    %c0_11 = arith.constant 0 : index
    %27 = vector.load %arg4[%c0_10, %c0_11] : memref<32x96xbf16, #tpu.memory_space<vmem>>, vector<32x96xbf16>
    %cst_12 = arith.constant dense<0.000000e+00> : vector<16x96xf32>
    %28 = tpu.matmul %26, %27, %cst_12 {dimension_numbers = #tpu.dot_dimension_numbers<[1], [0], [0], [1], [0, 0, 1, 1], [], []>} : vector<16x32xbf16>, vector<32x96xbf16>, vector<16x96xf32> -> vector<16x96xf32>
    %c0_13 = arith.constant 0 : index
    %c0_14 = arith.constant 0 : index
    %29 = vector.load %arg5[%c0_13, %c0_14] : memref<1x96xf32, #tpu.memory_space<vmem>>, vector<1x96xf32>
    %30 = vector.broadcast %29 : vector<1x96xf32> to vector<16x96xf32>
    %31 = arith.addf %28, %30 : vector<16x96xf32>
    %32 = vector.extract_strided_slice %31 {offsets = [0, 0], sizes = [16, 32], strides = [1, 1]} : vector<16x96xf32> to vector<16x32xf32>
    %33 = arith.truncf %32 : vector<16x32xf32> to vector<16x32xbf16>
    %34 = vector.extract_strided_slice %31 {offsets = [0, 32], sizes = [16, 32], strides = [1, 1]} : vector<16x96xf32> to vector<16x32xf32>
    %35 = arith.truncf %34 : vector<16x32xf32> to vector<16x32xbf16>
    %36 = vector.extract_strided_slice %31 {offsets = [0, 64], sizes = [16, 32], strides = [1, 1]} : vector<16x96xf32> to vector<16x32xf32>
    %37 = arith.truncf %36 : vector<16x32xf32> to vector<16x32xbf16>
    %38 = vector.extract_strided_slice %33 {offsets = [0, 0], sizes = [16, 8], strides = [1, 1]} : vector<16x32xbf16> to vector<16x8xbf16>
    %39 = vector.shape_cast %38 : vector<16x8xbf16> to vector<2x8x8xbf16>
    %40 = vector.extract_strided_slice %35 {offsets = [0, 0], sizes = [16, 8], strides = [1, 1]} : vector<16x32xbf16> to vector<16x8xbf16>
    %41 = vector.shape_cast %40 : vector<16x8xbf16> to vector<2x8x8xbf16>
    %42 = vector.extract_strided_slice %37 {offsets = [0, 0], sizes = [16, 8], strides = [1, 1]} : vector<16x32xbf16> to vector<16x8xbf16>
    %43 = vector.shape_cast %42 : vector<16x8xbf16> to vector<2x8x8xbf16>
    "tpu.trace_start"() <{level = 10 : i32, message = "bqd,bkd->bqk"}> : () -> ()
    %cst_15 = arith.constant dense<0.000000e+00> : vector<2x8x8xf32>
    %44 = tpu.matmul %39, %41, %cst_15 {dimension_numbers = #tpu.dot_dimension_numbers<[2], [2], [1], [1], [0, 0, 0, 1, 1, 1], [0], [0]>} : vector<2x8x8xbf16>, vector<2x8x8xbf16>, vector<2x8x8xf32> -> vector<2x8x8xf32>
    "tpu.trace_stop"() : () -> ()
    %cst_16 = arith.constant dense<0xFF800000> : vector<2x8xf32>
    %45 = vector.multi_reduction <maximumf>, %44, %cst_16 [2] : vector<2x8x8xf32> to vector<2x8xf32>
    %46 = vector.shape_cast %45 : vector<2x8xf32> to vector<2x8x1xf32>
    %47 = vector.broadcast %46 : vector<2x8x1xf32> to vector<2x8x8xf32>
    %48 = arith.subf %44, %47 : vector<2x8x8xf32>
    %49 = math.exp %48 : vector<2x8x8xf32>
    %cst_17 = arith.constant dense<0.000000e+00> : vector<2x8xf32>
    %50 = vector.multi_reduction <add>, %49, %cst_17 [2] : vector<2x8x8xf32> to vector<2x8xf32>
    %51 = vector.shape_cast %50 : vector<2x8xf32> to vector<2x8x1xf32>
    %52 = tpu.reciprocal %51 {approx = true} : vector<2x8x1xf32> -> vector<2x8x1xf32>
    %53 = vector.broadcast %52 : vector<2x8x1xf32> to vector<2x8x8xf32>
    %54 = arith.mulf %49, %53 : vector<2x8x8xf32>
    %55 = arith.truncf %54 : vector<2x8x8xf32> to vector<2x8x8xbf16>
    "tpu.trace_start"() <{level = 10 : i32, message = "bqk,bkd->bqd"}> : () -> ()
    %cst_18 = arith.constant dense<0.000000e+00> : vector<2x8x8xf32>
    %56 = tpu.matmul %55, %43, %cst_18 {dimension_numbers = #tpu.dot_dimension_numbers<[2], [1], [1], [2], [0, 0, 0, 1, 1, 2], [0], [0]>} : vector<2x8x8xbf16>, vector<2x8x8xbf16>, vector<2x8x8xf32> -> vector<2x8x8xf32>
    "tpu.trace_stop"() : () -> ()
    %57 = vector.shape_cast %56 : vector<2x8x8xf32> to vector<16x8xf32>
    %58 = arith.truncf %57 : vector<16x8xf32> to vector<16x8xbf16>
    %59 = vector.extract_strided_slice %33 {offsets = [0, 8], sizes = [16, 8], strides = [1, 1]} : vector<16x32xbf16> to vector<16x8xbf16>
    %60 = vector.shape_cast %59 : vector<16x8xbf16> to vector<2x8x8xbf16>
    %61 = vector.extract_strided_slice %35 {offsets = [0, 8], sizes = [16, 8], strides = [1, 1]} : vector<16x32xbf16> to vector<16x8xbf16>
    %62 = vector.shape_cast %61 : vector<16x8xbf16> to vector<2x8x8xbf16>
    %63 = vector.extract_strided_slice %37 {offsets = [0, 8], sizes = [16, 8], strides = [1, 1]} : vector<16x32xbf16> to vector<16x8xbf16>
    %64 = vector.shape_cast %63 : vector<16x8xbf16> to vector<2x8x8xbf16>
    "tpu.trace_start"() <{level = 10 : i32, message = "bqd,bkd->bqk"}> : () -> ()
    %cst_19 = arith.constant dense<0.000000e+00> : vector<2x8x8xf32>
    %65 = tpu.matmul %60, %62, %cst_19 {dimension_numbers = #tpu.dot_dimension_numbers<[2], [2], [1], [1], [0, 0, 0, 1, 1, 1], [0], [0]>} : vector<2x8x8xbf16>, vector<2x8x8xbf16>, vector<2x8x8xf32> -> vector<2x8x8xf32>
    "tpu.trace_stop"() : () -> ()
    %cst_20 = arith.constant dense<0xFF800000> : vector<2x8xf32>
    %66 = vector.multi_reduction <maximumf>, %65, %cst_20 [2] : vector<2x8x8xf32> to vector<2x8xf32>
    %67 = vector.shape_cast %66 : vector<2x8xf32> to vector<2x8x1xf32>
    %68 = vector.broadcast %67 : vector<2x8x1xf32> to vector<2x8x8xf32>
    %69 = arith.subf %65, %68 : vector<2x8x8xf32>
    %70 = math.exp %69 : vector<2x8x8xf32>
    %cst_21 = arith.constant dense<0.000000e+00> : vector<2x8xf32>
    %71 = vector.multi_reduction <add>, %70, %cst_21 [2] : vector<2x8x8xf32> to vector<2x8xf32>
    %72 = vector.shape_cast %71 : vector<2x8xf32> to vector<2x8x1xf32>
    %73 = tpu.reciprocal %72 {approx = true} : vector<2x8x1xf32> -> vector<2x8x1xf32>
    %74 = vector.broadcast %73 : vector<2x8x1xf32> to vector<2x8x8xf32>
    %75 = arith.mulf %70, %74 : vector<2x8x8xf32>
    %76 = arith.truncf %75 : vector<2x8x8xf32> to vector<2x8x8xbf16>
    "tpu.trace_start"() <{level = 10 : i32, message = "bqk,bkd->bqd"}> : () -> ()
    %cst_22 = arith.constant dense<0.000000e+00> : vector<2x8x8xf32>
    %77 = tpu.matmul %76, %64, %cst_22 {dimension_numbers = #tpu.dot_dimension_numbers<[2], [1], [1], [2], [0, 0, 0, 1, 1, 2], [0], [0]>} : vector<2x8x8xbf16>, vector<2x8x8xbf16>, vector<2x8x8xf32> -> vector<2x8x8xf32>
    "tpu.trace_stop"() : () -> ()
    %78 = vector.shape_cast %77 : vector<2x8x8xf32> to vector<16x8xf32>
    %79 = arith.truncf %78 : vector<16x8xf32> to vector<16x8xbf16>
    %80 = vector.extract_strided_slice %33 {offsets = [0, 16], sizes = [16, 8], strides = [1, 1]} : vector<16x32xbf16> to vector<16x8xbf16>
    %81 = vector.shape_cast %80 : vector<16x8xbf16> to vector<2x8x8xbf16>
    %82 = vector.extract_strided_slice %35 {offsets = [0, 16], sizes = [16, 8], strides = [1, 1]} : vector<16x32xbf16> to vector<16x8xbf16>
    %83 = vector.shape_cast %82 : vector<16x8xbf16> to vector<2x8x8xbf16>
    %84 = vector.extract_strided_slice %37 {offsets = [0, 16], sizes = [16, 8], strides = [1, 1]} : vector<16x32xbf16> to vector<16x8xbf16>
    %85 = vector.shape_cast %84 : vector<16x8xbf16> to vector<2x8x8xbf16>
    "tpu.trace_start"() <{level = 10 : i32, message = "bqd,bkd->bqk"}> : () -> ()
    %cst_23 = arith.constant dense<0.000000e+00> : vector<2x8x8xf32>
    %86 = tpu.matmul %81, %83, %cst_23 {dimension_numbers = #tpu.dot_dimension_numbers<[2], [2], [1], [1], [0, 0, 0, 1, 1, 1], [0], [0]>} : vector<2x8x8xbf16>, vector<2x8x8xbf16>, vector<2x8x8xf32> -> vector<2x8x8xf32>
    "tpu.trace_stop"() : () -> ()
    %cst_24 = arith.constant dense<0xFF800000> : vector<2x8xf32>
    %87 = vector.multi_reduction <maximumf>, %86, %cst_24 [2] : vector<2x8x8xf32> to vector<2x8xf32>
    %88 = vector.shape_cast %87 : vector<2x8xf32> to vector<2x8x1xf32>
    %89 = vector.broadcast %88 : vector<2x8x1xf32> to vector<2x8x8xf32>
    %90 = arith.subf %86, %89 : vector<2x8x8xf32>
    %91 = math.exp %90 : vector<2x8x8xf32>
    %cst_25 = arith.constant dense<0.000000e+00> : vector<2x8xf32>
    %92 = vector.multi_reduction <add>, %91, %cst_25 [2] : vector<2x8x8xf32> to vector<2x8xf32>
    %93 = vector.shape_cast %92 : vector<2x8xf32> to vector<2x8x1xf32>
    %94 = tpu.reciprocal %93 {approx = true} : vector<2x8x1xf32> -> vector<2x8x1xf32>
    %95 = vector.broadcast %94 : vector<2x8x1xf32> to vector<2x8x8xf32>
    %96 = arith.mulf %91, %95 : vector<2x8x8xf32>
    %97 = arith.truncf %96 : vector<2x8x8xf32> to vector<2x8x8xbf16>
    "tpu.trace_start"() <{level = 10 : i32, message = "bqk,bkd->bqd"}> : () -> ()
    %cst_26 = arith.constant dense<0.000000e+00> : vector<2x8x8xf32>
    %98 = tpu.matmul %97, %85, %cst_26 {dimension_numbers = #tpu.dot_dimension_numbers<[2], [1], [1], [2], [0, 0, 0, 1, 1, 2], [0], [0]>} : vector<2x8x8xbf16>, vector<2x8x8xbf16>, vector<2x8x8xf32> -> vector<2x8x8xf32>
    "tpu.trace_stop"() : () -> ()
    %99 = vector.shape_cast %98 : vector<2x8x8xf32> to vector<16x8xf32>
    %100 = arith.truncf %99 : vector<16x8xf32> to vector<16x8xbf16>
    %101 = vector.extract_strided_slice %33 {offsets = [0, 24], sizes = [16, 8], strides = [1, 1]} : vector<16x32xbf16> to vector<16x8xbf16>
    %102 = vector.shape_cast %101 : vector<16x8xbf16> to vector<2x8x8xbf16>
    %103 = vector.extract_strided_slice %35 {offsets = [0, 24], sizes = [16, 8], strides = [1, 1]} : vector<16x32xbf16> to vector<16x8xbf16>
    %104 = vector.shape_cast %103 : vector<16x8xbf16> to vector<2x8x8xbf16>
    %105 = vector.extract_strided_slice %37 {offsets = [0, 24], sizes = [16, 8], strides = [1, 1]} : vector<16x32xbf16> to vector<16x8xbf16>
    %106 = vector.shape_cast %105 : vector<16x8xbf16> to vector<2x8x8xbf16>
    "tpu.trace_start"() <{level = 10 : i32, message = "bqd,bkd->bqk"}> : () -> ()
    %cst_27 = arith.constant dense<0.000000e+00> : vector<2x8x8xf32>
    %107 = tpu.matmul %102, %104, %cst_27 {dimension_numbers = #tpu.dot_dimension_numbers<[2], [2], [1], [1], [0, 0, 0, 1, 1, 1], [0], [0]>} : vector<2x8x8xbf16>, vector<2x8x8xbf16>, vector<2x8x8xf32> -> vector<2x8x8xf32>
    "tpu.trace_stop"() : () -> ()
    %cst_28 = arith.constant dense<0xFF800000> : vector<2x8xf32>
    %108 = vector.multi_reduction <maximumf>, %107, %cst_28 [2] : vector<2x8x8xf32> to vector<2x8xf32>
    %109 = vector.shape_cast %108 : vector<2x8xf32> to vector<2x8x1xf32>
    %110 = vector.broadcast %109 : vector<2x8x1xf32> to vector<2x8x8xf32>
    %111 = arith.subf %107, %110 : vector<2x8x8xf32>
    %112 = math.exp %111 : vector<2x8x8xf32>
    %cst_29 = arith.constant dense<0.000000e+00> : vector<2x8xf32>
    %113 = vector.multi_reduction <add>, %112, %cst_29 [2] : vector<2x8x8xf32> to vector<2x8xf32>
    %114 = vector.shape_cast %113 : vector<2x8xf32> to vector<2x8x1xf32>
    %115 = tpu.reciprocal %114 {approx = true} : vector<2x8x1xf32> -> vector<2x8x1xf32>
    %116 = vector.broadcast %115 : vector<2x8x1xf32> to vector<2x8x8xf32>
    %117 = arith.mulf %112, %116 : vector<2x8x8xf32>
    %118 = arith.truncf %117 : vector<2x8x8xf32> to vector<2x8x8xbf16>
    "tpu.trace_start"() <{level = 10 : i32, message = "bqk,bkd->bqd"}> : () -> ()
    %cst_30 = arith.constant dense<0.000000e+00> : vector<2x8x8xf32>
    %119 = tpu.matmul %118, %106, %cst_30 {dimension_numbers = #tpu.dot_dimension_numbers<[2], [1], [1], [2], [0, 0, 0, 1, 1, 2], [0], [0]>} : vector<2x8x8xbf16>, vector<2x8x8xbf16>, vector<2x8x8xf32> -> vector<2x8x8xf32>
    "tpu.trace_stop"() : () -> ()
    %120 = vector.shape_cast %119 : vector<2x8x8xf32> to vector<16x8xf32>
    %121 = arith.truncf %120 : vector<16x8xf32> to vector<16x8xbf16>
    %122 = tpu.concatenate %58, %79, %100, %121 in 1 : vector<16x8xbf16>, vector<16x8xbf16>, vector<16x8xbf16>, vector<16x8xbf16> -> vector<16x32xbf16>
    %c0_31 = arith.constant 0 : index
    %c0_32 = arith.constant 0 : index
    %123 = vector.load %arg6[%c0_31, %c0_32] : memref<32x32xbf16, #tpu.memory_space<vmem>>, vector<32x32xbf16>
    %cst_33 = arith.constant dense<0.000000e+00> : vector<16x32xf32>
    %124 = tpu.matmul %122, %123, %cst_33 {dimension_numbers = #tpu.dot_dimension_numbers<[1], [0], [0], [1], [0, 0, 1, 1], [], []>} : vector<16x32xbf16>, vector<32x32xbf16>, vector<16x32xf32> -> vector<16x32xf32>
    %c0_34 = arith.constant 0 : index
    %c0_35 = arith.constant 0 : index
    %125 = vector.load %arg7[%c0_34, %c0_35] : memref<1x32xf32, #tpu.memory_space<vmem>>, vector<1x32xf32>
    %126 = vector.broadcast %125 : vector<1x32xf32> to vector<16x32xf32>
    %127 = arith.addf %124, %126 : vector<16x32xf32>
    %128 = arith.addf %1, %127 : vector<16x32xf32>
    %c0_36 = arith.constant 0 : index
    %c0_37 = arith.constant 0 : index
    %129 = vector.load %arg8[%c0_36, %c0_37] : memref<1x32xf32, #tpu.memory_space<vmem>>, vector<1x32xf32>
    %c0_38 = arith.constant 0 : index
    %c0_39 = arith.constant 0 : index
    %130 = vector.load %arg9[%c0_38, %c0_39] : memref<1x32xf32, #tpu.memory_space<vmem>>, vector<1x32xf32>
    %cst_40 = arith.constant dense<0.000000e+00> : vector<16xf32>
    %131 = vector.multi_reduction <add>, %128, %cst_40 [1] : vector<16x32xf32> to vector<16xf32>
    %132 = vector.shape_cast %131 : vector<16xf32> to vector<16x1xf32>
    %cst_41 = arith.constant 3.200000e+01 : f32
    %133 = vector.broadcast %cst_41 : f32 to vector<16x1xf32>
    %134 = arith.divf %132, %133 : vector<16x1xf32>
    %135 = vector.broadcast %134 : vector<16x1xf32> to vector<16x32xf32>
    %136 = arith.subf %128, %135 : vector<16x32xf32>
    %137 = arith.mulf %136, %136 : vector<16x32xf32>
    %cst_42 = arith.constant dense<0.000000e+00> : vector<16xf32>
    %138 = vector.multi_reduction <add>, %137, %cst_42 [1] : vector<16x32xf32> to vector<16xf32>
    %139 = vector.shape_cast %138 : vector<16xf32> to vector<16x1xf32>
    %cst_43 = arith.constant 3.200000e+01 : f32
    %140 = vector.broadcast %cst_43 : f32 to vector<16x1xf32>
    %141 = arith.divf %139, %140 : vector<16x1xf32>
    %142 = vector.broadcast %134 : vector<16x1xf32> to vector<16x32xf32>
    %143 = arith.subf %128, %142 : vector<16x32xf32>
    %cst_44 = arith.constant 9.99999974E-6 : f32
    %144 = vector.broadcast %cst_44 : f32 to vector<16x1xf32>
    %145 = arith.addf %141, %144 : vector<16x1xf32>
    %146 = math.rsqrt %145 : vector<16x1xf32>
    %147 = vector.broadcast %146 : vector<16x1xf32> to vector<16x32xf32>
    %148 = arith.mulf %143, %147 : vector<16x32xf32>
    %149 = vector.broadcast %129 : vector<1x32xf32> to vector<16x32xf32>
    %150 = arith.mulf %148, %149 : vector<16x32xf32>
    %151 = vector.broadcast %130 : vector<1x32xf32> to vector<16x32xf32>
    %152 = arith.addf %150, %151 : vector<16x32xf32>
    %153 = arith.truncf %152 : vector<16x32xf32> to vector<16x32xbf16>
    %c0_45 = arith.constant 0 : index
    %c0_46 = arith.constant 0 : index
    %154 = vector.load %arg10[%c0_45, %c0_46] : memref<32x128xbf16, #tpu.memory_space<vmem>>, vector<32x128xbf16>
    %cst_47 = arith.constant dense<0.000000e+00> : vector<16x128xf32>
    %155 = tpu.matmul %153, %154, %cst_47 {dimension_numbers = #tpu.dot_dimension_numbers<[1], [0], [0], [1], [0, 0, 1, 1], [], []>} : vector<16x32xbf16>, vector<32x128xbf16>, vector<16x128xf32> -> vector<16x128xf32>
    %c0_48 = arith.constant 0 : index
    %c0_49 = arith.constant 0 : index
    %156 = vector.load %arg11[%c0_48, %c0_49] : memref<1x128xf32, #tpu.memory_space<vmem>>, vector<1x128xf32>
    %157 = vector.broadcast %156 : vector<1x128xf32> to vector<16x128xf32>
    %158 = arith.addf %155, %157 : vector<16x128xf32>
    %cst_50 = arith.constant 5.000000e-01 : f32
    %159 = vector.broadcast %cst_50 : f32 to vector<16x128xf32>
    %160 = arith.mulf %159, %158 : vector<16x128xf32>
    %161 = arith.mulf %158, %158 : vector<16x128xf32>
    %162 = arith.mulf %161, %158 : vector<16x128xf32>
    %cst_51 = arith.constant 4.471500e-02 : f32
    %163 = vector.broadcast %cst_51 : f32 to vector<16x128xf32>
    %164 = arith.mulf %163, %162 : vector<16x128xf32>
    %165 = arith.addf %158, %164 : vector<16x128xf32>
    %cst_52 = arith.constant 0.797884583 : f32
    %166 = vector.broadcast %cst_52 : f32 to vector<16x128xf32>
    %167 = arith.mulf %166, %165 : vector<16x128xf32>
    %168 = math.tanh %167 : vector<16x128xf32>
    %cst_53 = arith.constant 1.000000e+00 : f32
    %169 = vector.broadcast %cst_53 : f32 to vector<16x128xf32>
    %170 = arith.addf %169, %168 : vector<16x128xf32>
    %171 = arith.mulf %160, %170 : vector<16x128xf32>
    %172 = arith.truncf %171 : vector<16x128xf32> to vector<16x128xbf16>
    %c0_54 = arith.constant 0 : index
    %c0_55 = arith.constant 0 : index
    %173 = vector.load %arg12[%c0_54, %c0_55] : memref<128x32xbf16, #tpu.memory_space<vmem>>, vector<128x32xbf16>
    %cst_56 = arith.constant dense<0.000000e+00> : vector<16x32xf32>
    %174 = tpu.matmul %172, %173, %cst_56 {dimension_numbers = #tpu.dot_dimension_numbers<[1], [0], [0], [1], [0, 0, 1, 1], [], []>} : vector<16x128xbf16>, vector<128x32xbf16>, vector<16x32xf32> -> vector<16x32xf32>
    %c0_57 = arith.constant 0 : index
    %c0_58 = arith.constant 0 : index
    %175 = vector.load %arg13[%c0_57, %c0_58] : memref<1x32xf32, #tpu.memory_space<vmem>>, vector<1x32xf32>
    %176 = vector.broadcast %175 : vector<1x32xf32> to vector<16x32xf32>
    %177 = arith.addf %174, %176 : vector<16x32xf32>
    %178 = arith.addf %128, %177 : vector<16x32xf32>
    %179 = vector.shape_cast %178 : vector<16x32xf32> to vector<2x8x32xf32>
    %c0_59 = arith.constant 0 : index
    %c0_60 = arith.constant 0 : index
    %c0_61 = arith.constant 0 : index
    %180 = vector.load %arg14[%c0_59, %c0_60, %c0_61] : memref<2x8x32xf32, #tpu.memory_space<vmem>>, vector<2x8x32xf32>
    tpu.vector_store %arg14[%c0_59, %c0_60, %c0_61], %179 {strides = array<i32>} : memref<2x8x32xf32, #tpu.memory_space<vmem>>, vector<2x8x32xf32>,
    return
  }
  func.func @transform_0(%arg0: i32) -> (i32, i32, i32) {
    %c0_i32 = arith.constant 0 : i32
    %c0_i32_0 = arith.constant 0 : i32
    %c0_i32_1 = arith.constant 0 : i32
    return %arg0, %c0_i32, %c0_i32_0 : i32, i32, i32
  }
  func.func @transform_1(%arg0: i32) -> (i32, i32) {
    %c0_i32 = arith.constant 0 : i32
    %c0_i32_0 = arith.constant 0 : i32
    %c0_i32_1 = arith.constant 0 : i32
    return %c0_i32, %c0_i32_0 : i32, i32
  }
  func.func @transform_2(%arg0: i32) -> (i32, i32) {
    %c0_i32 = arith.constant 0 : i32
    %c0_i32_0 = arith.constant 0 : i32
    %c0_i32_1 = arith.constant 0 : i32
    return %c0_i32, %c0_i32_0 : i32, i32
  }
  func.func @transform_3(%arg0: i32) -> (i32, i32) {
    %c0_i32 = arith.constant 0 : i32
    %c0_i32_0 = arith.constant 0 : i32
    %c0_i32_1 = arith.constant 0 : i32
    return %c0_i32, %c0_i32_0 : i32, i32
  }
  func.func @transform_4(%arg0: i32) -> (i32, i32) {
    %c0_i32 = arith.constant 0 : i32
    %c0_i32_0 = arith.constant 0 : i32
    %c0_i32_1 = arith.constant 0 : i32
    return %c0_i32, %c0_i32_0 : i32, i32
  }
  func.func @transform_5(%arg0: i32) -> (i32, i32) {
    %c0_i32 = arith.constant 0 : i32
    %c0_i32_0 = arith.constant 0 : i32
    %c0_i32_1 = arith.constant 0 : i32
    return %c0_i32, %c0_i32_0 : i32, i32
  }
  func.func @transform_6(%arg0: i32) -> (i32, i32) {
    %c0_i32 = arith.constant 0 : i32
    %c0_i32_0 = arith.constant 0 : i32
    %c0_i32_1 = arith.constant 0 : i32
    return %c0_i32, %c0_i32_0 : i32, i32
  }
  func.func @transform_7(%arg0: i32) -> (i32, i32) {
    %c0_i32 = arith.constant 0 : i32
    %c0_i32_0 = arith.constant 0 : i32
    %c0_i32_1 = arith.constant 0 : i32
    return %c0_i32, %c0_i32_0 : i32, i32
  }
  func.func @transform_8(%arg0: i32) -> (i32, i32) {
    %c0_i32 = arith.constant 0 : i32
    %c0_i32_0 = arith.constant 0 : i32
    %c0_i32_1 = arith.constant 0 : i32
    return %c0_i32, %c0_i32_0 : i32, i32
  }
  func.func @transform_9(%arg0: i32) -> (i32, i32) {
    %c0_i32 = arith.constant 0 : i32
    %c0_i32_0 = arith.constant 0 : i32
    %c0_i32_1 = arith.constant 0 : i32
    return %c0_i32, %c0_i32_0 : i32, i32
  }
  func.func @transform_10(%arg0: i32) -> (i32, i32) {
    %c0_i32 = arith.constant 0 : i32
    %c0_i32_0 = arith.constant 0 : i32
    %c0_i32_1 = arith.constant 0 : i32
    return %c0_i32, %c0_i32_0 : i32, i32
  }
  func.func @transform_11(%arg0: i32) -> (i32, i32) {
    %c0_i32 = arith.constant 0 : i32
    %c0_i32_0 = arith.constant 0 : i32
    %c0_i32_1 = arith.constant 0 : i32
    return %c0_i32, %c0_i32_0 : i32, i32
  }
  func.func @transform_12(%arg0: i32) -> (i32, i32) {
    %c0_i32 = arith.constant 0 : i32
    %c0_i32_0 = arith.constant 0 : i32
    %c0_i32_1 = arith.constant 0 : i32
    return %c0_i32, %c0_i32_0 : i32, i32
  }
  func.func @transform_13(%arg0: i32) -> (i32, i32, i32) {
    %c0_i32 = arith.constant 0 : i32
    %c0_i32_0 = arith.constant 0 : i32
    %c0_i32_1 = arith.constant 0 : i32
    return %arg0, %c0_i32, %c0_i32_0 : i32, i32, i32
  }
}

</mosaic_0001>

<llo_original>
// kernel: tpu_custom_call.1
$region0: #{tpu_custom_call.1}
  #allocation0 [shape = 'u32[]', space=smem, size = 0x4, offset = 0x4, fixed_abs, tag = 'smem constant byte address 0x4 - core index']
  #allocation1 [shape = 'u32[144,128]{1,0:T(1,128)}', space=vmem, size = 0x12000, scoped, tag = 'internal scratch']
  %s0 = inlined_call_operand.vmem [shape: f32[4,8,32], index: 0, kind: input, shape index: {}]
  %s1 = inlined_call_operand.vmem [shape: f32[1,32], index: 1, kind: input, shape index: {}]
  %s2 = inlined_call_operand.vmem [shape: f32[1,32], index: 2, kind: input, shape index: {}]
  %s3 = inlined_call_operand.vmem [shape: bf16[32,96], index: 3, kind: input, shape index: {}]
  %s4 = inlined_call_operand.vmem [shape: f32[1,96], index: 4, kind: input, shape index: {}]
  %s5 = inlined_call_operand.vmem [shape: bf16[32,32], index: 5, kind: input, shape index: {}]
  %s6 = inlined_call_operand.vmem [shape: f32[1,32], index: 6, kind: input, shape index: {}]
  %s7 = inlined_call_operand.vmem [shape: f32[1,32], index: 7, kind: input, shape index: {}]
  %s8 = inlined_call_operand.vmem [shape: f32[1,32], index: 8, kind: input, shape index: {}]
  %s9 = inlined_call_operand.vmem [shape: bf16[32,128], index: 9, kind: input, shape index: {}]
  %s10 = inlined_call_operand.vmem [shape: f32[1,128], index: 10, kind: input, shape index: {}]
  %s11 = inlined_call_operand.vmem [shape: bf16[128,32], index: 11, kind: input, shape index: {}]
  %s12 = inlined_call_operand.vmem [shape: f32[1,32], index: 12, kind: input, shape index: {}]
  %s13 = inlined_call_operand.hbm [shape: f32[4,8,32], index: 13, kind: output, shape index: {}]
  %s14 = sld [smem:[#allocation0]]
  $region85: #{tpu_custom_call.1} parent=0
    _
  %s16 = ssub.s32 1, %s14
  %s17 = scalar_select 0, %s16, %s14
  $region1: #{tpu_custom_call.1} parent=0
    #allocation2 [shape = 'u8[16384]{0}', space=vmem, size = 0x4000, scoped, tag = 'output window, operand 0']
    #allocation3 [shape = 's32[2]{0}', space=sflag, size = 0x8, scoped, tag = 'scoped memory for tpu_custom_call.1']
    %18 = vsyncpa [#allocation3], 0
    %s19 = scalar_lea.sflag [#allocation3], 1
    %20 = vsyncpa %s19, 0
    loop: start=0, step=1, limit=4
    $region2: #{tpu_custom_call.1} parent=1 // loop_pre_header
      _
    $region3: #{tpu_custom_call.1} parent=1 // loop_header
      %s22 = sphi 0, %s26
      %p23 = scmp.ge.s32.totalorder %s22, 4
      %s32 = sphi 0, %s34
      %s35 = sphi 0, %s32
      %s36 = sphi 0, %s35
      %s52 = sphi 0, %s36
      %s56 = sphi 0, %s56
      %s58 = sphi 0, %s56
      %s59 = sphi 0, %s58
      %s73 = sphi 0, %s59
      %s77 = sphi 0, %s77
      %s79 = sphi 0, %s77
      %s80 = sphi 0, %s79
      %s94 = sphi 0, %s80
      %s98 = sphi 0, %s98
      %s100 = sphi 0, %s98
      %s101 = sphi 0, %s100
      %s115 = sphi 0, %s101
      %s119 = sphi 0, %s119
      %s121 = sphi 0, %s119
      %s122 = sphi 0, %s121
      %s136 = sphi 0, %s122
      %s140 = sphi 0, %s140
      %s142 = sphi 0, %s140
      %s143 = sphi 0, %s142
      %s157 = sphi 0, %s143
      %s161 = sphi 0, %s161
      %s163 = sphi 0, %s161
      %s164 = sphi 0, %s163
      %s178 = sphi 0, %s164
      %s182 = sphi 0, %s182
      %s184 = sphi 0, %s182
      %s185 = sphi 0, %s184
      %s199 = sphi 0, %s185
      %s203 = sphi 0, %s203
      %s205 = sphi 0, %s203
      %s206 = sphi 0, %s205
      %s220 = sphi 0, %s206
      %s224 = sphi 0, %s224
      %s226 = sphi 0, %s224
      %s227 = sphi 0, %s226
      %s241 = sphi 0, %s227
      %s245 = sphi 0, %s245
      %s247 = sphi 0, %s245
      %s248 = sphi 0, %s247
      %s262 = sphi 0, %s248
      %s266 = sphi 0, %s266
      %s268 = sphi 0, %s266
      %s269 = sphi 0, %s268
      %s283 = sphi 0, %s269
      %s287 = sphi 0, %s287
      %s289 = sphi 0, %s287
      %s290 = sphi 0, %s289
      %s304 = sphi 0, %s290
      %s310 = sphi 0, %s312
      %s313 = sphi 0, %s310
      %s314 = sphi 0, %s313
      %s330 = sphi 0, %s314
    $region4: #{tpu_custom_call.1} parent=1 // loop_header_branch
      %25 = sbr.rel (%p23) target = $region8
    $region5: #{tpu_custom_call.1} parent=1 // loop_body
      %s27 = ssub.s32 %s22, 1
      %s28 = ssub.s32 %s22, 2
      %s29 = sadd.s32 %s22, 1
      %s30 = ssub.s32 %s22, %s29
      %p31 = scmp.eq.s32.totalorder %s30, 0
      %s33 = sadd.s32 %s32, 1
      %s34 = scalar_select %p31, %s32, %s33
      %p37 = pneg %p31
      %p38 = scmp.eq.s32.totalorder %s22, 1
      %p39 = por %p37, %p38
      %p40 = scmp.ne.s32.totalorder %s32, %s35
      %p41 = scmp.eq.s32.totalorder %s22, 0
      %p42 = por %p40, %p41
      %p43 = scmp.ne.s32.totalorder %s32, %s35
      %p44 = scmp.eq.s32.totalorder %s27, 1
      %p45 = por %p43, %p44
      %p46 = scmp.ne.s32.totalorder %s35, %s36
      %p47 = scmp.eq.s32.totalorder %s27, 0
      %p48 = por %p46, %p47
      %p49 = scmp.ne.s32.totalorder %s35, %s36
      %p50 = scmp.eq.s32.totalorder %s28, 1
      %p51 = por %p49, %p50
      %p53 = scmp.ne.s32.totalorder %s36, %s52
      %p54 = scmp.eq.s32.totalorder %s28, 0
      %p55 = por %p53, %p54
      %s57 = sadd.s32 %s56, 1
      %p60 = scmp.eq.s32.totalorder %s22, 1
      %p61 = scmp.ne.s32.totalorder %s56, %s58
      %p62 = scmp.eq.s32.totalorder %s22, 0
      %p63 = por %p61, %p62
      %p64 = scmp.ne.s32.totalorder %s56, %s58
      %p65 = scmp.eq.s32.totalorder %s27, 1
      %p66 = por %p64, %p65
      %p67 = scmp.ne.s32.totalorder %s58, %s59
      %p68 = scmp.eq.s32.totalorder %s27, 0
      %p69 = por %p67, %p68
      %p70 = scmp.ne.s32.totalorder %s58, %s59
      %p71 = scmp.eq.s32.totalorder %s28, 1
      %p72 = por %p70, %p71
      %p74 = scmp.ne.s32.totalorder %s59, %s73
      %p75 = scmp.eq.s32.totalorder %s28, 0
      %p76 = por %p74, %p75
      %s78 = sadd.s32 %s77, 1
      %p81 = scmp.eq.s32.totalorder %s22, 1
      %p82 = scmp.ne.s32.totalorder %s77, %s79
      %p83 = scmp.eq.s32.totalorder %s22, 0
      %p84 = por %p82, %p83
      %p85 = scmp.ne.s32.totalorder %s77, %s79
      %p86 = scmp.eq.s32.totalorder %s27, 1
      %p87 = por %p85, %p86
      %p88 = scmp.ne.s32.totalorder %s79, %s80
      %p89 = scmp.eq.s32.totalorder %s27, 0
      %p90 = por %p88, %p89
      %p91 = scmp.ne.s32.totalorder %s79, %s80
      %p92 = scmp.eq.s32.totalorder %s28, 1
      %p93 = por %p91, %p92
      %p95 = scmp.ne.s32.totalorder %s80, %s94
      %p96 = scmp.eq.s32.totalorder %s28, 0
      %p97 = por %p95, %p96
      %s99 = sadd.s32 %s98, 1
      %p102 = scmp.eq.s32.totalorder %s22, 1
      %p103 = scmp.ne.s32.totalorder %s98, %s100
      %p104 = scmp.eq.s32.totalorder %s22, 0
      %p105 = por %p103, %p104
      %p106 = scmp.ne.s32.totalorder %s98, %s100
      %p107 = scmp.eq.s32.totalorder %s27, 1
      %p108 = por %p106, %p107
      %p109 = scmp.ne.s32.totalorder %s100, %s101
      %p110 = scmp.eq.s32.totalorder %s27, 0
      %p111 = por %p109, %p110
      %p112 = scmp.ne.s32.totalorder %s100, %s101
      %p113 = scmp.eq.s32.totalorder %s28, 1
      %p114 = por %p112, %p113
      %p116 = scmp.ne.s32.totalorder %s101, %s115
      %p117 = scmp.eq.s32.totalorder %s28, 0
      %p118 = por %p116, %p117
      %s120 = sadd.s32 %s119, 1
      %p123 = scmp.eq.s32.totalorder %s22, 1
      %p124 = scmp.ne.s32.totalorder %s119, %s121
      %p125 = scmp.eq.s32.totalorder %s22, 0
      %p126 = por %p124, %p125
      %p127 = scmp.ne.s32.totalorder %s119, %s121
      %p128 = scmp.eq.s32.totalorder %s27, 1
      %p129 = por %p127, %p128
      %p130 = scmp.ne.s32.totalorder %s121, %s122
      %p131 = scmp.eq.s32.totalorder %s27, 0
      %p132 = por %p130, %p131
      %p133 = scmp.ne.s32.totalorder %s121, %s122
      %p134 = scmp.eq.s32.totalorder %s28, 1
      %p135 = por %p133, %p134
      %p137 = scmp.ne.s32.totalorder %s122, %s136
      %p138 = scmp.eq.s32.totalorder %s28, 0
      %p139 = por %p137, %p138
      %s141 = sadd.s32 %s140, 1
      %p144 = scmp.eq.s32.totalorder %s22, 1
      %p145 = scmp.ne.s32.totalorder %s140, %s142
      %p146 = scmp.eq.s32.totalorder %s22, 0
      %p147 = por %p145, %p146
      %p148 = scmp.ne.s32.totalorder %s140, %s142
      %p149 = scmp.eq.s32.totalorder %s27, 1
      %p150 = por %p148, %p149
      %p151 = scmp.ne.s32.totalorder %s142, %s143
      %p152 = scmp.eq.s32.totalorder %s27, 0
      %p153 = por %p151, %p152
      %p154 = scmp.ne.s32.totalorder %s142, %s143
      %p155 = scmp.eq.s32.totalorder %s28, 1
      %p156 = por %p154, %p155
      %p158 = scmp.ne.s32.totalorder %s143, %s157
      %p159 = scmp.eq.s32.totalorder %s28, 0
      %p160 = por %p158, %p159
      %s162 = sadd.s32 %s161, 1
      %p165 = scmp.eq.s32.totalorder %s22, 1
      %p166 = scmp.ne.s32.totalorder %s161, %s163
      %p167 = scmp.eq.s32.totalorder %s22, 0
      %p168 = por %p166, %p167
      %p169 = scmp.ne.s32.totalorder %s161, %s163
      %p170 = scmp.eq.s32.totalorder %s27, 1
      %p171 = por %p169, %p170
      %p172 = scmp.ne.s32.totalorder %s163, %s164
      %p173 = scmp.eq.s32.totalorder %s27, 0
      %p174 = por %p172, %p173
      %p175 = scmp.ne.s32.totalorder %s163, %s164
      %p176 = scmp.eq.s32.totalorder %s28, 1
      %p177 = por %p175, %p176
      %p179 = scmp.ne.s32.totalorder %s164, %s178
      %p180 = scmp.eq.s32.totalorder %s28, 0
      %p181 = por %p179, %p180
      %s183 = sadd.s32 %s182, 1
      %p186 = scmp.eq.s32.totalorder %s22, 1
      %p187 = scmp.ne.s32.totalorder %s182, %s184
      %p188 = scmp.eq.s32.totalorder %s22, 0
      %p189 = por %p187, %p188
      %p190 = scmp.ne.s32.totalorder %s182, %s184
      %p191 = scmp.eq.s32.totalorder %s27, 1
      %p192 = por %p190, %p191
      %p193 = scmp.ne.s32.totalorder %s184, %s185
      %p194 = scmp.eq.s32.totalorder %s27, 0
      %p195 = por %p193, %p194
      %p196 = scmp.ne.s32.totalorder %s184, %s185
      %p197 = scmp.eq.s32.totalorder %s28, 1
      %p198 = por %p196, %p197
      %p200 = scmp.ne.s32.totalorder %s185, %s199
      %p201 = scmp.eq.s32.totalorder %s28, 0
      %p202 = por %p200, %p201
      %s204 = sadd.s32 %s203, 1
      %p207 = scmp.eq.s32.totalorder %s22, 1
      %p208 = scmp.ne.s32.totalorder %s203, %s205
      %p209 = scmp.eq.s32.totalorder %s22, 0
      %p210 = por %p208, %p209
      %p211 = scmp.ne.s32.totalorder %s203, %s205
      %p212 = scmp.eq.s32.totalorder %s27, 1
      %p213 = por %p211, %p212
      %p214 = scmp.ne.s32.totalorder %s205, %s206
      %p215 = scmp.eq.s32.totalorder %s27, 0
      %p216 = por %p214, %p215
      %p217 = scmp.ne.s32.totalorder %s205, %s206
      %p218 = scmp.eq.s32.totalorder %s28, 1
      %p219 = por %p217, %p218
      %p221 = scmp.ne.s32.totalorder %s206, %s220
      %p222 = scmp.eq.s32.totalorder %s28, 0
      %p223 = por %p221, %p222
      %s225 = sadd.s32 %s224, 1
      %p228 = scmp.eq.s32.totalorder %s22, 1
      %p229 = scmp.ne.s32.totalorder %s224, %s226
      %p230 = scmp.eq.s32.totalorder %s22, 0
      %p231 = por %p229, %p230
      %p232 = scmp.ne.s32.totalorder %s224, %s226
      %p233 = scmp.eq.s32.totalorder %s27, 1
      %p234 = por %p232, %p233
      %p235 = scmp.ne.s32.totalorder %s226, %s227
      %p236 = scmp.eq.s32.totalorder %s27, 0
      %p237 = por %p235, %p236
      %p238 = scmp.ne.s32.totalorder %s226, %s227
      %p239 = scmp.eq.s32.totalorder %s28, 1
      %p240 = por %p238, %p239
      %p242 = scmp.ne.s32.totalorder %s227, %s241
      %p243 = scmp.eq.s32.totalorder %s28, 0
      %p244 = por %p242, %p243
      %s246 = sadd.s32 %s245, 1
      %p249 = scmp.eq.s32.totalorder %s22, 1
      %p250 = scmp.ne.s32.totalorder %s245, %s247
      %p251 = scmp.eq.s32.totalorder %s22, 0
      %p252 = por %p250, %p251
      %p253 = scmp.ne.s32.totalorder %s245, %s247
      %p254 = scmp.eq.s32.totalorder %s27, 1
      %p255 = por %p253, %p254
      %p256 = scmp.ne.s32.totalorder %s247, %s248
      %p257 = scmp.eq.s32.totalorder %s27, 0
      %p258 = por %p256, %p257
      %p259 = scmp.ne.s32.totalorder %s247, %s248
      %p260 = scmp.eq.s32.totalorder %s28, 1
      %p261 = por %p259, %p260
      %p263 = scmp.ne.s32.totalorder %s248, %s262
      %p264 = scmp.eq.s32.totalorder %s28, 0
      %p265 = por %p263, %p264
      %s267 = sadd.s32 %s266, 1
      %p270 = scmp.eq.s32.totalorder %s22, 1
      %p271 = scmp.ne.s32.totalorder %s266, %s268
      %p272 = scmp.eq.s32.totalorder %s22, 0
      %p273 = por %p271, %p272
      %p274 = scmp.ne.s32.totalorder %s266, %s268
      %p275 = scmp.eq.s32.totalorder %s27, 1
      %p276 = por %p274, %p275
      %p277 = scmp.ne.s32.totalorder %s268, %s269
      %p278 = scmp.eq.s32.totalorder %s27, 0
      %p279 = por %p277, %p278
      %p280 = scmp.ne.s32.totalorder %s268, %s269
      %p281 = scmp.eq.s32.totalorder %s28, 1
      %p282 = por %p280, %p281
      %p284 = scmp.ne.s32.totalorder %s269, %s283
      %p285 = scmp.eq.s32.totalorder %s28, 0
      %p286 = por %p284, %p285
      %s288 = sadd.s32 %s287, 1
      %p291 = scmp.eq.s32.totalorder %s22, 1
      %p292 = scmp.ne.s32.totalorder %s287, %s289
      %p293 = scmp.eq.s32.totalorder %s22, 0
      %p294 = por %p292, %p293
      %p295 = scmp.ne.s32.totalorder %s287, %s289
      %p296 = scmp.eq.s32.totalorder %s27, 1
      %p297 = por %p295, %p296
      %p298 = scmp.ne.s32.totalorder %s289, %s290
      %p299 = scmp.eq.s32.totalorder %s27, 0
      %p300 = por %p298, %p299
      %p301 = scmp.ne.s32.totalorder %s289, %s290
      %p302 = scmp.eq.s32.totalorder %s28, 1
      %p303 = por %p301, %p302
      %p305 = scmp.ne.s32.totalorder %s290, %s304
      %p306 = scmp.eq.s32.totalorder %s28, 0
      %p307 = por %p305, %p306
      %s308 = ssub.s32 %s22, %s29
      %p309 = scmp.eq.s32.totalorder %s308, 0
      %s311 = sadd.s32 %s310, 1
      %s312 = scalar_select %p309, %s310, %s311
      %p315 = pneg %p309
      %p316 = scmp.eq.s32.totalorder %s22, 1
      %p317 = por %p315, %p316
      %p318 = scmp.ne.s32.totalorder %s310, %s313
      %p319 = scmp.eq.s32.totalorder %s22, 0
      %p320 = por %p318, %p319
      %p321 = scmp.ne.s32.totalorder %s310, %s313
      %p322 = scmp.eq.s32.totalorder %s27, 1
      %p323 = por %p321, %p322
      %p324 = scmp.ne.s32.totalorder %s313, %s314
      %p325 = scmp.eq.s32.totalorder %s27, 0
      %p326 = por %p324, %p325
      %p327 = scmp.ne.s32.totalorder %s313, %s314
      %p328 = scmp.eq.s32.totalorder %s28, 1
      %p329 = por %p327, %p328
      %p331 = scmp.ne.s32.totalorder %s314, %s330
      %p332 = scmp.eq.s32.totalorder %s28, 0
      %p333 = por %p331, %p332
      %p334 = scmp.le.s32.totalorder 1, %s22
      %p335 = scmp.lt.s32.totalorder %s22, 3
      %p336 = pnand %p334, %p335
      %p337 = pneg %p336
      // Predicated region
      $region9: #{tpu_custom_call.1} parent=5 // pred_check
        _
      $region10: #{tpu_custom_call.1} parent=5 // pred_check_branch
        %339 = sbr.rel (%p336) target = $region12
      $region11: #{tpu_custom_call.1} parent=5 // pred_region
        %s340 = ssub.s32 %s22, 1
        // Predicated region
        $region13: #{tpu_custom_call.1} parent=11 // pred_check
          %p341 = pneg %p69
        $region14: #{tpu_custom_call.1} parent=11 // pred_check_branch
          %343 = sbr.rel (%p341) target = $region16
        $region15: #{tpu_custom_call.1} parent=11 // pred_region
          _
        $region16: #{tpu_custom_call.1} parent=11 // pred_fallthru
          _
        // Predicated region
        $region17: #{tpu_custom_call.1} parent=11 // pred_check
          %p344 = pneg %p90
        $region18: #{tpu_custom_call.1} parent=11 // pred_check_branch
          %346 = sbr.rel (%p344) target = $region20
        $region19: #{tpu_custom_call.1} parent=11 // pred_region
          _
        $region20: #{tpu_custom_call.1} parent=11 // pred_fallthru
          _
        // Predicated region
        $region21: #{tpu_custom_call.1} parent=11 // pred_check
          %p347 = pneg %p111
        $region22: #{tpu_custom_call.1} parent=11 // pred_check_branch
          %349 = sbr.rel (%p347) target = $region24
        $region23: #{tpu_custom_call.1} parent=11 // pred_region
          _
        $region24: #{tpu_custom_call.1} parent=11 // pred_fallthru
          _
        // Predicated region
        $region25: #{tpu_custom_call.1} parent=11 // pred_check
          %p350 = pneg %p132
        $region26: #{tpu_custom_call.1} parent=11 // pred_check_branch
          %352 = sbr.rel (%p350) target = $region28
        $region27: #{tpu_custom_call.1} parent=11 // pred_region
          _
        $region28: #{tpu_custom_call.1} parent=11 // pred_fallthru
          _
        // Predicated region
        $region29: #{tpu_custom_call.1} parent=11 // pred_check
          %p353 = pneg %p153
        $region30: #{tpu_custom_call.1} parent=11 // pred_check_branch
          %355 = sbr.rel (%p353) target = $region32
        $region31: #{tpu_custom_call.1} parent=11 // pred_region
          _
        $region32: #{tpu_custom_call.1} parent=11 // pred_fallthru
          _
        // Predicated region
        $region33: #{tpu_custom_call.1} parent=11 // pred_check
          %p356 = pneg %p174
        $region34: #{tpu_custom_call.1} parent=11 // pred_check_branch
          %358 = sbr.rel (%p356) target = $region36
        $region35: #{tpu_custom_call.1} parent=11 // pred_region
          _
        $region36: #{tpu_custom_call.1} parent=11 // pred_fallthru
          _
        // Predicated region
        $region37: #{tpu_custom_call.1} parent=11 // pred_check
          %p359 = pneg %p195
        $region38: #{tpu_custom_call.1} parent=11 // pred_check_branch
          %361 = sbr.rel (%p359) target = $region40
        $region39: #{tpu_custom_call.1} parent=11 // pred_region
          _
        $region40: #{tpu_custom_call.1} parent=11 // pred_fallthru
          _
        // Predicated region
        $region41: #{tpu_custom_call.1} parent=11 // pred_check
          %p362 = pneg %p216
        $region42: #{tpu_custom_call.1} parent=11 // pred_check_branch
          %364 = sbr.rel (%p362) target = $region44
        $region43: #{tpu_custom_call.1} parent=11 // pred_region
          _
        $region44: #{tpu_custom_call.1} parent=11 // pred_fallthru
          _
        // Predicated region
        $region45: #{tpu_custom_call.1} parent=11 // pred_check
          %p365 = pneg %p237
        $region46: #{tpu_custom_call.1} parent=11 // pred_check_branch
          %367 = sbr.rel (%p365) target = $region48
        $region47: #{tpu_custom_call.1} parent=11 // pred_region
          _
        $region48: #{tpu_custom_call.1} parent=11 // pred_fallthru
          _
        // Predicated region
        $region49: #{tpu_custom_call.1} parent=11 // pred_check
          %p368 = pneg %p258
        $region50: #{tpu_custom_call.1} parent=11 // pred_check_branch
          %370 = sbr.rel (%p368) target = $region52
        $region51: #{tpu_custom_call.1} parent=11 // pred_region
          _
        $region52: #{tpu_custom_call.1} parent=11 // pred_fallthru
          _
        // Predicated region
        $region53: #{tpu_custom_call.1} parent=11 // pred_check
          %p371 = pneg %p279
        $region54: #{tpu_custom_call.1} parent=11 // pred_check_branch
          %373 = sbr.rel (%p371) target = $region56
        $region55: #{tpu_custom_call.1} parent=11 // pred_region
          _
        $region56: #{tpu_custom_call.1} parent=11 // pred_fallthru
          _
        // Predicated region
        $region57: #{tpu_custom_call.1} parent=11 // pred_check
          %p374 = pneg %p300
        $region58: #{tpu_custom_call.1} parent=11 // pred_check_branch
          %376 = sbr.rel (%p374) target = $region60
        $region59: #{tpu_custom_call.1} parent=11 // pred_region
          _
        $region60: #{tpu_custom_call.1} parent=11 // pred_fallthru
          _
      $region12: #{tpu_custom_call.1} parent=5 // pred_fallthru
        _
      %p377 = scmp.lt.s32.totalorder %s22, 2
      // Predicated region
      $region61: #{tpu_custom_call.1} parent=5 // pred_check
        %p378 = pneg %p377
      $region62: #{tpu_custom_call.1} parent=5 // pred_check_branch
        %380 = sbr.rel (%p378) target = $region64
      $region63: #{tpu_custom_call.1} parent=5 // pred_region
        // Predicated region
        $region65: #{tpu_custom_call.1} parent=63 // pred_check
          %p381 = pneg %p42
        $region66: #{tpu_custom_call.1} parent=63 // pred_check_branch
          %383 = sbr.rel (%p381) target = $region68
        $region67: #{tpu_custom_call.1} parent=63 // pred_region
          %s384 = smul.u32 2, %s22
          %p385 = scmp.lt.s32.totalorder %s384, 3
          %s386 = scalar_select %p385, %s384, 3
          %s387 = smul.addr %s386, 8
          %s388 = scalar_lea.vmem %s0, %s387
          %s389 = smul.u32 2, %s22
        $region68: #{tpu_custom_call.1} parent=63 // pred_fallthru
          _
      $region64: #{tpu_custom_call.1} parent=5 // pred_fallthru
        _
      %p390 = scmp.le.s32.totalorder 1, %s22
      %p391 = scmp.lt.s32.totalorder %s22, 3
      %p392 = pnand %p390, %p391
      %p393 = pneg %p392
      // Predicated region
      $region69: #{tpu_custom_call.1} parent=5 // pred_check
        _
      $region70: #{tpu_custom_call.1} parent=5 // pred_check_branch
        %395 = sbr.rel (%p392) target = $region72
      $region71: #{tpu_custom_call.1} parent=5 // pred_region
        %s396 = ssub.s32 %s22, 1
        %s397 = smul.u32 2, %s27
        %p398 = scmp.lt.s32.totalorder %s397, 3
        %s399 = scalar_select %p398, %s397, 3
        %s400 = smul.addr %s399, 8
        %s401 = scalar_lea.vmem %s0, %s400
        %p402 = pneg %p48
        %p403 = pneg %p45
        %p404 = pneg %p69
        %p405 = pneg %p66
        %p406 = pneg %p90
        %p407 = pneg %p87
        %p408 = pneg %p111
        %p409 = pneg %p108
        %p410 = pneg %p132
        %p411 = pneg %p129
        %p412 = pneg %p153
        %p413 = pneg %p150
        %p414 = pneg %p174
        %p415 = pneg %p171
        %p416 = pneg %p195
        %p417 = pneg %p192
        %p418 = pneg %p216
        %p419 = pneg %p213
        %p420 = pneg %p237
        %p421 = pneg %p234
        %p422 = pneg %p258
        %p423 = pneg %p255
        %p424 = pneg %p279
        %p425 = pneg %p276
        %p426 = pneg %p300
        %p427 = pneg %p297
        %p428 = pneg %p326
        %p429 = pneg %p323
        %s430 = sand.u32 %s313, 1
        %s431 = scalar_lea.sflag [#allocation3], %s430
        %s432 = sand.u32 %s313, 1
        %s433 = smul.addr %s432, 16
        %s434 = scalar_lea.vmem [#allocation2], %s433
        %s435 = smul.u32 2, %s27
        %p436 = scmp.lt.s32.totalorder %s435, 3
        %s437 = scalar_select %p436, %s435, 3
        %s438 = smul.addr %s437, 8
        %s439 = scalar_lea.vmem %s0, %s438
        %s440 = smul.u32 2, %s27
        %s441 = smul.u32 2, %s27
        %v443 = vld [vmem:[%s439] sm:$0xff]
        %v444 = vld [vmem:[%s439 + $0x8] sm:$0xff]
        %v445 = vld [vmem:[%s1] sm:$0x1]
        %v446 = vld [vmem:[%s2] sm:$0x1]
        %vm447 = vcmask 261120
        %v448 = vsel %vm447, %v443, 0.0
        %449 = vadd.xlane.f32.xlu0 %v448
        %v450 = vpop.xlane.xlu0 %449
        %v451 = vsel %vm447, %v444, 0.0
        %452 = vadd.xlane.f32.xlu0 %v451
        %v453 = vpop.xlane.xlu0 %452
        %v454 = vrcp.pop 32.0
        %v455 = vmul.f32 %v450, %v454
        %v456 = vmul.f32 %v453, %v454
        %v457 = vsub.f32 %v443, %v455
        %v458 = vsub.f32 %v444, %v456
        %v459 = vmul.f32 %v457, %v457
        %v460 = vmul.f32 %v458, %v458
        %v461 = vsel %vm447, %v459, 0.0
        %462 = vadd.xlane.f32.xlu0 %v461
        %v463 = vpop.xlane.xlu0 %462
        %v464 = vsel %vm447, %v460, 0.0
        %465 = vadd.xlane.f32.xlu0 %v464
        %v466 = vpop.xlane.xlu0 %465
        %v467 = vmul.f32 %v463, %v454
        %v468 = vmul.f32 %v466, %v454
        %v469 = vadd.f32 %v467, 1e-05
        %v470 = vadd.f32 %v468, 1e-05
        %v471 = vrsqrt.pop %v469
        %v472 = vrsqrt.pop %v470
        %v473 = vmul.f32 %v457, %v471
        %v474 = vmul.f32 %v458, %v472
        %v476 = vlaneseq
        %v477 = vshrl.u32 %v476, 7
        %v478 = vsub.s32 0, %v477
        %v479 = vrot.slane %v445, %v478
        %v481 = vmul.f32 %v473, %v479
        %v482 = vmul.f32 %v474, %v479
        %v484 = vlaneseq
        %v485 = vshrl.u32 %v484, 7
        %v486 = vsub.s32 0, %v485
        %v487 = vrot.slane %v446, %v486
        %v489 = vadd.f32 %v481, %v487
        %v490 = vadd.f32 %v482, %v487
        %v491 = vpack.c.bf16 %v490, %v489
        %v492 = vld [vmem:[%s3] sm:$0xf]
        %v493 = vld [vmem:[%s3 + $0x4] sm:$0xf]
        %v494 = vld [vmem:[%s3 + $0x8] sm:$0xf]
        %v495 = vld [vmem:[%s3 + $0xc] sm:$0xf]
        %v496 = vld [vmem:[%s4] sm:$0x1]
        %v498 = vlaneseq
        %v499 = vshrl.u32 %v498, 7
        %v500 = vsub.s32 0, %v499
        %v501 = vrot.slane %v496, %v500
        %v507 = vunpack.c.l.b16 %v492
        %v508 = vunpack.c.l.b16 %v493
        %v509 = vunpack.c.l.b16 %v494
        %v510 = vunpack.c.l.b16 %v495
        %v511 = vpack.c.b16 %v508, %v507
        %v512 = vpack.c.b16 %v510, %v509
        %v516 = vsel %vm447, %v491, 0
        %518 = vmatprep.subr.bf16.mxu0 0
        %519 = vmatpush1.bf16.msra.mxu0 %v511
        %520 = vmatprep.subr.bf16.mxu0 0
        %521 = vmatpush1.bf16.msra.mxu0 %v512
        %522 = vmatprep.subr.bf16.mxu0 0
        %523 = vmatpush1.bf16.msra.mxu0 0
        %524 = vmatprep.subr.bf16.mxu0 0
        %525 = vmatpush1.bf16.msra.mxu0 0
        %526 = vmatprep.subr.bf16.mxu0 0
        %527 = vmatpush1.bf16.msra.mxu0 0
        %528 = vmatprep.subr.bf16.mxu0 0
        %529 = vmatpush1.bf16.msra.mxu0 0
        %530 = vmatprep.subr.bf16.mxu0 0
        %531 = vmatpush1.bf16.msra.mxu0 0
        %532 = vmatprep.subr.bf16.mxu0 0
        %533 = vmatpush1.bf16.msra.mxu0 0
        %534 = vmatprep.subr.bf16.mxu0 0
        %535 = vmatpush1.bf16.msra.mxu0 0
        %536 = vmatprep.subr.bf16.mxu0 0
        %537 = vmatpush1.bf16.msra.mxu0 0
        %538 = vmatprep.subr.bf16.mxu0 0
        %539 = vmatpush1.bf16.msra.mxu0 0
        %540 = vmatprep.subr.bf16.mxu0 0
        %541 = vmatpush1.bf16.msra.mxu0 0
        %542 = vmatprep.subr.bf16.mxu0 0
        %543 = vmatpush1.bf16.msra.mxu0 0
        %544 = vmatprep.subr.bf16.mxu0 0
        %545 = vmatpush1.bf16.msra.mxu0 0
        %546 = vmatprep.subr.bf16.mxu0 0
        %547 = vmatpush1.bf16.msra.mxu0 0
        %548 = vmatprep.subr.bf16.mxu0 0
        %549 = vmatpush1.bf16.msra.mxu0 0
        %550 = vmatprep.mubr.bf16.mxu0 0
        %551 = vmatmul.mubr.bf16.gmra.mrb[0].mxu0 %v516
        %v552 = vpop.f32.mrb[0].mxu0
        %v553 = vadd.f32 %v501, %v552
        %v554 = vpop.f32.mrb[0].mxu0
        %v555 = vpop.f32.mrb[0].mxu0
        %v556 = vadd.f32 %v501, %v555
        %v557 = vpop.f32.mrb[0].mxu0
        %558 = vdwg.mxu0
        %v559 = vpack.c.bf16 %v556, %v553
        %v561 = vunpack.c.l.b16 %v559
        %v562 = vunpack.c.h.b16 %v559
        %v563 = vpack.c.b16 %v561, %v561
        %v564 = vpack.c.b16 %v562, %v562
        %565 = vrot.lane.b32.xlu0 %v563, 96
        %v566 = vpop.permute.xlu0 %565
        %vm567 = vcmask 64512
        %v569 = vsel %vm567, %v563, 0
        %v572 = vsel %vm567, %v566, 0
        %574 = vmatprep.subr.bf16.mxu0 0
        %575 = vmatpush1.bf16.xpose.msra.mxu0 %v572
        %576 = vmatprep.subr.bf16.mxu0 0
        %577 = vmatpush1.bf16.xpose.msra.mxu0 0
        %578 = vmatprep.subr.bf16.mxu0 0
        %579 = vmatpush1.bf16.xpose.msra.mxu0 0
        %580 = vmatprep.subr.bf16.mxu0 0
        %581 = vmatpush1.bf16.xpose.msra.mxu0 0
        %582 = vmatprep.subr.bf16.mxu0 0
        %583 = vmatpush1.bf16.xpose.msra.mxu0 0
        %584 = vmatprep.subr.bf16.mxu0 0
        %585 = vmatpush1.bf16.xpose.msra.mxu0 0
        %586 = vmatprep.subr.bf16.mxu0 0
        %587 = vmatpush1.bf16.xpose.msra.mxu0 0
        %588 = vmatprep.subr.bf16.mxu0 0
        %589 = vmatpush1.bf16.xpose.msra.mxu0 0
        %590 = vmatprep.subr.bf16.mxu0 0
        %591 = vmatpush1.bf16.xpose.msra.mxu0 0
        %592 = vmatprep.subr.bf16.mxu0 0
        %593 = vmatpush1.bf16.xpose.msra.mxu0 0
        %594 = vmatprep.subr.bf16.mxu0 0
        %595 = vmatpush1.bf16.xpose.msra.mxu0 0
        %596 = vmatprep.subr.bf16.mxu0 0
        %597 = vmatpush1.bf16.xpose.msra.mxu0 0
        %598 = vmatprep.subr.bf16.mxu0 0
        %599 = vmatpush1.bf16.xpose.msra.mxu0 0
        %600 = vmatprep.subr.bf16.mxu0 0
        %601 = vmatpush1.bf16.xpose.msra.mxu0 0
        %602 = vmatprep.subr.bf16.mxu0 0
        %603 = vmatpush1.bf16.xpose.msra.mxu0 0
        %604 = vmatprep.subr.bf16.mxu0 0
        %605 = vmatpush1.bf16.xpose.msra.mxu0 0
        %606 = vmatprep.mubr.bf16.mxu0 0
        %607 = vmatmul.mubr.bf16.gmra.mrb[0].mxu0 %v569
        %v608 = vpop.f32.mrb[0].mxu0
        %v609 = vadd.f32 0.0, %v608
        %v610 = vpop.f32.mrb[0].mxu0
        %v611 = vpop.f32.mrb[0].mxu0
        %v612 = vpop.f32.mrb[0].mxu0
        %613 = vdwg.mxu0
        %614 = vrot.lane.b32.xlu0 %v564, 96
        %v615 = vpop.permute.xlu0 %614
        %v617 = vsel %vm567, %v564, 0
        %v620 = vsel %vm567, %v615, 0
        %622 = vmatprep.subr.bf16.mxu0 0
        %623 = vmatpush1.bf16.xpose.msra.mxu0 %v620
        %624 = vmatprep.subr.bf16.mxu0 0
        %625 = vmatpush1.bf16.xpose.msra.mxu0 0
        %626 = vmatprep.subr.bf16.mxu0 0
        %627 = vmatpush1.bf16.xpose.msra.mxu0 0
        %628 = vmatprep.subr.bf16.mxu0 0
        %629 = vmatpush1.bf16.xpose.msra.mxu0 0
        %630 = vmatprep.subr.bf16.mxu0 0
        %631 = vmatpush1.bf16.xpose.msra.mxu0 0
        %632 = vmatprep.subr.bf16.mxu0 0
        %633 = vmatpush1.bf16.xpose.msra.mxu0 0
        %634 = vmatprep.subr.bf16.mxu0 0
        %635 = vmatpush1.bf16.xpose.msra.mxu0 0
        %636 = vmatprep.subr.bf16.mxu0 0
        %637 = vmatpush1.bf16.xpose.msra.mxu0 0
        %638 = vmatprep.subr.bf16.mxu0 0
        %639 = vmatpush1.bf16.xpose.msra.mxu0 0
        %640 = vmatprep.subr.bf16.mxu0 0
        %641 = vmatpush1.bf16.xpose.msra.mxu0 0
        %642 = vmatprep.subr.bf16.mxu0 0
        %643 = vmatpush1.bf16.xpose.msra.mxu0 0
        %644 = vmatprep.subr.bf16.mxu0 0
        %645 = vmatpush1.bf16.xpose.msra.mxu0 0
        %646 = vmatprep.subr.bf16.mxu0 0
        %647 = vmatpush1.bf16.xpose.msra.mxu0 0
        %648 = vmatprep.subr.bf16.mxu0 0
        %649 = vmatpush1.bf16.xpose.msra.mxu0 0
        %650 = vmatprep.subr.bf16.mxu0 0
        %651 = vmatpush1.bf16.xpose.msra.mxu0 0
        %652 = vmatprep.subr.bf16.mxu0 0
        %653 = vmatpush1.bf16.xpose.msra.mxu0 0
        %654 = vmatprep.mubr.bf16.mxu0 0
        %655 = vmatmul.mubr.bf16.gmra.mrb[0].mxu0 %v617
        %v656 = vpop.f32.mrb[0].mxu0
        %v657 = vadd.f32 0.0, %v656
        %v658 = vpop.f32.mrb[0].mxu0
        %v659 = vpop.f32.mrb[0].mxu0
        %v660 = vpop.f32.mrb[0].mxu0
        %661 = vdwg.mxu0
        %v662 = vsel %vm567, %v609, -inf
        %663 = vmax.xlane.f32.xlu0 %v662
        %v664 = vpop.xlane.xlu0 %663
        %v665 = vsel %vm567, %v657, -inf
        %666 = vmax.xlane.f32.xlu0 %v665
        %v667 = vpop.xlane.xlu0 %666
        %v668 = vsub.f32 %v609, %v664
        %v669 = vsub.f32 %v657, %v667
        %v670 = vmul.f32 %v668, 1.442695
        %v671 = vpow.pop %v670
        %v672 = vmul.f32 %v669, 1.442695
        %v673 = vpow.pop %v672
        %v674 = vsel %vm567, %v671, 0.0
        %675 = vadd.xlane.f32.xlu0 %v674
        %v676 = vpop.xlane.xlu0 %675
        %v677 = vsel %vm567, %v673, 0.0
        %678 = vadd.xlane.f32.xlu0 %v677
        %v679 = vpop.xlane.xlu0 %678
        %v680 = vrcp.pop %v676
        %v681 = vrcp.pop %v679
        %v682 = vmul.f32 %v671, %v680
        %v683 = vmul.f32 %v673, %v681
        %v684 = vpack.c.bf16 %v682, %v682
        %v685 = vpack.c.bf16 %v683, %v683
        %686 = vrot.lane.b32.xlu0 %v563, 64
        %v687 = vpop.permute.xlu0 %686
        %v689 = vsel %vm567, %v684, 0
        %vm691 = vcmask 1043456
        %v693 = vsel %vm691, %v687, 0
        %695 = vmatprep.subr.bf16.mxu0 0
        %696 = vmatpush1.bf16.msra.mxu0 %v693
        %697 = vmatprep.subr.bf16.mxu0 0
        %698 = vmatpush1.bf16.msra.mxu0 0
        %699 = vmatprep.subr.bf16.mxu0 0
        %700 = vmatpush1.bf16.msra.mxu0 0
        %701 = vmatprep.subr.bf16.mxu0 0
        %702 = vmatpush1.bf16.msra.mxu0 0
        %703 = vmatprep.subr.bf16.mxu0 0
        %704 = vmatpush1.bf16.msra.mxu0 0
        %705 = vmatprep.subr.bf16.mxu0 0
        %706 = vmatpush1.bf16.msra.mxu0 0
        %707 = vmatprep.subr.bf16.mxu0 0
        %708 = vmatpush1.bf16.msra.mxu0 0
        %709 = vmatprep.subr.bf16.mxu0 0
        %710 = vmatpush1.bf16.msra.mxu0 0
        %711 = vmatprep.subr.bf16.mxu0 0
        %712 = vmatpush1.bf16.msra.mxu0 0
        %713 = vmatprep.subr.bf16.mxu0 0
        %714 = vmatpush1.bf16.msra.mxu0 0
        %715 = vmatprep.subr.bf16.mxu0 0
        %716 = vmatpush1.bf16.msra.mxu0 0
        %717 = vmatprep.subr.bf16.mxu0 0
        %718 = vmatpush1.bf16.msra.mxu0 0
        %719 = vmatprep.subr.bf16.mxu0 0
        %720 = vmatpush1.bf16.msra.mxu0 0
        %721 = vmatprep.subr.bf16.mxu0 0
        %722 = vmatpush1.bf16.msra.mxu0 0
        %723 = vmatprep.subr.bf16.mxu0 0
        %724 = vmatpush1.bf16.msra.mxu0 0
        %725 = vmatprep.subr.bf16.mxu0 0
        %726 = vmatpush1.bf16.msra.mxu0 0
        %727 = vmatprep.mubr.bf16.mxu0 0
        %728 = vmatmul.mubr.bf16.gmra.mrb[0].mxu0 %v689
        %v729 = vpop.f32.mrb[0].mxu0
        %v730 = vadd.f32 0.0, %v729
        %v731 = vpop.f32.mrb[0].mxu0
        %v732 = vpop.f32.mrb[0].mxu0
        %v733 = vpop.f32.mrb[0].mxu0
        %734 = vdwg.mxu0
        %735 = vrot.lane.b32.xlu0 %v564, 64
        %v736 = vpop.permute.xlu0 %735
        %v738 = vsel %vm567, %v685, 0
        %v741 = vsel %vm691, %v736, 0
        %743 = vmatprep.subr.bf16.mxu0 0
        %744 = vmatpush1.bf16.msra.mxu0 %v741
        %745 = vmatprep.subr.bf16.mxu0 0
        %746 = vmatpush1.bf16.msra.mxu0 0
        %747 = vmatprep.subr.bf16.mxu0 0
        %748 = vmatpush1.bf16.msra.mxu0 0
        %749 = vmatprep.subr.bf16.mxu0 0
        %750 = vmatpush1.bf16.msra.mxu0 0
        %751 = vmatprep.subr.bf16.mxu0 0
        %752 = vmatpush1.bf16.msra.mxu0 0
        %753 = vmatprep.subr.bf16.mxu0 0
        %754 = vmatpush1.bf16.msra.mxu0 0
        %755 = vmatprep.subr.bf16.mxu0 0
        %756 = vmatpush1.bf16.msra.mxu0 0
        %757 = vmatprep.subr.bf16.mxu0 0
        %758 = vmatpush1.bf16.msra.mxu0 0
        %759 = vmatprep.subr.bf16.mxu0 0
        %760 = vmatpush1.bf16.msra.mxu0 0
        %761 = vmatprep.subr.bf16.mxu0 0
        %762 = vmatpush1.bf16.msra.mxu0 0
        %763 = vmatprep.subr.bf16.mxu0 0
        %764 = vmatpush1.bf16.msra.mxu0 0
        %765 = vmatprep.subr.bf16.mxu0 0
        %766 = vmatpush1.bf16.msra.mxu0 0
        %767 = vmatprep.subr.bf16.mxu0 0
        %768 = vmatpush1.bf16.msra.mxu0 0
        %769 = vmatprep.subr.bf16.mxu0 0
        %770 = vmatpush1.bf16.msra.mxu0 0
        %771 = vmatprep.subr.bf16.mxu0 0
        %772 = vmatpush1.bf16.msra.mxu0 0
        %773 = vmatprep.subr.bf16.mxu0 0
        %774 = vmatpush1.bf16.msra.mxu0 0
        %775 = vmatprep.mubr.bf16.mxu0 0
        %776 = vmatmul.mubr.bf16.gmra.mrb[0].mxu0 %v738
        %v777 = vpop.f32.mrb[0].mxu0
        %v778 = vadd.f32 0.0, %v777
        %v779 = vpop.f32.mrb[0].mxu0
        %v780 = vpop.f32.mrb[0].mxu0
        %v781 = vpop.f32.mrb[0].mxu0
        %782 = vdwg.mxu0
        %v783 = vpack.c.bf16 %v778, %v730
        %784 = vrot.lane.b32.xlu0 %v563, 120
        %v785 = vpop.permute.xlu0 %784
        %786 = vrot.lane.b32.xlu0 %v563, 88
        %v787 = vpop.permute.xlu0 %786
        %v789 = vsel %vm567, %v785, 0
        %v792 = vsel %vm567, %v787, 0
        %794 = vmatprep.subr.bf16.mxu0 0
        %795 = vmatpush1.bf16.xpose.msra.mxu0 %v792
        %796 = vmatprep.subr.bf16.mxu0 0
        %797 = vmatpush1.bf16.xpose.msra.mxu0 0
        %798 = vmatprep.subr.bf16.mxu0 0
        %799 = vmatpush1.bf16.xpose.msra.mxu0 0
        %800 = vmatprep.subr.bf16.mxu0 0
        %801 = vmatpush1.bf16.xpose.msra.mxu0 0
        %802 = vmatprep.subr.bf16.mxu0 0
        %803 = vmatpush1.bf16.xpose.msra.mxu0 0
        %804 = vmatprep.subr.bf16.mxu0 0
        %805 = vmatpush1.bf16.xpose.msra.mxu0 0
        %806 = vmatprep.subr.bf16.mxu0 0
        %807 = vmatpush1.bf16.xpose.msra.mxu0 0
        %808 = vmatprep.subr.bf16.mxu0 0
        %809 = vmatpush1.bf16.xpose.msra.mxu0 0
        %810 = vmatprep.subr.bf16.mxu0 0
        %811 = vmatpush1.bf16.xpose.msra.mxu0 0
        %812 = vmatprep.subr.bf16.mxu0 0
        %813 = vmatpush1.bf16.xpose.msra.mxu0 0
        %814 = vmatprep.subr.bf16.mxu0 0
        %815 = vmatpush1.bf16.xpose.msra.mxu0 0
        %816 = vmatprep.subr.bf16.mxu0 0
        %817 = vmatpush1.bf16.xpose.msra.mxu0 0
        %818 = vmatprep.subr.bf16.mxu0 0
        %819 = vmatpush1.bf16.xpose.msra.mxu0 0
        %820 = vmatprep.subr.bf16.mxu0 0
        %821 = vmatpush1.bf16.xpose.msra.mxu0 0
        %822 = vmatprep.subr.bf16.mxu0 0
        %823 = vmatpush1.bf16.xpose.msra.mxu0 0
        %824 = vmatprep.subr.bf16.mxu0 0
        %825 = vmatpush1.bf16.xpose.msra.mxu0 0
        %826 = vmatprep.mubr.bf16.mxu0 0
        %827 = vmatmul.mubr.bf16.gmra.mrb[0].mxu0 %v789
        %v828 = vpop.f32.mrb[0].mxu0
        %v829 = vadd.f32 0.0, %v828
        %v830 = vpop.f32.mrb[0].mxu0
        %v831 = vpop.f32.mrb[0].mxu0
        %v832 = vpop.f32.mrb[0].mxu0
        %833 = vdwg.mxu0
        %834 = vrot.lane.b32.xlu0 %v564, 120
        %v835 = vpop.permute.xlu0 %834
        %836 = vrot.lane.b32.xlu0 %v564, 88
        %v837 = vpop.permute.xlu0 %836
        %v839 = vsel %vm567, %v835, 0
        %v842 = vsel %vm567, %v837, 0
        %844 = vmatprep.subr.bf16.mxu0 0
        %845 = vmatpush1.bf16.xpose.msra.mxu0 %v842
        %846 = vmatprep.subr.bf16.mxu0 0
        %847 = vmatpush1.bf16.xpose.msra.mxu0 0
        %848 = vmatprep.subr.bf16.mxu0 0
        %849 = vmatpush1.bf16.xpose.msra.mxu0 0
        %850 = vmatprep.subr.bf16.mxu0 0
        %851 = vmatpush1.bf16.xpose.msra.mxu0 0
        %852 = vmatprep.subr.bf16.mxu0 0
        %853 = vmatpush1.bf16.xpose.msra.mxu0 0
        %854 = vmatprep.subr.bf16.mxu0 0
        %855 = vmatpush1.bf16.xpose.msra.mxu0 0
        %856 = vmatprep.subr.bf16.mxu0 0
        %857 = vmatpush1.bf16.xpose.msra.mxu0 0
        %858 = vmatprep.subr.bf16.mxu0 0
        %859 = vmatpush1.bf16.xpose.msra.mxu0 0
        %860 = vmatprep.subr.bf16.mxu0 0
        %861 = vmatpush1.bf16.xpose.msra.mxu0 0
        %862 = vmatprep.subr.bf16.mxu0 0
        %863 = vmatpush1.bf16.xpose.msra.mxu0 0
        %864 = vmatprep.subr.bf16.mxu0 0
        %865 = vmatpush1.bf16.xpose.msra.mxu0 0
        %866 = vmatprep.subr.bf16.mxu0 0
        %867 = vmatpush1.bf16.xpose.msra.mxu0 0
        %868 = vmatprep.subr.bf16.mxu0 0
        %869 = vmatpush1.bf16.xpose.msra.mxu0 0
        %870 = vmatprep.subr.bf16.mxu0 0
        %871 = vmatpush1.bf16.xpose.msra.mxu0 0
        %872 = vmatprep.subr.bf16.mxu0 0
        %873 = vmatpush1.bf16.xpose.msra.mxu0 0
        %874 = vmatprep.subr.bf16.mxu0 0
        %875 = vmatpush1.bf16.xpose.msra.mxu0 0
        %876 = vmatprep.mubr.bf16.mxu0 0
        %877 = vmatmul.mubr.bf16.gmra.mrb[0].mxu0 %v839
        %v878 = vpop.f32.mrb[0].mxu0
        %v879 = vadd.f32 0.0, %v878
        %v880 = vpop.f32.mrb[0].mxu0
        %v881 = vpop.f32.mrb[0].mxu0
        %v882 = vpop.f32.mrb[0].mxu0
        %883 = vdwg.mxu0
        %v884 = vsel %vm567, %v829, -inf
        %885 = vmax.xlane.f32.xlu0 %v884
        %v886 = vpop.xlane.xlu0 %885
        %v887 = vsel %vm567, %v879, -inf
        %888 = vmax.xlane.f32.xlu0 %v887
        %v889 = vpop.xlane.xlu0 %888
        %v890 = vsub.f32 %v829, %v886
        %v891 = vsub.f32 %v879, %v889
        %v892 = vmul.f32 %v890, 1.442695
        %v893 = vpow.pop %v892
        %v894 = vmul.f32 %v891, 1.442695
        %v895 = vpow.pop %v894
        %v896 = vsel %vm567, %v893, 0.0
        %897 = vadd.xlane.f32.xlu0 %v896
        %v898 = vpop.xlane.xlu0 %897
        %v899 = vsel %vm567, %v895, 0.0
        %900 = vadd.xlane.f32.xlu0 %v899
        %v901 = vpop.xlane.xlu0 %900
        %v902 = vrcp.pop %v898
        %v903 = vrcp.pop %v901
        %v904 = vmul.f32 %v893, %v902
        %v905 = vmul.f32 %v895, %v903
        %v906 = vpack.c.bf16 %v904, %v904
        %v907 = vpack.c.bf16 %v905, %v905
        %908 = vrot.lane.b32.xlu0 %v563, 56
        %v909 = vpop.permute.xlu0 %908
        %v911 = vsel %vm567, %v906, 0
        %v914 = vsel %vm691, %v909, 0
        %916 = vmatprep.subr.bf16.mxu0 0
        %917 = vmatpush1.bf16.msra.mxu0 %v914
        %918 = vmatprep.subr.bf16.mxu0 0
        %919 = vmatpush1.bf16.msra.mxu0 0
        %920 = vmatprep.subr.bf16.mxu0 0
        %921 = vmatpush1.bf16.msra.mxu0 0
        %922 = vmatprep.subr.bf16.mxu0 0
        %923 = vmatpush1.bf16.msra.mxu0 0
        %924 = vmatprep.subr.bf16.mxu0 0
        %925 = vmatpush1.bf16.msra.mxu0 0
        %926 = vmatprep.subr.bf16.mxu0 0
        %927 = vmatpush1.bf16.msra.mxu0 0
        %928 = vmatprep.subr.bf16.mxu0 0
        %929 = vmatpush1.bf16.msra.mxu0 0
        %930 = vmatprep.subr.bf16.mxu0 0
        %931 = vmatpush1.bf16.msra.mxu0 0
        %932 = vmatprep.subr.bf16.mxu0 0
        %933 = vmatpush1.bf16.msra.mxu0 0
        %934 = vmatprep.subr.bf16.mxu0 0
        %935 = vmatpush1.bf16.msra.mxu0 0
        %936 = vmatprep.subr.bf16.mxu0 0
        %937 = vmatpush1.bf16.msra.mxu0 0
        %938 = vmatprep.subr.bf16.mxu0 0
        %939 = vmatpush1.bf16.msra.mxu0 0
        %940 = vmatprep.subr.bf16.mxu0 0
        %941 = vmatpush1.bf16.msra.mxu0 0
        %942 = vmatprep.subr.bf16.mxu0 0
        %943 = vmatpush1.bf16.msra.mxu0 0
        %944 = vmatprep.subr.bf16.mxu0 0
        %945 = vmatpush1.bf16.msra.mxu0 0
        %946 = vmatprep.subr.bf16.mxu0 0
        %947 = vmatpush1.bf16.msra.mxu0 0
        %948 = vmatprep.mubr.bf16.mxu0 0
        %949 = vmatmul.mubr.bf16.gmra.mrb[0].mxu0 %v911
        %v950 = vpop.f32.mrb[0].mxu0
        %v951 = vadd.f32 0.0, %v950
        %v952 = vpop.f32.mrb[0].mxu0
        %v953 = vpop.f32.mrb[0].mxu0
        %v954 = vpop.f32.mrb[0].mxu0
        %955 = vdwg.mxu0
        %956 = vrot.lane.b32.xlu0 %v564, 56
        %v957 = vpop.permute.xlu0 %956
        %v959 = vsel %vm567, %v907, 0
        %v962 = vsel %vm691, %v957, 0
        %964 = vmatprep.subr.bf16.mxu0 0
        %965 = vmatpush1.bf16.msra.mxu0 %v962
        %966 = vmatprep.subr.bf16.mxu0 0
        %967 = vmatpush1.bf16.msra.mxu0 0
        %968 = vmatprep.subr.bf16.mxu0 0
        %969 = vmatpush1.bf16.msra.mxu0 0
        %970 = vmatprep.subr.bf16.mxu0 0
        %971 = vmatpush1.bf16.msra.mxu0 0
        %972 = vmatprep.subr.bf16.mxu0 0
        %973 = vmatpush1.bf16.msra.mxu0 0
        %974 = vmatprep.subr.bf16.mxu0 0
        %975 = vmatpush1.bf16.msra.mxu0 0
        %976 = vmatprep.subr.bf16.mxu0 0
        %977 = vmatpush1.bf16.msra.mxu0 0
        %978 = vmatprep.subr.bf16.mxu0 0
        %979 = vmatpush1.bf16.msra.mxu0 0
        %980 = vmatprep.subr.bf16.mxu0 0
        %981 = vmatpush1.bf16.msra.mxu0 0
        %982 = vmatprep.subr.bf16.mxu0 0
        %983 = vmatpush1.bf16.msra.mxu0 0
        %984 = vmatprep.subr.bf16.mxu0 0
        %985 = vmatpush1.bf16.msra.mxu0 0
        %986 = vmatprep.subr.bf16.mxu0 0
        %987 = vmatpush1.bf16.msra.mxu0 0
        %988 = vmatprep.subr.bf16.mxu0 0
        %989 = vmatpush1.bf16.msra.mxu0 0
        %990 = vmatprep.subr.bf16.mxu0 0
        %991 = vmatpush1.bf16.msra.mxu0 0
        %992 = vmatprep.subr.bf16.mxu0 0
        %993 = vmatpush1.bf16.msra.mxu0 0
        %994 = vmatprep.subr.bf16.mxu0 0
        %995 = vmatpush1.bf16.msra.mxu0 0
        %996 = vmatprep.mubr.bf16.mxu0 0
        %997 = vmatmul.mubr.bf16.gmra.mrb[0].mxu0 %v959
        %v998 = vpop.f32.mrb[0].mxu0
        %v999 = vadd.f32 0.0, %v998
        %v1000 = vpop.f32.mrb[0].mxu0
        %v1001 = vpop.f32.mrb[0].mxu0
        %v1002 = vpop.f32.mrb[0].mxu0
        %1003 = vdwg.mxu0
        %v1004 = vpack.c.bf16 %v999, %v951
        %1005 = vrot.lane.b32.xlu0 %v563, 112
        %v1006 = vpop.permute.xlu0 %1005
        %1007 = vrot.lane.b32.xlu0 %v563, 80
        %v1008 = vpop.permute.xlu0 %1007
        %v1010 = vsel %vm567, %v1006, 0
        %v1013 = vsel %vm567, %v1008, 0
        %1015 = vmatprep.subr.bf16.mxu0 0
        %1016 = vmatpush1.bf16.xpose.msra.mxu0 %v1013
        %1017 = vmatprep.subr.bf16.mxu0 0
        %1018 = vmatpush1.bf16.xpose.msra.mxu0 0
        %1019 = vmatprep.subr.bf16.mxu0 0
        %1020 = vmatpush1.bf16.xpose.msra.mxu0 0
        %1021 = vmatprep.subr.bf16.mxu0 0
        %1022 = vmatpush1.bf16.xpose.msra.mxu0 0
        %1023 = vmatprep.subr.bf16.mxu0 0
        %1024 = vmatpush1.bf16.xpose.msra.mxu0 0
        %1025 = vmatprep.subr.bf16.mxu0 0
        %1026 = vmatpush1.bf16.xpose.msra.mxu0 0
        %1027 = vmatprep.subr.bf16.mxu0 0
        %1028 = vmatpush1.bf16.xpose.msra.mxu0 0
        %1029 = vmatprep.subr.bf16.mxu0 0
        %1030 = vmatpush1.bf16.xpose.msra.mxu0 0
        %1031 = vmatprep.subr.bf16.mxu0 0
        %1032 = vmatpush1.bf16.xpose.msra.mxu0 0
        %1033 = vmatprep.subr.bf16.mxu0 0
        %1034 = vmatpush1.bf16.xpose.msra.mxu0 0
        %1035 = vmatprep.subr.bf16.mxu0 0
        %1036 = vmatpush1.bf16.xpose.msra.mxu0 0
        %1037 = vmatprep.subr.bf16.mxu0 0
        %1038 = vmatpush1.bf16.xpose.msra.mxu0 0
        %1039 = vmatprep.subr.bf16.mxu0 0
        %1040 = vmatpush1.bf16.xpose.msra.mxu0 0
        %1041 = vmatprep.subr.bf16.mxu0 0
        %1042 = vmatpush1.bf16.xpose.msra.mxu0 0
        %1043 = vmatprep.subr.bf16.mxu0 0
        %1044 = vmatpush1.bf16.xpose.msra.mxu0 0
        %1045 = vmatprep.subr.bf16.mxu0 0
        %1046 = vmatpush1.bf16.xpose.msra.mxu0 0
        %1047 = vmatprep.mubr.bf16.mxu0 0
        %1048 = vmatmul.mubr.bf16.gmra.mrb[0].mxu0 %v1010
        %v1049 = vpop.f32.mrb[0].mxu0
        %v1050 = vadd.f32 0.0, %v1049
        %v1051 = vpop.f32.mrb[0].mxu0
        %v1052 = vpop.f32.mrb[0].mxu0
        %v1053 = vpop.f32.mrb[0].mxu0
        %1054 = vdwg.mxu0
        %1055 = vrot.lane.b32.xlu0 %v564, 112
        %v1056 = vpop.permute.xlu0 %1055
        %1057 = vrot.lane.b32.xlu0 %v564, 80
        %v1058 = vpop.permute.xlu0 %1057
        %v1060 = vsel %vm567, %v1056, 0
        %v1063 = vsel %vm567, %v1058, 0
        %1065 = vmatprep.subr.bf16.mxu0 0
        %1066 = vmatpush1.bf16.xpose.msra.mxu0 %v1063
        %1067 = vmatprep.subr.bf16.mxu0 0
        %1068 = vmatpush1.bf16.xpose.msra.mxu0 0
        %1069 = vmatprep.subr.bf16.mxu0 0
        %1070 = vmatpush1.bf16.xpose.msra.mxu0 0
        %1071 = vmatprep.subr.bf16.mxu0 0
        %1072 = vmatpush1.bf16.xpose.msra.mxu0 0
        %1073 = vmatprep.subr.bf16.mxu0 0
        %1074 = vmatpush1.bf16.xpose.msra.mxu0 0
        %1075 = vmatprep.subr.bf16.mxu0 0
        %1076 = vmatpush1.bf16.xpose.msra.mxu0 0
        %1077 = vmatprep.subr.bf16.mxu0 0
        %1078 = vmatpush1.bf16.xpose.msra.mxu0 0
        %1079 = vmatprep.subr.bf16.mxu0 0
        %1080 = vmatpush1.bf16.xpose.msra.mxu0 0
        %1081 = vmatprep.subr.bf16.mxu0 0
        %1082 = vmatpush1.bf16.xpose.msra.mxu0 0
        %1083 = vmatprep.subr.bf16.mxu0 0
        %1084 = vmatpush1.bf16.xpose.msra.mxu0 0
        %1085 = vmatprep.subr.bf16.mxu0 0
        %1086 = vmatpush1.bf16.xpose.msra.mxu0 0
        %1087 = vmatprep.subr.bf16.mxu0 0
        %1088 = vmatpush1.bf16.xpose.msra.mxu0 0
        %1089 = vmatprep.subr.bf16.mxu0 0
        %1090 = vmatpush1.bf16.xpose.msra.mxu0 0
        %1091 = vmatprep.subr.bf16.mxu0 0
        %1092 = vmatpush1.bf16.xpose.msra.mxu0 0
        %1093 = vmatprep.subr.bf16.mxu0 0
        %1094 = vmatpush1.bf16.xpose.msra.mxu0 0
        %1095 = vmatprep.subr.bf16.mxu0 0
        %1096 = vmatpush1.bf16.xpose.msra.mxu0 0
        %1097 = vmatprep.mubr.bf16.mxu0 0
        %1098 = vmatmul.mubr.bf16.gmra.mrb[0].mxu0 %v1060
        %v1099 = vpop.f32.mrb[0].mxu0
        %v1100 = vadd.f32 0.0, %v1099
        %v1101 = vpop.f32.mrb[0].mxu0
        %v1102 = vpop.f32.mrb[0].mxu0
        %v1103 = vpop.f32.mrb[0].mxu0
        %1104 = vdwg.mxu0
        %v1105 = vsel %vm567, %v1050, -inf
        %1106 = vmax.xlane.f32.xlu0 %v1105
        %v1107 = vpop.xlane.xlu0 %1106
        %v1108 = vsel %vm567, %v1100, -inf
        %1109 = vmax.xlane.f32.xlu0 %v1108
        %v1110 = vpop.xlane.xlu0 %1109
        %v1111 = vsub.f32 %v1050, %v1107
        %v1112 = vsub.f32 %v1100, %v1110
        %v1113 = vmul.f32 %v1111, 1.442695
        %v1114 = vpow.pop %v1113
        %v1115 = vmul.f32 %v1112, 1.442695
        %v1116 = vpow.pop %v1115
        %v1117 = vsel %vm567, %v1114, 0.0
        %1118 = vadd.xlane.f32.xlu0 %v1117
        %v1119 = vpop.xlane.xlu0 %1118
        %v1120 = vsel %vm567, %v1116, 0.0
        %1121 = vadd.xlane.f32.xlu0 %v1120
        %v1122 = vpop.xlane.xlu0 %1121
        %v1123 = vrcp.pop %v1119
        %v1124 = vrcp.pop %v1122
        %v1125 = vmul.f32 %v1114, %v1123
        %v1126 = vmul.f32 %v1116, %v1124
        %v1127 = vpack.c.bf16 %v1125, %v1125
        %v1128 = vpack.c.bf16 %v1126, %v1126
        %1129 = vrot.lane.b32.xlu0 %v563, 48
        %v1130 = vpop.permute.xlu0 %1129
        %v1132 = vsel %vm567, %v1127, 0
        %v1135 = vsel %vm691, %v1130, 0
        %1137 = vmatprep.subr.bf16.mxu0 0
        %1138 = vmatpush1.bf16.msra.mxu0 %v1135
        %1139 = vmatprep.subr.bf16.mxu0 0
        %1140 = vmatpush1.bf16.msra.mxu0 0
        %1141 = vmatprep.subr.bf16.mxu0 0
        %1142 = vmatpush1.bf16.msra.mxu0 0
        %1143 = vmatprep.subr.bf16.mxu0 0
        %1144 = vmatpush1.bf16.msra.mxu0 0
        %1145 = vmatprep.subr.bf16.mxu0 0
        %1146 = vmatpush1.bf16.msra.mxu0 0
        %1147 = vmatprep.subr.bf16.mxu0 0
        %1148 = vmatpush1.bf16.msra.mxu0 0
        %1149 = vmatprep.subr.bf16.mxu0 0
        %1150 = vmatpush1.bf16.msra.mxu0 0
        %1151 = vmatprep.subr.bf16.mxu0 0
        %1152 = vmatpush1.bf16.msra.mxu0 0
        %1153 = vmatprep.subr.bf16.mxu0 0
        %1154 = vmatpush1.bf16.msra.mxu0 0
        %1155 = vmatprep.subr.bf16.mxu0 0
        %1156 = vmatpush1.bf16.msra.mxu0 0
        %1157 = vmatprep.subr.bf16.mxu0 0
        %1158 = vmatpush1.bf16.msra.mxu0 0
        %1159 = vmatprep.subr.bf16.mxu0 0
        %1160 = vmatpush1.bf16.msra.mxu0 0
        %1161 = vmatprep.subr.bf16.mxu0 0
        %1162 = vmatpush1.bf16.msra.mxu0 0
        %1163 = vmatprep.subr.bf16.mxu0 0
        %1164 = vmatpush1.bf16.msra.mxu0 0
        %1165 = vmatprep.subr.bf16.mxu0 0
        %1166 = vmatpush1.bf16.msra.mxu0 0
        %1167 = vmatprep.subr.bf16.mxu0 0
        %1168 = vmatpush1.bf16.msra.mxu0 0
        %1169 = vmatprep.mubr.bf16.mxu0 0
        %1170 = vmatmul.mubr.bf16.gmra.mrb[0].mxu0 %v1132
        %v1171 = vpop.f32.mrb[0].mxu0
        %v1172 = vadd.f32 0.0, %v1171
        %v1173 = vpop.f32.mrb[0].mxu0
        %v1174 = vpop.f32.mrb[0].mxu0
        %v1175 = vpop.f32.mrb[0].mxu0
        %1176 = vdwg.mxu0
        %1177 = vrot.lane.b32.xlu0 %v564, 48
        %v1178 = vpop.permute.xlu0 %1177
        %v1180 = vsel %vm567, %v1128, 0
        %v1183 = vsel %vm691, %v1178, 0
        %1185 = vmatprep.subr.bf16.mxu0 0
        %1186 = vmatpush1.bf16.msra.mxu0 %v1183
        %1187 = vmatprep.subr.bf16.mxu0 0
        %1188 = vmatpush1.bf16.msra.mxu0 0
        %1189 = vmatprep.subr.bf16.mxu0 0
        %1190 = vmatpush1.bf16.msra.mxu0 0
        %1191 = vmatprep.subr.bf16.mxu0 0
        %1192 = vmatpush1.bf16.msra.mxu0 0
        %1193 = vmatprep.subr.bf16.mxu0 0
        %1194 = vmatpush1.bf16.msra.mxu0 0
        %1195 = vmatprep.subr.bf16.mxu0 0
        %1196 = vmatpush1.bf16.msra.mxu0 0
        %1197 = vmatprep.subr.bf16.mxu0 0
        %1198 = vmatpush1.bf16.msra.mxu0 0
        %1199 = vmatprep.subr.bf16.mxu0 0
        %1200 = vmatpush1.bf16.msra.mxu0 0
        %1201 = vmatprep.subr.bf16.mxu0 0
        %1202 = vmatpush1.bf16.msra.mxu0 0
        %1203 = vmatprep.subr.bf16.mxu0 0
        %1204 = vmatpush1.bf16.msra.mxu0 0
        %1205 = vmatprep.subr.bf16.mxu0 0
        %1206 = vmatpush1.bf16.msra.mxu0 0
        %1207 = vmatprep.subr.bf16.mxu0 0
        %1208 = vmatpush1.bf16.msra.mxu0 0
        %1209 = vmatprep.subr.bf16.mxu0 0
        %1210 = vmatpush1.bf16.msra.mxu0 0
        %1211 = vmatprep.subr.bf16.mxu0 0
        %1212 = vmatpush1.bf16.msra.mxu0 0
        %1213 = vmatprep.subr.bf16.mxu0 0
        %1214 = vmatpush1.bf16.msra.mxu0 0
        %1215 = vmatprep.subr.bf16.mxu0 0
        %1216 = vmatpush1.bf16.msra.mxu0 0
        %1217 = vmatprep.mubr.bf16.mxu0 0
        %1218 = vmatmul.mubr.bf16.gmra.mrb[0].mxu0 %v1180
        %v1219 = vpop.f32.mrb[0].mxu0
        %v1220 = vadd.f32 0.0, %v1219
        %v1221 = vpop.f32.mrb[0].mxu0
        %v1222 = vpop.f32.mrb[0].mxu0
        %v1223 = vpop.f32.mrb[0].mxu0
        %1224 = vdwg.mxu0
        %v1225 = vpack.c.bf16 %v1220, %v1172
        %1226 = vrot.lane.b32.xlu0 %v563, 104
        %v1227 = vpop.permute.xlu0 %1226
        %1228 = vrot.lane.b32.xlu0 %v563, 72
        %v1229 = vpop.permute.xlu0 %1228
        %v1231 = vsel %vm567, %v1227, 0
        %v1234 = vsel %vm567, %v1229, 0
        %1236 = vmatprep.subr.bf16.mxu0 0
        %1237 = vmatpush1.bf16.xpose.msra.mxu0 %v1234
        %1238 = vmatprep.subr.bf16.mxu0 0
        %1239 = vmatpush1.bf16.xpose.msra.mxu0 0
        %1240 = vmatprep.subr.bf16.mxu0 0
        %1241 = vmatpush1.bf16.xpose.msra.mxu0 0
        %1242 = vmatprep.subr.bf16.mxu0 0
        %1243 = vmatpush1.bf16.xpose.msra.mxu0 0
        %1244 = vmatprep.subr.bf16.mxu0 0
        %1245 = vmatpush1.bf16.xpose.msra.mxu0 0
        %1246 = vmatprep.subr.bf16.mxu0 0
        %1247 = vmatpush1.bf16.xpose.msra.mxu0 0
        %1248 = vmatprep.subr.bf16.mxu0 0
        %1249 = vmatpush1.bf16.xpose.msra.mxu0 0
        %1250 = vmatprep.subr.bf16.mxu0 0
        %1251 = vmatpush1.bf16.xpose.msra.mxu0 0
        %1252 = vmatprep.subr.bf16.mxu0 0
        %1253 = vmatpush1.bf16.xpose.msra.mxu0 0
        %1254 = vmatprep.subr.bf16.mxu0 0
        %1255 = vmatpush1.bf16.xpose.msra.mxu0 0
        %1256 = vmatprep.subr.bf16.mxu0 0
        %1257 = vmatpush1.bf16.xpose.msra.mxu0 0
        %1258 = vmatprep.subr.bf16.mxu0 0
        %1259 = vmatpush1.bf16.xpose.msra.mxu0 0
        %1260 = vmatprep.subr.bf16.mxu0 0
        %1261 = vmatpush1.bf16.xpose.msra.mxu0 0
        %1262 = vmatprep.subr.bf16.mxu0 0
        %1263 = vmatpush1.bf16.xpose.msra.mxu0 0
        %1264 = vmatprep.subr.bf16.mxu0 0
        %1265 = vmatpush1.bf16.xpose.msra.mxu0 0
        %1266 = vmatprep.subr.bf16.mxu0 0
        %1267 = vmatpush1.bf16.xpose.msra.mxu0 0
        %1268 = vmatprep.mubr.bf16.mxu0 0
        %1269 = vmatmul.mubr.bf16.gmra.mrb[0].mxu0 %v1231
        %v1270 = vpop.f32.mrb[0].mxu0
        %v1271 = vadd.f32 0.0, %v1270
        %v1272 = vpop.f32.mrb[0].mxu0
        %v1273 = vpop.f32.mrb[0].mxu0
        %v1274 = vpop.f32.mrb[0].mxu0
        %1275 = vdwg.mxu0
        %1276 = vrot.lane.b32.xlu0 %v564, 104
        %v1277 = vpop.permute.xlu0 %1276
        %1278 = vrot.lane.b32.xlu0 %v564, 72
        %v1279 = vpop.permute.xlu0 %1278
        %v1281 = vsel %vm567, %v1277, 0
        %v1284 = vsel %vm567, %v1279, 0
        %1286 = vmatprep.subr.bf16.mxu0 0
        %1287 = vmatpush1.bf16.xpose.msra.mxu0 %v1284
        %1288 = vmatprep.subr.bf16.mxu0 0
        %1289 = vmatpush1.bf16.xpose.msra.mxu0 0
        %1290 = vmatprep.subr.bf16.mxu0 0
        %1291 = vmatpush1.bf16.xpose.msra.mxu0 0
        %1292 = vmatprep.subr.bf16.mxu0 0
        %1293 = vmatpush1.bf16.xpose.msra.mxu0 0
        %1294 = vmatprep.subr.bf16.mxu0 0
        %1295 = vmatpush1.bf16.xpose.msra.mxu0 0
        %1296 = vmatprep.subr.bf16.mxu0 0
        %1297 = vmatpush1.bf16.xpose.msra.mxu0 0
        %1298 = vmatprep.subr.bf16.mxu0 0
        %1299 = vmatpush1.bf16.xpose.msra.mxu0 0
        %1300 = vmatprep.subr.bf16.mxu0 0
        %1301 = vmatpush1.bf16.xpose.msra.mxu0 0
        %1302 = vmatprep.subr.bf16.mxu0 0
        %1303 = vmatpush1.bf16.xpose.msra.mxu0 0
        %1304 = vmatprep.subr.bf16.mxu0 0
        %1305 = vmatpush1.bf16.xpose.msra.mxu0 0
        %1306 = vmatprep.subr.bf16.mxu0 0
        %1307 = vmatpush1.bf16.xpose.msra.mxu0 0
        %1308 = vmatprep.subr.bf16.mxu0 0
        %1309 = vmatpush1.bf16.xpose.msra.mxu0 0
        %1310 = vmatprep.subr.bf16.mxu0 0
        %1311 = vmatpush1.bf16.xpose.msra.mxu0 0
        %1312 = vmatprep.subr.bf16.mxu0 0
        %1313 = vmatpush1.bf16.xpose.msra.mxu0 0
        %1314 = vmatprep.subr.bf16.mxu0 0
        %1315 = vmatpush1.bf16.xpose.msra.mxu0 0
        %1316 = vmatprep.subr.bf16.mxu0 0
        %1317 = vmatpush1.bf16.xpose.msra.mxu0 0
        %1318 = vmatprep.mubr.bf16.mxu0 0
        %1319 = vmatmul.mubr.bf16.gmra.mrb[0].mxu0 %v1281
        %v1320 = vpop.f32.mrb[0].mxu0
        %v1321 = vadd.f32 0.0, %v1320
        %v1322 = vpop.f32.mrb[0].mxu0
        %v1323 = vpop.f32.mrb[0].mxu0
        %v1324 = vpop.f32.mrb[0].mxu0
        %1325 = vdwg.mxu0
        %v1326 = vsel %vm567, %v1271, -inf
        %1327 = vmax.xlane.f32.xlu0 %v1326
        %v1328 = vpop.xlane.xlu0 %1327
        %v1329 = vsel %vm567, %v1321, -inf
        %1330 = vmax.xlane.f32.xlu0 %v1329
        %v1331 = vpop.xlane.xlu0 %1330
        %v1332 = vsub.f32 %v1271, %v1328
        %v1333 = vsub.f32 %v1321, %v1331
        %v1334 = vmul.f32 %v1332, 1.442695
        %v1335 = vpow.pop %v1334
        %v1336 = vmul.f32 %v1333, 1.442695
        %v1337 = vpow.pop %v1336
        %v1338 = vsel %vm567, %v1335, 0.0
        %1339 = vadd.xlane.f32.xlu0 %v1338
        %v1340 = vpop.xlane.xlu0 %1339
        %v1341 = vsel %vm567, %v1337, 0.0
        %1342 = vadd.xlane.f32.xlu0 %v1341
        %v1343 = vpop.xlane.xlu0 %1342
        %v1344 = vrcp.pop %v1340
        %v1345 = vrcp.pop %v1343
        %v1346 = vmul.f32 %v1335, %v1344
        %v1347 = vmul.f32 %v1337, %v1345
        %v1348 = vpack.c.bf16 %v1346, %v1346
        %v1349 = vpack.c.bf16 %v1347, %v1347
        %1350 = vrot.lane.b32.xlu0 %v563, 40
        %v1351 = vpop.permute.xlu0 %1350
        %v1353 = vsel %vm567, %v1348, 0
        %v1356 = vsel %vm691, %v1351, 0
        %1358 = vmatprep.subr.bf16.mxu0 0
        %1359 = vmatpush1.bf16.msra.mxu0 %v1356
        %1360 = vmatprep.subr.bf16.mxu0 0
        %1361 = vmatpush1.bf16.msra.mxu0 0
        %1362 = vmatprep.subr.bf16.mxu0 0
        %1363 = vmatpush1.bf16.msra.mxu0 0
        %1364 = vmatprep.subr.bf16.mxu0 0
        %1365 = vmatpush1.bf16.msra.mxu0 0
        %1366 = vmatprep.subr.bf16.mxu0 0
        %1367 = vmatpush1.bf16.msra.mxu0 0
        %1368 = vmatprep.subr.bf16.mxu0 0
        %1369 = vmatpush1.bf16.msra.mxu0 0
        %1370 = vmatprep.subr.bf16.mxu0 0
        %1371 = vmatpush1.bf16.msra.mxu0 0
        %1372 = vmatprep.subr.bf16.mxu0 0
        %1373 = vmatpush1.bf16.msra.mxu0 0
        %1374 = vmatprep.subr.bf16.mxu0 0
        %1375 = vmatpush1.bf16.msra.mxu0 0
        %1376 = vmatprep.subr.bf16.mxu0 0
        %1377 = vmatpush1.bf16.msra.mxu0 0
        %1378 = vmatprep.subr.bf16.mxu0 0
        %1379 = vmatpush1.bf16.msra.mxu0 0
        %1380 = vmatprep.subr.bf16.mxu0 0
        %1381 = vmatpush1.bf16.msra.mxu0 0
        %1382 = vmatprep.subr.bf16.mxu0 0
        %1383 = vmatpush1.bf16.msra.mxu0 0
        %1384 = vmatprep.subr.bf16.mxu0 0
        %1385 = vmatpush1.bf16.msra.mxu0 0
        %1386 = vmatprep.subr.bf16.mxu0 0
        %1387 = vmatpush1.bf16.msra.mxu0 0
        %1388 = vmatprep.subr.bf16.mxu0 0
        %1389 = vmatpush1.bf16.msra.mxu0 0
        %1390 = vmatprep.mubr.bf16.mxu0 0
        %1391 = vmatmul.mubr.bf16.gmra.mrb[0].mxu0 %v1353
        %v1392 = vpop.f32.mrb[0].mxu0
        %v1393 = vadd.f32 0.0, %v1392
        %v1394 = vpop.f32.mrb[0].mxu0
        %v1395 = vpop.f32.mrb[0].mxu0
        %v1396 = vpop.f32.mrb[0].mxu0
        %1397 = vdwg.mxu0
        %1398 = vrot.lane.b32.xlu0 %v564, 40
        %v1399 = vpop.permute.xlu0 %1398
        %v1401 = vsel %vm567, %v1349, 0
        %v1404 = vsel %vm691, %v1399, 0
        %1406 = vmatprep.subr.bf16.mxu0 0
        %1407 = vmatpush1.bf16.msra.mxu0 %v1404
        %1408 = vmatprep.subr.bf16.mxu0 0
        %1409 = vmatpush1.bf16.msra.mxu0 0
        %1410 = vmatprep.subr.bf16.mxu0 0
        %1411 = vmatpush1.bf16.msra.mxu0 0
        %1412 = vmatprep.subr.bf16.mxu0 0
        %1413 = vmatpush1.bf16.msra.mxu0 0
        %1414 = vmatprep.subr.bf16.mxu0 0
        %1415 = vmatpush1.bf16.msra.mxu0 0
        %1416 = vmatprep.subr.bf16.mxu0 0
        %1417 = vmatpush1.bf16.msra.mxu0 0
        %1418 = vmatprep.subr.bf16.mxu0 0
        %1419 = vmatpush1.bf16.msra.mxu0 0
        %1420 = vmatprep.subr.bf16.mxu0 0
        %1421 = vmatpush1.bf16.msra.mxu0 0
        %1422 = vmatprep.subr.bf16.mxu0 0
        %1423 = vmatpush1.bf16.msra.mxu0 0
        %1424 = vmatprep.subr.bf16.mxu0 0
        %1425 = vmatpush1.bf16.msra.mxu0 0
        %1426 = vmatprep.subr.bf16.mxu0 0
        %1427 = vmatpush1.bf16.msra.mxu0 0
        %1428 = vmatprep.subr.bf16.mxu0 0
        %1429 = vmatpush1.bf16.msra.mxu0 0
        %1430 = vmatprep.subr.bf16.mxu0 0
        %1431 = vmatpush1.bf16.msra.mxu0 0
        %1432 = vmatprep.subr.bf16.mxu0 0
        %1433 = vmatpush1.bf16.msra.mxu0 0
        %1434 = vmatprep.subr.bf16.mxu0 0
        %1435 = vmatpush1.bf16.msra.mxu0 0
        %1436 = vmatprep.subr.bf16.mxu0 0
        %1437 = vmatpush1.bf16.msra.mxu0 0
        %1438 = vmatprep.mubr.bf16.mxu0 0
        %1439 = vmatmul.mubr.bf16.gmra.mrb[0].mxu0 %v1401
        %v1440 = vpop.f32.mrb[0].mxu0
        %v1441 = vadd.f32 0.0, %v1440
        %v1442 = vpop.f32.mrb[0].mxu0
        %v1443 = vpop.f32.mrb[0].mxu0
        %v1444 = vpop.f32.mrb[0].mxu0
        %1445 = vdwg.mxu0
        %v1446 = vpack.c.bf16 %v1441, %v1393
        %1448 = vrot.lane.b32.xlu0 %v1004, 8
        %v1449 = vpop.permute.xlu0 %1448
        %1451 = vrot.lane.b32.xlu0 %v1225, 16
        %v1452 = vpop.permute.xlu0 %1451
        %1454 = vrot.lane.b32.xlu0 %v1446, 24
        %v1455 = vpop.permute.xlu0 %1454
        %v1458 = vsel %vm567, %v783, %v1449
        %vm1459 = vcmask 130048
        %v1461 = vsel %vm1459, %v1458, %v1452
        %vm1462 = vcmask 195584
        %v1464 = vsel %vm1462, %v1461, %v1455
        %v1465 = vld [vmem:[%s5] sm:$0xf]
        %v1466 = vld [vmem:[%s5 + $0x4] sm:$0xf]
        %v1467 = vld [vmem:[%s5 + $0x8] sm:$0xf]
        %v1468 = vld [vmem:[%s5 + $0xc] sm:$0xf]
        %v1469 = vld [vmem:[%s6] sm:$0x1]
        %v1471 = vlaneseq
        %v1472 = vshrl.u32 %v1471, 7
        %v1473 = vsub.s32 0, %v1472
        %v1474 = vrot.slane %v1469, %v1473
        %v1480 = vunpack.c.l.b16 %v1465
        %v1481 = vunpack.c.l.b16 %v1466
        %v1482 = vunpack.c.l.b16 %v1467
        %v1483 = vunpack.c.l.b16 %v1468
        %v1484 = vpack.c.b16 %v1481, %v1480
        %v1485 = vpack.c.b16 %v1483, %v1482
        %v1488 = vsel %vm447, %v1464, 0
        %1490 = vmatprep.subr.bf16.mxu0 0
        %1491 = vmatpush1.bf16.msra.mxu0 %v1484
        %1492 = vmatprep.subr.bf16.mxu0 0
        %1493 = vmatpush1.bf16.msra.mxu0 %v1485
        %1494 = vmatprep.subr.bf16.mxu0 0
        %1495 = vmatpush1.bf16.msra.mxu0 0
        %1496 = vmatprep.subr.bf16.mxu0 0
        %1497 = vmatpush1.bf16.msra.mxu0 0
        %1498 = vmatprep.subr.bf16.mxu0 0
        %1499 = vmatpush1.bf16.msra.mxu0 0
        %1500 = vmatprep.subr.bf16.mxu0 0
        %1501 = vmatpush1.bf16.msra.mxu0 0
        %1502 = vmatprep.subr.bf16.mxu0 0
        %1503 = vmatpush1.bf16.msra.mxu0 0
        %1504 = vmatprep.subr.bf16.mxu0 0
        %1505 = vmatpush1.bf16.msra.mxu0 0
        %1506 = vmatprep.subr.bf16.mxu0 0
        %1507 = vmatpush1.bf16.msra.mxu0 0
        %1508 = vmatprep.subr.bf16.mxu0 0
        %1509 = vmatpush1.bf16.msra.mxu0 0
        %1510 = vmatprep.subr.bf16.mxu0 0
        %1511 = vmatpush1.bf16.msra.mxu0 0
        %1512 = vmatprep.subr.bf16.mxu0 0
        %1513 = vmatpush1.bf16.msra.mxu0 0
        %1514 = vmatprep.subr.bf16.mxu0 0
        %1515 = vmatpush1.bf16.msra.mxu0 0
        %1516 = vmatprep.subr.bf16.mxu0 0
        %1517 = vmatpush1.bf16.msra.mxu0 0
        %1518 = vmatprep.subr.bf16.mxu0 0
        %1519 = vmatpush1.bf16.msra.mxu0 0
        %1520 = vmatprep.subr.bf16.mxu0 0
        %1521 = vmatpush1.bf16.msra.mxu0 0
        %1522 = vmatprep.mubr.bf16.mxu0 0
        %1523 = vmatmul.mubr.bf16.gmra.mrb[0].mxu0 %v1488
        %v1524 = vpop.f32.mrb[0].mxu0
        %v1525 = vadd.f32 %v1474, %v1524
        %v1526 = vpop.f32.mrb[0].mxu0
        %v1527 = vpop.f32.mrb[0].mxu0
        %v1528 = vadd.f32 %v1474, %v1527
        %v1529 = vpop.f32.mrb[0].mxu0
        %1530 = vdwg.mxu0
        %v1531 = vadd.f32 %v443, %v1525
        %v1532 = vadd.f32 %v444, %v1528
        %v1533 = vld [vmem:[%s7] sm:$0x1]
        %v1534 = vld [vmem:[%s8] sm:$0x1]
        %v1535 = vsel %vm447, %v1531, 0.0
        %1536 = vadd.xlane.f32.xlu0 %v1535
        %v1537 = vpop.xlane.xlu0 %1536
        %v1538 = vsel %vm447, %v1532, 0.0
        %1539 = vadd.xlane.f32.xlu0 %v1538
        %v1540 = vpop.xlane.xlu0 %1539
        %v1541 = vmul.f32 %v1537, %v454
        %v1542 = vmul.f32 %v1540, %v454
        %v1543 = vsub.f32 %v1531, %v1541
        %v1544 = vsub.f32 %v1532, %v1542
        %v1545 = vmul.f32 %v1543, %v1543
        %v1546 = vmul.f32 %v1544, %v1544
        %v1547 = vsel %vm447, %v1545, 0.0
        %1548 = vadd.xlane.f32.xlu0 %v1547
        %v1549 = vpop.xlane.xlu0 %1548
        %v1550 = vsel %vm447, %v1546, 0.0
        %1551 = vadd.xlane.f32.xlu0 %v1550
        %v1552 = vpop.xlane.xlu0 %1551
        %v1553 = vmul.f32 %v1549, %v454
        %v1554 = vmul.f32 %v1552, %v454
        %v1555 = vadd.f32 %v1553, 1e-05
        %v1556 = vadd.f32 %v1554, 1e-05
        %v1557 = vrsqrt.pop %v1555
        %v1558 = vrsqrt.pop %v1556
        %v1559 = vmul.f32 %v1543, %v1557
        %v1560 = vmul.f32 %v1544, %v1558
        %v1562 = vlaneseq
        %v1563 = vshrl.u32 %v1562, 7
        %v1564 = vsub.s32 0, %v1563
        %v1565 = vrot.slane %v1533, %v1564
        %v1567 = vmul.f32 %v1559, %v1565
        %v1568 = vmul.f32 %v1560, %v1565
        %v1570 = vlaneseq
        %v1571 = vshrl.u32 %v1570, 7
        %v1572 = vsub.s32 0, %v1571
        %v1573 = vrot.slane %v1534, %v1572
        %v1575 = vadd.f32 %v1567, %v1573
        %v1576 = vadd.f32 %v1568, %v1573
        %v1577 = vpack.c.bf16 %v1576, %v1575
        %v1578 = vld [vmem:[%s9] sm:$0xf]
        %v1579 = vld [vmem:[%s9 + $0x4] sm:$0xf]
        %v1580 = vld [vmem:[%s9 + $0x8] sm:$0xf]
        %v1581 = vld [vmem:[%s9 + $0xc] sm:$0xf]
        %v1582 = vld [vmem:[%s10] sm:$0x1]
        %v1584 = vlaneseq
        %v1585 = vshrl.u32 %v1584, 7
        %v1586 = vsub.s32 0, %v1585
        %v1587 = vrot.slane %v1582, %v1586
        %v1593 = vunpack.c.l.b16 %v1578
        %v1594 = vunpack.c.l.b16 %v1579
        %v1595 = vunpack.c.l.b16 %v1580
        %v1596 = vunpack.c.l.b16 %v1581
        %v1597 = vpack.c.b16 %v1594, %v1593
        %v1598 = vpack.c.b16 %v1596, %v1595
        %v1602 = vsel %vm447, %v1577, 0
        %1604 = vmatprep.subr.bf16.mxu0 0
        %1605 = vmatpush1.bf16.msra.mxu0 %v1597
        %1606 = vmatprep.subr.bf16.mxu0 0
        %1607 = vmatpush1.bf16.msra.mxu0 %v1598
        %1608 = vmatprep.subr.bf16.mxu0 0
        %1609 = vmatpush1.bf16.msra.mxu0 0
        %1610 = vmatprep.subr.bf16.mxu0 0
        %1611 = vmatpush1.bf16.msra.mxu0 0
        %1612 = vmatprep.subr.bf16.mxu0 0
        %1613 = vmatpush1.bf16.msra.mxu0 0
        %1614 = vmatprep.subr.bf16.mxu0 0
        %1615 = vmatpush1.bf16.msra.mxu0 0
        %1616 = vmatprep.subr.bf16.mxu0 0
        %1617 = vmatpush1.bf16.msra.mxu0 0
        %1618 = vmatprep.subr.bf16.mxu0 0
        %1619 = vmatpush1.bf16.msra.mxu0 0
        %1620 = vmatprep.subr.bf16.mxu0 0
        %1621 = vmatpush1.bf16.msra.mxu0 0
        %1622 = vmatprep.subr.bf16.mxu0 0
        %1623 = vmatpush1.bf16.msra.mxu0 0
        %1624 = vmatprep.subr.bf16.mxu0 0
        %1625 = vmatpush1.bf16.msra.mxu0 0
        %1626 = vmatprep.subr.bf16.mxu0 0
        %1627 = vmatpush1.bf16.msra.mxu0 0
        %1628 = vmatprep.subr.bf16.mxu0 0
        %1629 = vmatpush1.bf16.msra.mxu0 0
        %1630 = vmatprep.subr.bf16.mxu0 0
        %1631 = vmatpush1.bf16.msra.mxu0 0
        %1632 = vmatprep.subr.bf16.mxu0 0
        %1633 = vmatpush1.bf16.msra.mxu0 0
        %1634 = vmatprep.subr.bf16.mxu0 0
        %1635 = vmatpush1.bf16.msra.mxu0 0
        %1636 = vmatprep.mubr.bf16.mxu0 0
        %1637 = vmatmul.mubr.bf16.gmra.mrb[0].mxu0 %v1602
        %v1638 = vpop.f32.mrb[0].mxu0
        %v1639 = vadd.f32 %v1587, %v1638
        %v1640 = vpop.f32.mrb[0].mxu0
        %v1641 = vpop.f32.mrb[0].mxu0
        %v1642 = vadd.f32 %v1587, %v1641
        %v1643 = vpop.f32.mrb[0].mxu0
        %1644 = vdwg.mxu0
        %v1645 = vmul.f32 %v1639, 0.5
        %v1646 = vmul.f32 %v1642, 0.5
        %v1647 = vmul.f32 %v1639, %v1639
        %v1648 = vmul.f32 %v1642, %v1642
        %v1649 = vmul.f32 %v1647, %v1639
        %v1650 = vmul.f32 %v1648, %v1642
        %v1651 = vmul.f32 %v1649, 0.044715
        %v1652 = vmul.f32 %v1650, 0.044715
        %v1653 = vadd.f32 %v1639, %v1651
        %v1654 = vadd.f32 %v1642, %v1652
        %v1655 = vmul.f32 %v1653, 0.7978846
        %v1656 = vmul.f32 %v1654, 0.7978846
        %v1657 = vtanh.pop %v1655
        %v1658 = vtanh.pop %v1656
        %v1659 = vadd.f32 %v1657, 1.0
        %v1660 = vadd.f32 %v1658, 1.0
        %v1661 = vmul.f32 %v1645, %v1659
        %v1662 = vmul.f32 %v1646, %v1660
        %v1663 = vpack.c.bf16 %v1662, %v1661
        %v1664 = vld [vmem:[%s11] sm:$0xf]
        %v1665 = vld [vmem:[%s11 + $0x4] sm:$0xf]
        %v1666 = vld [vmem:[%s11 + $0x8] sm:$0xf]
        %v1667 = vld [vmem:[%s11 + $0xc] sm:$0xf]
        %v1668 = vld [vmem:[%s11 + $0x10] sm:$0xf]
        %v1669 = vld [vmem:[%s11 + $0x14] sm:$0xf]
        %v1670 = vld [vmem:[%s11 + $0x18] sm:$0xf]
        %v1671 = vld [vmem:[%s11 + $0x1c] sm:$0xf]
        %v1672 = vld [vmem:[%s11 + $0x20] sm:$0xf]
        %v1673 = vld [vmem:[%s11 + $0x24] sm:$0xf]
        %v1674 = vld [vmem:[%s11 + $0x28] sm:$0xf]
        %v1675 = vld [vmem:[%s11 + $0x2c] sm:$0xf]
        %v1676 = vld [vmem:[%s11 + $0x30] sm:$0xf]
        %v1677 = vld [vmem:[%s11 + $0x34] sm:$0xf]
        %v1678 = vld [vmem:[%s11 + $0x38] sm:$0xf]
        %v1679 = vld [vmem:[%s11 + $0x3c] sm:$0xf]
        %v1680 = vld [vmem:[%s12] sm:$0x1]
        %v1682 = vlaneseq
        %v1683 = vshrl.u32 %v1682, 7
        %v1684 = vsub.s32 0, %v1683
        %v1685 = vrot.slane %v1680, %v1684
        %v1703 = vunpack.c.l.b16 %v1664
        %v1704 = vunpack.c.l.b16 %v1665
        %v1705 = vunpack.c.l.b16 %v1666
        %v1706 = vunpack.c.l.b16 %v1667
        %v1707 = vunpack.c.l.b16 %v1668
        %v1708 = vunpack.c.l.b16 %v1669
        %v1709 = vunpack.c.l.b16 %v1670
        %v1710 = vunpack.c.l.b16 %v1671
        %v1711 = vunpack.c.l.b16 %v1672
        %v1712 = vunpack.c.l.b16 %v1673
        %v1713 = vunpack.c.l.b16 %v1674
        %v1714 = vunpack.c.l.b16 %v1675
        %v1715 = vunpack.c.l.b16 %v1676
        %v1716 = vunpack.c.l.b16 %v1677
        %v1717 = vunpack.c.l.b16 %v1678
        %v1718 = vunpack.c.l.b16 %v1679
        %v1719 = vpack.c.b16 %v1704, %v1703
        %v1720 = vpack.c.b16 %v1706, %v1705
        %v1721 = vpack.c.b16 %v1708, %v1707
        %v1722 = vpack.c.b16 %v1710, %v1709
        %v1723 = vpack.c.b16 %v1712, %v1711
        %v1724 = vpack.c.b16 %v1714, %v1713
        %v1725 = vpack.c.b16 %v1716, %v1715
        %v1726 = vpack.c.b16 %v1718, %v1717
        %1735 = vmatprep.subr.bf16.mxu0 0
        %1736 = vmatpush1.bf16.msra.mxu0 %v1719
        %1737 = vmatprep.subr.bf16.mxu0 0
        %1738 = vmatpush1.bf16.msra.mxu0 %v1720
        %1739 = vmatprep.subr.bf16.mxu0 0
        %1740 = vmatpush1.bf16.msra.mxu0 %v1721
        %1741 = vmatprep.subr.bf16.mxu0 0
        %1742 = vmatpush1.bf16.msra.mxu0 %v1722
        %1743 = vmatprep.subr.bf16.mxu0 0
        %1744 = vmatpush1.bf16.msra.mxu0 %v1723
        %1745 = vmatprep.subr.bf16.mxu0 0
        %1746 = vmatpush1.bf16.msra.mxu0 %v1724
        %1747 = vmatprep.subr.bf16.mxu0 0
        %1748 = vmatpush1.bf16.msra.mxu0 %v1725
        %1749 = vmatprep.subr.bf16.mxu0 0
        %1750 = vmatpush1.bf16.msra.mxu0 %v1726
        %1751 = vmatprep.subr.bf16.mxu0 0
        %1752 = vmatpush1.bf16.msra.mxu0 0
        %1753 = vmatprep.subr.bf16.mxu0 0
        %1754 = vmatpush1.bf16.msra.mxu0 0
        %1755 = vmatprep.subr.bf16.mxu0 0
        %1756 = vmatpush1.bf16.msra.mxu0 0
        %1757 = vmatprep.subr.bf16.mxu0 0
        %1758 = vmatpush1.bf16.msra.mxu0 0
        %1759 = vmatprep.subr.bf16.mxu0 0
        %1760 = vmatpush1.bf16.msra.mxu0 0
        %1761 = vmatprep.subr.bf16.mxu0 0
        %1762 = vmatpush1.bf16.msra.mxu0 0
        %1763 = vmatprep.subr.bf16.mxu0 0
        %1764 = vmatpush1.bf16.msra.mxu0 0
        %1765 = vmatprep.subr.bf16.mxu0 0
        %1766 = vmatpush1.bf16.msra.mxu0 0
        %1767 = vmatprep.mubr.bf16.mxu0 0
        %1768 = vmatmul.mubr.bf16.gmra.mrb[0].mxu0 %v1663
        %v1769 = vpop.f32.mrb[0].mxu0
        %v1770 = vadd.f32 %v1685, %v1769
        %v1771 = vpop.f32.mrb[0].mxu0
        %v1772 = vpop.f32.mrb[0].mxu0
        %v1773 = vadd.f32 %v1685, %v1772
        %v1774 = vpop.f32.mrb[0].mxu0
        %1775 = vdwg.mxu0
        %v1776 = vadd.f32 %v1531, %v1770
        %v1777 = vadd.f32 %v1532, %v1773
        %1778 = vst.msk [vmem:[%s434] sm:$0xff] %vm447, %v1776
        %1779 = vst.msk [vmem:[%s434 + $0x8] sm:$0xff] %vm447, %v1777
        %s1780 = sand.u32 %s313, 1
        %s1781 = scalar_lea.sflag [#allocation3], %s1780
        %s1782 = sand.u32 %s313, 1
        %s1783 = smul.addr %s1782, 16
        %s1784 = scalar_lea.vmem [#allocation2], %s1783
        // Predicated region
        $region73: #{tpu_custom_call.1} parent=71 // pred_check
          %p1785 = pneg %p323
        $region74: #{tpu_custom_call.1} parent=71 // pred_check_branch
          %1787 = sbr.rel (%p1785) target = $region76
        $region75: #{tpu_custom_call.1} parent=71 // pred_region
          %s1788 = smul.u32 2, %s27
          %s1790 = ssub.s32 256, 256
          %1791 = vsyncadd %s1781, %s1790
          %s1792 = smul.addr %s1788, 128
          %s1793 = scalar_lea.hbm %s13, %s1792
          %s1794 = sshll.u32 %s1784, 4
          %s1795 = int_to_ptr.vmem [resolvable:$true] %s1794
          %1800 = dma.vmem_to_hbm [thread:$0]  %s1795, 256, %s1793, %s1781, 128, 128, 8
        $region76: #{tpu_custom_call.1} parent=71 // pred_fallthru
          _
      $region72: #{tpu_custom_call.1} parent=5 // pred_fallthru
        _
      %p1801 = scmp.le.s32.totalorder 2, %s22
      // Predicated region
      $region77: #{tpu_custom_call.1} parent=5 // pred_check
        %p1802 = pneg %p1801
      $region78: #{tpu_custom_call.1} parent=5 // pred_check_branch
        %1804 = sbr.rel (%p1802) target = $region80
      $region79: #{tpu_custom_call.1} parent=5 // pred_region
        %s1805 = ssub.s32 %s22, 2
        // Predicated region
        $region81: #{tpu_custom_call.1} parent=79 // pred_check
          %p1806 = pneg %p329
        $region82: #{tpu_custom_call.1} parent=79 // pred_check_branch
          %1808 = sbr.rel (%p1806) target = $region84
        $region83: #{tpu_custom_call.1} parent=79 // pred_region
          %s1809 = sand.u32 %s314, 1
          %s1810 = scalar_lea.sflag [#allocation3], %s1809
          %s1811 = sand.u32 %s314, 1
          %s1812 = smul.addr %s1811, 16
          %s1813 = scalar_lea.vmem [#allocation2], %s1812
          %1814 = dma.done %s1810, 256
        $region84: #{tpu_custom_call.1} parent=79 // pred_fallthru
          _
      $region80: #{tpu_custom_call.1} parent=5 // pred_fallthru
        _
    $region6: #{tpu_custom_call.1} parent=1 // loop_footer
      %s26 = sadd.s32 1, %s22
    $region7: #{tpu_custom_call.1} parent=1 // loop_footer_branch
      %21 = sbr.rel target = $region3
    $region8: #{tpu_custom_call.1} parent=1 // loop_exit
      _
    %1815 = vsyncpa [#allocation3], 1
    %s1816 = scalar_lea.sflag [#allocation3], 1
    %1817 = vsyncpa %s1816, 1

// kernel: tpu_custom_call.1
$region0: #{tpu_custom_call.1}
  #allocation0 [shape = 'u32[]', space=smem, size = 0x4, offset = 0x4, fixed_abs, tag = 'smem constant byte address 0x4 - core index']
  #allocation1 [shape = 'u32[144,128]{1,0:T(1,128)}', space=vmem, size = 0x12000, scoped, tag = 'internal scratch']
  %s0 = inlined_call_operand.vmem [shape: f32[4,8,32], index: 0, kind: input, shape index: {}]
  %s1 = inlined_call_operand.vmem [shape: f32[1,32], index: 1, kind: input, shape index: {}]
  %s2 = inlined_call_operand.vmem [shape: f32[1,32], index: 2, kind: input, shape index: {}]
  %s3 = inlined_call_operand.vmem [shape: bf16[32,96], index: 3, kind: input, shape index: {}]
  %s4 = inlined_call_operand.vmem [shape: f32[1,96], index: 4, kind: input, shape index: {}]
  %s5 = inlined_call_operand.vmem [shape: bf16[32,32], index: 5, kind: input, shape index: {}]
  %s6 = inlined_call_operand.vmem [shape: f32[1,32], index: 6, kind: input, shape index: {}]
  %s7 = inlined_call_operand.vmem [shape: f32[1,32], index: 7, kind: input, shape index: {}]
  %s8 = inlined_call_operand.vmem [shape: f32[1,32], index: 8, kind: input, shape index: {}]
  %s9 = inlined_call_operand.vmem [shape: bf16[32,128], index: 9, kind: input, shape index: {}]
  %s10 = inlined_call_operand.vmem [shape: f32[1,128], index: 10, kind: input, shape index: {}]
  %s11 = inlined_call_operand.vmem [shape: bf16[128,32], index: 11, kind: input, shape index: {}]
  %s12 = inlined_call_operand.vmem [shape: f32[1,32], index: 12, kind: input, shape index: {}]
  %s13 = inlined_call_operand.hbm [shape: f32[4,8,32], index: 13, kind: output, shape index: {}]
  %s14 = sld [smem:[#allocation0]]
  $region85: #{tpu_custom_call.1} parent=0
    _
  %s16 = ssub.s32 1, %s14
  %s17 = scalar_select 0, %s16, %s14
  $region1: #{tpu_custom_call.1} parent=0
    #allocation2 [shape = 'u8[16384]{0}', space=vmem, size = 0x4000, scoped, tag = 'output window, operand 0']
    #allocation3 [shape = 's32[2]{0}', space=sflag, size = 0x8, scoped, tag = 'scoped memory for tpu_custom_call.1']
    %18 = vsyncpa [#allocation3], 0
    %s19 = scalar_lea.sflag [#allocation3], 1
    %20 = vsyncpa %s19, 0
    loop: start=0, step=1, limit=4
    $region2: #{tpu_custom_call.1} parent=1 // loop_pre_header
      _
    $region3: #{tpu_custom_call.1} parent=1 // loop_header
      %s22 = sphi 0, %s26
      %p23 = scmp.ge.s32.totalorder %s22, 4
      %s32 = sphi 0, %s34
      %s35 = sphi 0, %s32
      %s36 = sphi 0, %s35
      %s52 = sphi 0, %s36
      %s56 = sphi 0, %s56
      %s58 = sphi 0, %s56
      %s59 = sphi 0, %s58
      %s73 = sphi 0, %s59
      %s77 = sphi 0, %s77
      %s79 = sphi 0, %s77
      %s80 = sphi 0, %s79
      %s94 = sphi 0, %s80
      %s98 = sphi 0, %s98
      %s100 = sphi 0, %s98
      %s101 = sphi 0, %s100
      %s115 = sphi 0, %s101
      %s119 = sphi 0, %s119
      %s121 = sphi 0, %s119
      %s122 = sphi 0, %s121
      %s136 = sphi 0, %s122
      %s140 = sphi 0, %s140
      %s142 = sphi 0, %s140
      %s143 = sphi 0, %s142
      %s157 = sphi 0, %s143
      %s161 = sphi 0, %s161
      %s163 = sphi 0, %s161
      %s164 = sphi 0, %s163
      %s178 = sphi 0, %s164
      %s182 = sphi 0, %s182
      %s184 = sphi 0, %s182
      %s185 = sphi 0, %s184
      %s199 = sphi 0, %s185
      %s203 = sphi 0, %s203
      %s205 = sphi 0, %s203
      %s206 = sphi 0, %s205
      %s220 = sphi 0, %s206
      %s224 = sphi 0, %s224
      %s226 = sphi 0, %s224
      %s227 = sphi 0, %s226
      %s241 = sphi 0, %s227
      %s245 = sphi 0, %s245
      %s247 = sphi 0, %s245
      %s248 = sphi 0, %s247
      %s262 = sphi 0, %s248
      %s266 = sphi 0, %s266
      %s268 = sphi 0, %s266
      %s269 = sphi 0, %s268
      %s283 = sphi 0, %s269
      %s287 = sphi 0, %s287
      %s289 = sphi 0, %s287
      %s290 = sphi 0, %s289
      %s304 = sphi 0, %s290
      %s310 = sphi 0, %s312
      %s313 = sphi 0, %s310
      %s314 = sphi 0, %s313
      %s330 = sphi 0, %s314
    $region4: #{tpu_custom_call.1} parent=1 // loop_header_branch
      %25 = sbr.rel (%p23) target = $region8
    $region5: #{tpu_custom_call.1} parent=1 // loop_body
      %s27 = ssub.s32 %s22, 1
      %s28 = ssub.s32 %s22, 2
      %s29 = sadd.s32 %s22, 1
      %s30 = ssub.s32 %s22, %s29
      %p31 = scmp.eq.s32.totalorder %s30, 0
      %s33 = sadd.s32 %s32, 1
      %s34 = scalar_select %p31, %s32, %s33
      %p37 = pneg %p31
      %p38 = scmp.eq.s32.totalorder %s22, 1
      %p39 = por %p37, %p38
      %p40 = scmp.ne.s32.totalorder %s32, %s35
      %p41 = scmp.eq.s32.totalorder %s22, 0
      %p42 = por %p40, %p41
      %p43 = scmp.ne.s32.totalorder %s32, %s35
      %p44 = scmp.eq.s32.totalorder %s27, 1
      %p45 = por %p43, %p44
      %p46 = scmp.ne.s32.totalorder %s35, %s36
      %p47 = scmp.eq.s32.totalorder %s27, 0
      %p48 = por %p46, %p47
      %p49 = scmp.ne.s32.totalorder %s35, %s36
      %p50 = scmp.eq.s32.totalorder %s28, 1
      %p51 = por %p49, %p50
      %p53 = scmp.ne.s32.totalorder %s36, %s52
      %p54 = scmp.eq.s32.totalorder %s28, 0
      %p55 = por %p53, %p54
      %s57 = sadd.s32 %s56, 1
      %p60 = scmp.eq.s32.totalorder %s22, 1
      %p61 = scmp.ne.s32.totalorder %s56, %s58
      %p62 = scmp.eq.s32.totalorder %s22, 0
      %p63 = por %p61, %p62
      %p64 = scmp.ne.s32.totalorder %s56, %s58
      %p65 = scmp.eq.s32.totalorder %s27, 1
      %p66 = por %p64, %p65
      %p67 = scmp.ne.s32.totalorder %s58, %s59
      %p68 = scmp.eq.s32.totalorder %s27, 0
      %p69 = por %p67, %p68
      %p70 = scmp.ne.s32.totalorder %s58, %s59
      %p71 = scmp.eq.s32.totalorder %s28, 1
      %p72 = por %p70, %p71
      %p74 = scmp.ne.s32.totalorder %s59, %s73
      %p75 = scmp.eq.s32.totalorder %s28, 0
      %p76 = por %p74, %p75
      %s78 = sadd.s32 %s77, 1
      %p81 = scmp.eq.s32.totalorder %s22, 1
      %p82 = scmp.ne.s32.totalorder %s77, %s79
      %p83 = scmp.eq.s32.totalorder %s22, 0
      %p84 = por %p82, %p83
      %p85 = scmp.ne.s32.totalorder %s77, %s79
      %p86 = scmp.eq.s32.totalorder %s27, 1
      %p87 = por %p85, %p86
      %p88 = scmp.ne.s32.totalorder %s79, %s80
      %p89 = scmp.eq.s32.totalorder %s27, 0
      %p90 = por %p88, %p89
      %p91 = scmp.ne.s32.totalorder %s79, %s80
      %p92 = scmp.eq.s32.totalorder %s28, 1
      %p93 = por %p91, %p92
      %p95 = scmp.ne.s32.totalorder %s80, %s94
      %p96 = scmp.eq.s32.totalorder %s28, 0
      %p97 = por %p95, %p96
      %s99 = sadd.s32 %s98, 1
      %p102 = scmp.eq.s32.totalorder %s22, 1
      %p103 = scmp.ne.s32.totalorder %s98, %s100
      %p104 = scmp.eq.s32.totalorder %s22, 0
      %p105 = por %p103, %p104
      %p106 = scmp.ne.s32.totalorder %s98, %s100
      %p107 = scmp.eq.s32.totalorder %s27, 1
      %p108 = por %p106, %p107
      %p109 = scmp.ne.s32.totalorder %s100, %s101
      %p110 = scmp.eq.s32.totalorder %s27, 0
      %p111 = por %p109, %p110
      %p112 = scmp.ne.s32.totalorder %s100, %s101
      %p113 = scmp.eq.s32.totalorder %s28, 1
      %p114 = por %p112, %p113
      %p116 = scmp.ne.s32.totalorder %s101, %s115
      %p117 = scmp.eq.s32.totalorder %s28, 0
      %p118 = por %p116, %p117
      %s120 = sadd.s32 %s119, 1
      %p123 = scmp.eq.s32.totalorder %s22, 1
      %p124 = scmp.ne.s32.totalorder %s119, %s121
      %p125 = scmp.eq.s32.totalorder %s22, 0
      %p126 = por %p124, %p125
      %p127 = scmp.ne.s32.totalorder %s119, %s121
      %p128 = scmp.eq.s32.totalorder %s27, 1
      %p129 = por %p127, %p128
      %p130 = scmp.ne.s32.totalorder %s121, %s122
      %p131 = scmp.eq.s32.totalorder %s27, 0
      %p132 = por %p130, %p131
      %p133 = scmp.ne.s32.totalorder %s121, %s122
      %p134 = scmp.eq.s32.totalorder %s28, 1
      %p135 = por %p133, %p134
      %p137 = scmp.ne.s32.totalorder %s122, %s136
      %p138 = scmp.eq.s32.totalorder %s28, 0
      %p139 = por %p137, %p138
      %s141 = sadd.s32 %s140, 1
      %p144 = scmp.eq.s32.totalorder %s22, 1
      %p145 = scmp.ne.s32.totalorder %s140, %s142
      %p146 = scmp.eq.s32.totalorder %s22, 0
      %p147 = por %p145, %p146
      %p148 = scmp.ne.s32.totalorder %s140, %s142
      %p149 = scmp.eq.s32.totalorder %s27, 1
      %p150 = por %p148, %p149
      %p151 = scmp.ne.s32.totalorder %s142, %s143
      %p152 = scmp.eq.s32.totalorder %s27, 0
      %p153 = por %p151, %p152
      %p154 = scmp.ne.s32.totalorder %s142, %s143
      %p155 = scmp.eq.s32.totalorder %s28, 1
      %p156 = por %p154, %p155
      %p158 = scmp.ne.s32.totalorder %s143, %s157
      %p159 = scmp.eq.s32.totalorder %s28, 0
      %p160 = por %p158, %p159
      %s162 = sadd.s32 %s161, 1
      %p165 = scmp.eq.s32.totalorder %s22, 1
      %p166 = scmp.ne.s32.totalorder %s161, %s163
      %p167 = scmp.eq.s32.totalorder %s22, 0
      %p168 = por %p166, %p167
      %p169 = scmp.ne.s32.totalorder %s161, %s163
      %p170 = scmp.eq.s32.totalorder %s27, 1
      %p171 = por %p169, %p170
      %p172 = scmp.ne.s32.totalorder %s163, %s164
      %p173 = scmp.eq.s32.totalorder %s27, 0
      %p174 = por %p172, %p173
      %p175 = scmp.ne.s32.totalorder %s163, %s164
      %p176 = scmp.eq.s32.totalorder %s28, 1
      %p177 = por %p175, %p176
      %p179 = scmp.ne.s32.totalorder %s164, %s178
      %p180 = scmp.eq.s32.totalorder %s28, 0
      %p181 = por %p179, %p180
      %s183 = sadd.s32 %s182, 1
      %p186 = scmp.eq.s32.totalorder %s22, 1
      %p187 = scmp.ne.s32.totalorder %s182, %s184
      %p188 = scmp.eq.s32.totalorder %s22, 0
      %p189 = por %p187, %p188
      %p190 = scmp.ne.s32.totalorder %s182, %s184
      %p191 = scmp.eq.s32.totalorder %s27, 1
      %p192 = por %p190, %p191
      %p193 = scmp.ne.s32.totalorder %s184, %s185
      %p194 = scmp.eq.s32.totalorder %s27, 0
      %p195 = por %p193, %p194
      %p196 = scmp.ne.s32.totalorder %s184, %s185
      %p197 = scmp.eq.s32.totalorder %s28, 1
      %p198 = por %p196, %p197
      %p200 = scmp.ne.s32.totalorder %s185, %s199
      %p201 = scmp.eq.s32.totalorder %s28, 0
      %p202 = por %p200, %p201
      %s204 = sadd.s32 %s203, 1
      %p207 = scmp.eq.s32.totalorder %s22, 1
      %p208 = scmp.ne.s32.totalorder %s203, %s205
      %p209 = scmp.eq.s32.totalorder %s22, 0
      %p210 = por %p208, %p209
      %p211 = scmp.ne.s32.totalorder %s203, %s205
      %p212 = scmp.eq.s32.totalorder %s27, 1
      %p213 = por %p211, %p212
      %p214 = scmp.ne.s32.totalorder %s205, %s206
      %p215 = scmp.eq.s32.totalorder %s27, 0
      %p216 = por %p214, %p215
      %p217 = scmp.ne.s32.totalorder %s205, %s206
      %p218 = scmp.eq.s32.totalorder %s28, 1
      %p219 = por %p217, %p218
      %p221 = scmp.ne.s32.totalorder %s206, %s220
      %p222 = scmp.eq.s32.totalorder %s28, 0
      %p223 = por %p221, %p222
      %s225 = sadd.s32 %s224, 1
      %p228 = scmp.eq.s32.totalorder %s22, 1
      %p229 = scmp.ne.s32.totalorder %s224, %s226
      %p230 = scmp.eq.s32.totalorder %s22, 0
      %p231 = por %p229, %p230
      %p232 = scmp.ne.s32.totalorder %s224, %s226
      %p233 = scmp.eq.s32.totalorder %s27, 1
      %p234 = por %p232, %p233
      %p235 = scmp.ne.s32.totalorder %s226, %s227
      %p236 = scmp.eq.s32.totalorder %s27, 0
      %p237 = por %p235, %p236
      %p238 = scmp.ne.s32.totalorder %s226, %s227
      %p239 = scmp.eq.s32.totalorder %s28, 1
      %p240 = por %p238, %p239
      %p242 = scmp.ne.s32.totalorder %s227, %s241
      %p243 = scmp.eq.s32.totalorder %s28, 0
      %p244 = por %p242, %p243
      %s246 = sadd.s32 %s245, 1
      %p249 = scmp.eq.s32.totalorder %s22, 1
      %p250 = scmp.ne.s32.totalorder %s245, %s247
      %p251 = scmp.eq.s32.totalorder %s22, 0
      %p252 = por %p250, %p251
      %p253 = scmp.ne.s32.totalorder %s245, %s247
      %p254 = scmp.eq.s32.totalorder %s27, 1
      %p255 = por %p253, %p254
      %p256 = scmp.ne.s32.totalorder %s247, %s248
      %p257 = scmp.eq.s32.totalorder %s27, 0
      %p258 = por %p256, %p257
      %p259 = scmp.ne.s32.totalorder %s247, %s248
      %p260 = scmp.eq.s32.totalorder %s28, 1
      %p261 = por %p259, %p260
      %p263 = scmp.ne.s32.totalorder %s248, %s262
      %p264 = scmp.eq.s32.totalorder %s28, 0
      %p265 = por %p263, %p264
      %s267 = sadd.s32 %s266, 1
      %p270 = scmp.eq.s32.totalorder %s22, 1
      %p271 = scmp.ne.s32.totalorder %s266, %s268
      %p272 = scmp.eq.s32.totalorder %s22, 0
      %p273 = por %p271, %p272
      %p274 = scmp.ne.s32.totalorder %s266, %s268
      %p275 = scmp.eq.s32.totalorder %s27, 1
      %p276 = por %p274, %p275
      %p277 = scmp.ne.s32.totalorder %s268, %s269
      %p278 = scmp.eq.s32.totalorder %s27, 0
      %p279 = por %p277, %p278
      %p280 = scmp.ne.s32.totalorder %s268, %s269
      %p281 = scmp.eq.s32.totalorder %s28, 1
      %p282 = por %p280, %p281
      %p284 = scmp.ne.s32.totalorder %s269, %s283
      %p285 = scmp.eq.s32.totalorder %s28, 0
      %p286 = por %p284, %p285
      %s288 = sadd.s32 %s287, 1
      %p291 = scmp.eq.s32.totalorder %s22, 1
      %p292 = scmp.ne.s32.totalorder %s287, %s289
      %p293 = scmp.eq.s32.totalorder %s22, 0
      %p294 = por %p292, %p293
      %p295 = scmp.ne.s32.totalorder %s287, %s289
      %p296 = scmp.eq.s32.totalorder %s27, 1
      %p297 = por %p295, %p296
      %p298 = scmp.ne.s32.totalorder %s289, %s290
      %p299 = scmp.eq.s32.totalorder %s27, 0
      %p300 = por %p298, %p299
      %p301 = scmp.ne.s32.totalorder %s289, %s290
      %p302 = scmp.eq.s32.totalorder %s28, 1
      %p303 = por %p301, %p302
      %p305 = scmp.ne.s32.totalorder %s290, %s304
      %p306 = scmp.eq.s32.totalorder %s28, 0
      %p307 = por %p305, %p306
      %s308 = ssub.s32 %s22, %s29
      %p309 = scmp.eq.s32.totalorder %s308, 0
      %s311 = sadd.s32 %s310, 1
      %s312 = scalar_select %p309, %s310, %s311
      %p315 = pneg %p309
      %p316 = scmp.eq.s32.totalorder %s22, 1
      %p317 = por %p315, %p316
      %p318 = scmp.ne.s32.totalorder %s310, %s313
      %p319 = scmp.eq.s32.totalorder %s22, 0
      %p320 = por %p318, %p319
      %p321 = scmp.ne.s32.totalorder %s310, %s313
      %p322 = scmp.eq.s32.totalorder %s27, 1
      %p323 = por %p321, %p322
      %p324 = scmp.ne.s32.totalorder %s313, %s314
      %p325 = scmp.eq.s32.totalorder %s27, 0
      %p326 = por %p324, %p325
      %p327 = scmp.ne.s32.totalorder %s313, %s314
      %p328 = scmp.eq.s32.totalorder %s28, 1
      %p329 = por %p327, %p328
      %p331 = scmp.ne.s32.totalorder %s314, %s330
      %p332 = scmp.eq.s32.totalorder %s28, 0
      %p333 = por %p331, %p332
      %p334 = scmp.le.s32.totalorder 1, %s22
      %p335 = scmp.lt.s32.totalorder %s22, 3
      %p336 = pnand %p334, %p335
      %p337 = pneg %p336
      // Predicated region
      $region9: #{tpu_custom_call.1} parent=5 // pred_check
        _
      $region10: #{tpu_custom_call.1} parent=5 // pred_check_branch
        %339 = sbr.rel (%p336) target = $region12
      $region11: #{tpu_custom_call.1} parent=5 // pred_region
        %s340 = ssub.s32 %s22, 1
        // Predicated region
        $region13: #{tpu_custom_call.1} parent=11 // pred_check
          %p341 = pneg %p69
        $region14: #{tpu_custom_call.1} parent=11 // pred_check_branch
          %343 = sbr.rel (%p341) target = $region16
        $region15: #{tpu_custom_call.1} parent=11 // pred_region
          _
        $region16: #{tpu_custom_call.1} parent=11 // pred_fallthru
          _
        // Predicated region
        $region17: #{tpu_custom_call.1} parent=11 // pred_check
          %p344 = pneg %p90
        $region18: #{tpu_custom_call.1} parent=11 // pred_check_branch
          %346 = sbr.rel (%p344) target = $region20
        $region19: #{tpu_custom_call.1} parent=11 // pred_region
          _
        $region20: #{tpu_custom_call.1} parent=11 // pred_fallthru
          _
        // Predicated region
        $region21: #{tpu_custom_call.1} parent=11 // pred_check
          %p347 = pneg %p111
        $region22: #{tpu_custom_call.1} parent=11 // pred_check_branch
          %349 = sbr.rel (%p347) target = $region24
        $region23: #{tpu_custom_call.1} parent=11 // pred_region
          _
        $region24: #{tpu_custom_call.1} parent=11 // pred_fallthru
          _
        // Predicated region
        $region25: #{tpu_custom_call.1} parent=11 // pred_check
          %p350 = pneg %p132
        $region26: #{tpu_custom_call.1} parent=11 // pred_check_branch
          %352 = sbr.rel (%p350) target = $region28
        $region27: #{tpu_custom_call.1} parent=11 // pred_region
          _
        $region28: #{tpu_custom_call.1} parent=11 // pred_fallthru
          _
        // Predicated region
        $region29: #{tpu_custom_call.1} parent=11 // pred_check
          %p353 = pneg %p153
        $region30: #{tpu_custom_call.1} parent=11 // pred_check_branch
          %355 = sbr.rel (%p353) target = $region32
        $region31: #{tpu_custom_call.1} parent=11 // pred_region
          _
        $region32: #{tpu_custom_call.1} parent=11 // pred_fallthru
          _
        // Predicated region
        $region33: #{tpu_custom_call.1} parent=11 // pred_check
          %p356 = pneg %p174
        $region34: #{tpu_custom_call.1} parent=11 // pred_check_branch
          %358 = sbr.rel (%p356) target = $region36
        $region35: #{tpu_custom_call.1} parent=11 // pred_region
          _
        $region36: #{tpu_custom_call.1} parent=11 // pred_fallthru
          _
        // Predicated region
        $region37: #{tpu_custom_call.1} parent=11 // pred_check
          %p359 = pneg %p195
        $region38: #{tpu_custom_call.1} parent=11 // pred_check_branch
          %361 = sbr.rel (%p359) target = $region40
        $region39: #{tpu_custom_call.1} parent=11 // pred_region
          _
        $region40: #{tpu_custom_call.1} parent=11 // pred_fallthru
          _
        // Predicated region
        $region41: #{tpu_custom_call.1} parent=11 // pred_check
          %p362 = pneg %p216
        $region42: #{tpu_custom_call.1} parent=11 // pred_check_branch
          %364 = sbr.rel (%p362) target = $region44
        $region43: #{tpu_custom_call.1} parent=11 // pred_region
          _
        $region44: #{tpu_custom_call.1} parent=11 // pred_fallthru
          _
        // Predicated region
        $region45: #{tpu_custom_call.1} parent=11 // pred_check
          %p365 = pneg %p237
        $region46: #{tpu_custom_call.1} parent=11 // pred_check_branch
          %367 = sbr.rel (%p365) target = $region48
        $region47: #{tpu_custom_call.1} parent=11 // pred_region
          _
        $region48: #{tpu_custom_call.1} parent=11 // pred_fallthru
          _
        // Predicated region
        $region49: #{tpu_custom_call.1} parent=11 // pred_check
          %p368 = pneg %p258
        $region50: #{tpu_custom_call.1} parent=11 // pred_check_branch
          %370 = sbr.rel (%p368) target = $region52
        $region51: #{tpu_custom_call.1} parent=11 // pred_region
          _
        $region52: #{tpu_custom_call.1} parent=11 // pred_fallthru
          _
        // Predicated region
        $region53: #{tpu_custom_call.1} parent=11 // pred_check
          %p371 = pneg %p279
        $region54: #{tpu_custom_call.1} parent=11 // pred_check_branch
          %373 = sbr.rel (%p371) target = $region56
        $region55: #{tpu_custom_call.1} parent=11 // pred_region
          _
        $region56: #{tpu_custom_call.1} parent=11 // pred_fallthru
          _
        // Predicated region
        $region57: #{tpu_custom_call.1} parent=11 // pred_check
          %p374 = pneg %p300
        $region58: #{tpu_custom_call.1} parent=11 // pred_check_branch
          %376 = sbr.rel (%p374) target = $region60
        $region59: #{tpu_custom_call.1} parent=11 // pred_region
          _
        $region60: #{tpu_custom_call.1} parent=11 // pred_fallthru
          _
      $region12: #{tpu_custom_call.1} parent=5 // pred_fallthru
        _
      %p377 = scmp.lt.s32.totalorder %s22, 2
      // Predicated region
      $region61: #{tpu_custom_call.1} parent=5 // pred_check
        %p378 = pneg %p377
      $region62: #{tpu_custom_call.1} parent=5 // pred_check_branch
        %380 = sbr.rel (%p378) target = $region64
      $region63: #{tpu_custom_call.1} parent=5 // pred_region
        // Predicated region
        $region65: #{tpu_custom_call.1} parent=63 // pred_check
          %p381 = pneg %p42
        $region66: #{tpu_custom_call.1} parent=63 // pred_check_branch
          %383 = sbr.rel (%p381) target = $region68
        $region67: #{tpu_custom_call.1} parent=63 // pred_region
          %s384 = smul.u32 2, %s22
          %p385 = scmp.lt.s32.totalorder %s384, 3
          %s386 = scalar_select %p385, %s384, 3
          %s387 = smul.addr %s386, 8
          %s388 = scalar_lea.vmem %s0, %s387
          %s389 = smul.u32 2, %s22
        $region68: #{tpu_custom_call.1} parent=63 // pred_fallthru
          _
      $region64: #{tpu_custom_call.1} parent=5 // pred_fallthru
        _
      %p390 = scmp.le.s32.totalorder 1, %s22
      %p391 = scmp.lt.s32.totalorder %s22, 3
      %p392 = pnand %p390, %p391
      %p393 = pneg %p392
      // Predicated region
      $region69: #{tpu_custom_call.1} parent=5 // pred_check
        _
      $region70: #{tpu_custom_call.1} parent=5 // pred_check_branch
        %395 = sbr.rel (%p392) target = $region72
      $region71: #{tpu_custom_call.1} parent=5 // pred_region
        %s396 = ssub.s32 %s22, 1
        %s397 = smul.u32 2, %s27
        %p398 = scmp.lt.s32.totalorder %s397, 3
        %s399 = scalar_select %p398, %s397, 3
        %s400 = smul.addr %s399, 8
        %s401 = scalar_lea.vmem %s0, %s400
        %p402 = pneg %p48
        %p403 = pneg %p45
        %p404 = pneg %p69
        %p405 = pneg %p66
        %p406 = pneg %p90
        %p407 = pneg %p87
        %p408 = pneg %p111
        %p409 = pneg %p108
        %p410 = pneg %p132
        %p411 = pneg %p129
        %p412 = pneg %p153
        %p413 = pneg %p150
        %p414 = pneg %p174
        %p415 = pneg %p171
        %p416 = pneg %p195
        %p417 = pneg %p192
        %p418 = pneg %p216
        %p419 = pneg %p213
        %p420 = pneg %p237
        %p421 = pneg %p234
        %p422 = pneg %p258
        %p423 = pneg %p255
        %p424 = pneg %p279
        %p425 = pneg %p276
        %p426 = pneg %p300
        %p427 = pneg %p297
        %p428 = pneg %p326
        %p429 = pneg %p323
        %s430 = sand.u32 %s313, 1
        %s431 = scalar_lea.sflag [#allocation3], %s430
        %s432 = sand.u32 %s313, 1
        %s433 = smul.addr %s432, 16
        %s434 = scalar_lea.vmem [#allocation2], %s433
        %s435 = smul.u32 2, %s27
        %p436 = scmp.lt.s32.totalorder %s435, 3
        %s437 = scalar_select %p436, %s435, 3
        %s438 = smul.addr %s437, 8
        %s439 = scalar_lea.vmem %s0, %s438
        %s440 = smul.u32 2, %s27
        %s441 = smul.u32 2, %s27
        %v443 = vld [vmem:[%s439] sm:$0xff]
        %v444 = vld [vmem:[%s439 + $0x8] sm:$0xff]
        %v445 = vld [vmem:[%s1] sm:$0x1]
        %v446 = vld [vmem:[%s2] sm:$0x1]
        %vm447 = vcmask 261120
        %v448 = vsel %vm447, %v443, 0.0
        %449 = vadd.xlane.f32.xlu0 %v448
        %v450 = vpop.xlane.xlu0 %449
        %v451 = vsel %vm447, %v444, 0.0
        %452 = vadd.xlane.f32.xlu0 %v451
        %v453 = vpop.xlane.xlu0 %452
        %v454 = vrcp.pop 32.0
        %v455 = vmul.f32 %v450, %v454
        %v456 = vmul.f32 %v453, %v454
        %v457 = vsub.f32 %v443, %v455
        %v458 = vsub.f32 %v444, %v456
        %v459 = vmul.f32 %v457, %v457
        %v460 = vmul.f32 %v458, %v458
        %v461 = vsel %vm447, %v459, 0.0
        %462 = vadd.xlane.f32.xlu0 %v461
        %v463 = vpop.xlane.xlu0 %462
        %v464 = vsel %vm447, %v460, 0.0
        %465 = vadd.xlane.f32.xlu0 %v464
        %v466 = vpop.xlane.xlu0 %465
        %v467 = vmul.f32 %v463, %v454
        %v468 = vmul.f32 %v466, %v454
        %v469 = vadd.f32 %v467, 1e-05
        %v470 = vadd.f32 %v468, 1e-05
        %v471 = vrsqrt.pop %v469
        %v472 = vrsqrt.pop %v470
        %v473 = vmul.f32 %v457, %v471
        %v474 = vmul.f32 %v458, %v472
        %v476 = vlaneseq
        %v477 = vshrl.u32 %v476, 7
        %v478 = vsub.s32 0, %v477
        %v479 = vrot.slane %v445, %v478
        %v481 = vmul.f32 %v473, %v479
        %v482 = vmul.f32 %v474, %v479
        %v484 = vlaneseq
        %v485 = vshrl.u32 %v484, 7
        %v486 = vsub.s32 0, %v485
        %v487 = vrot.slane %v446, %v486
        %v489 = vadd.f32 %v481, %v487
        %v490 = vadd.f32 %v482, %v487
        %v491 = vpack.c.bf16 %v490, %v489
        %v492 = vld [vmem:[%s3] sm:$0xf]
        %v493 = vld [vmem:[%s3 + $0x4] sm:$0xf]
        %v494 = vld [vmem:[%s3 + $0x8] sm:$0xf]
        %v495 = vld [vmem:[%s3 + $0xc] sm:$0xf]
        %v496 = vld [vmem:[%s4] sm:$0x1]
        %v498 = vlaneseq
        %v499 = vshrl.u32 %v498, 7
        %v500 = vsub.s32 0, %v499
        %v501 = vrot.slane %v496, %v500
        %v507 = vunpack.c.l.b16 %v492
        %v508 = vunpack.c.l.b16 %v493
        %v509 = vunpack.c.l.b16 %v494
        %v510 = vunpack.c.l.b16 %v495
        %v511 = vpack.c.b16 %v508, %v507
        %v512 = vpack.c.b16 %v510, %v509
        %v516 = vsel %vm447, %v491, 0
        %518 = vmatprep.subr.bf16.mxu0 0
        %519 = vmatpush1.bf16.msra.mxu0 %v511
        %520 = vmatprep.subr.bf16.mxu0 0
        %521 = vmatpush1.bf16.msra.mxu0 %v512
        %522 = vmatprep.subr.bf16.mxu0 0
        %523 = vmatpush1.bf16.msra.mxu0 0
        %524 = vmatprep.subr.bf16.mxu0 0
        %525 = vmatpush1.bf16.msra.mxu0 0
        %526 = vmatprep.subr.bf16.mxu0 0
        %527 = vmatpush1.bf16.msra.mxu0 0
        %528 = vmatprep.subr.bf16.mxu0 0
        %529 = vmatpush1.bf16.msra.mxu0 0
        %530 = vmatprep.subr.bf16.mxu0 0
        %531 = vmatpush1.bf16.msra.mxu0 0
        %532 = vmatprep.subr.bf16.mxu0 0
        %533 = vmatpush1.bf16.msra.mxu0 0
        %534 = vmatprep.subr.bf16.mxu0 0
        %535 = vmatpush1.bf16.msra.mxu0 0
        %536 = vmatprep.subr.bf16.mxu0 0
        %537 = vmatpush1.bf16.msra.mxu0 0
        %538 = vmatprep.subr.bf16.mxu0 0
        %539 = vmatpush1.bf16.msra.mxu0 0
        %540 = vmatprep.subr.bf16.mxu0 0
        %541 = vmatpush1.bf16.msra.mxu0 0
        %542 = vmatprep.subr.bf16.mxu0 0
        %543 = vmatpush1.bf16.msra.mxu0 0
        %544 = vmatprep.subr.bf16.mxu0 0
        %545 = vmatpush1.bf16.msra.mxu0 0
        %546 = vmatprep.subr.bf16.mxu0 0
        %547 = vmatpush1.bf16.msra.mxu0 0
        %548 = vmatprep.subr.bf16.mxu0 0
        %549 = vmatpush1.bf16.msra.mxu0 0
        %550 = vmatprep.mubr.bf16.mxu0 0
        %551 = vmatmul.mubr.bf16.gmra.mrb[0].mxu0 %v516
        %v552 = vpop.f32.mrb[0].mxu0
        %v553 = vadd.f32 %v501, %v552
        %v554 = vpop.f32.mrb[0].mxu0
        %v555 = vpop.f32.mrb[0].mxu0
        %v556 = vadd.f32 %v501, %v555
        %v557 = vpop.f32.mrb[0].mxu0
        %558 = vdwg.mxu0
        %v559 = vpack.c.bf16 %v556, %v553
        %v561 = vunpack.c.l.b16 %v559
        %v562 = vunpack.c.h.b16 %v559
        %v563 = vpack.c.b16 %v561, %v561
        %v564 = vpack.c.b16 %v562, %v562
        %565 = vrot.lane.b32.xlu0 %v563, 96
        %v566 = vpop.permute.xlu0 %565
        %vm567 = vcmask 64512
        %v569 = vsel %vm567, %v563, 0
        %v572 = vsel %vm567, %v566, 0
        %574 = vmatprep.subr.bf16.mxu0 0
        %575 = vmatpush1.bf16.xpose.msra.mxu0 %v572
        %576 = vmatprep.subr.bf16.mxu0 0
        %577 = vmatpush1.bf16.xpose.msra.mxu0 0
        %578 = vmatprep.subr.bf16.mxu0 0
        %579 = vmatpush1.bf16.xpose.msra.mxu0 0
        %580 = vmatprep.subr.bf16.mxu0 0
        %581 = vmatpush1.bf16.xpose.msra.mxu0 0
        %582 = vmatprep.subr.bf16.mxu0 0
        %583 = vmatpush1.bf16.xpose.msra.mxu0 0
        %584 = vmatprep.subr.bf16.mxu0 0
        %585 = vmatpush1.bf16.xpose.msra.mxu0 0
        %586 = vmatprep.subr.bf16.mxu0 0
        %587 = vmatpush1.bf16.xpose.msra.mxu0 0
        %588 = vmatprep.subr.bf16.mxu0 0
        %589 = vmatpush1.bf16.xpose.msra.mxu0 0
        %590 = vmatprep.subr.bf16.mxu0 0
        %591 = vmatpush1.bf16.xpose.msra.mxu0 0
        %592 = vmatprep.subr.bf16.mxu0 0
        %593 = vmatpush1.bf16.xpose.msra.mxu0 0
        %594 = vmatprep.subr.bf16.mxu0 0
        %595 = vmatpush1.bf16.xpose.msra.mxu0 0
        %596 = vmatprep.subr.bf16.mxu0 0
        %597 = vmatpush1.bf16.xpose.msra.mxu0 0
        %598 = vmatprep.subr.bf16.mxu0 0
        %599 = vmatpush1.bf16.xpose.msra.mxu0 0
        %600 = vmatprep.subr.bf16.mxu0 0
        %601 = vmatpush1.bf16.xpose.msra.mxu0 0
        %602 = vmatprep.subr.bf16.mxu0 0
        %603 = vmatpush1.bf16.xpose.msra.mxu0 0
        %604 = vmatprep.subr.bf16.mxu0 0
        %605 = vmatpush1.bf16.xpose.msra.mxu0 0
        %606 = vmatprep.mubr.bf16.mxu0 0
        %607 = vmatmul.mubr.bf16.gmra.mrb[0].mxu0 %v569
        %v608 = vpop.f32.mrb[0].mxu0
        %v609 = vadd.f32 0.0, %v608
        %v610 = vpop.f32.mrb[0].mxu0
        %v611 = vpop.f32.mrb[0].mxu0
        %v612 = vpop.f32.mrb[0].mxu0
        %613 = vdwg.mxu0
        %614 = vrot.lane.b32.xlu0 %v564, 96
        %v615 = vpop.permute.xlu0 %614
        %v617 = vsel %vm567, %v564, 0
        %v620 = vsel %vm567, %v615, 0
        %622 = vmatprep.subr.bf16.mxu0 0
        %623 = vmatpush1.bf16.xpose.msra.mxu0 %v620
        %624 = vmatprep.subr.bf16.mxu0 0
        %625 = vmatpush1.bf16.xpose.msra.mxu0 0
        %626 = vmatprep.subr.bf16.mxu0 0
        %627 = vmatpush1.bf16.xpose.msra.mxu0 0
        %628 = vmatprep.subr.bf16.mxu0 0
        %629 = vmatpush1.bf16.xpose.msra.mxu0 0
        %630 = vmatprep.subr.bf16.mxu0 0
        %631 = vmatpush1.bf16.xpose.msra.mxu0 0
        %632 = vmatprep.subr.bf16.mxu0 0
        %633 = vmatpush1.bf16.xpose.msra.mxu0 0
        %634 = vmatprep.subr.bf16.mxu0 0
        %635 = vmatpush1.bf16.xpose.msra.mxu0 0
        %636 = vmatprep.subr.bf16.mxu0 0
        %637 = vmatpush1.bf16.xpose.msra.mxu0 0
        %638 = vmatprep.subr.bf16.mxu0 0
        %639 = vmatpush1.bf16.xpose.msra.mxu0 0
        %640 = vmatprep.subr.bf16.mxu0 0
        %641 = vmatpush1.bf16.xpose.msra.mxu0 0
        %642 = vmatprep.subr.bf16.mxu0 0
        %643 = vmatpush1.bf16.xpose.msra.mxu0 0
        %644 = vmatprep.subr.bf16.mxu0 0
        %645 = vmatpush1.bf16.xpose.msra.mxu0 0
        %646 = vmatprep.subr.bf16.mxu0 0
        %647 = vmatpush1.bf16.xpose.msra.mxu0 0
        %648 = vmatprep.subr.bf16.mxu0 0
        %649 = vmatpush1.bf16.xpose.msra.mxu0 0
        %650 = vmatprep.subr.bf16.mxu0 0
        %651 = vmatpush1.bf16.xpose.msra.mxu0 0
        %652 = vmatprep.subr.bf16.mxu0 0
        %653 = vmatpush1.bf16.xpose.msra.mxu0 0
        %654 = vmatprep.mubr.bf16.mxu0 0
        %655 = vmatmul.mubr.bf16.gmra.mrb[0].mxu0 %v617
        %v656 = vpop.f32.mrb[0].mxu0
        %v657 = vadd.f32 0.0, %v656
        %v658 = vpop.f32.mrb[0].mxu0
        %v659 = vpop.f32.mrb[0].mxu0
        %v660 = vpop.f32.mrb[0].mxu0
        %661 = vdwg.mxu0
        %v662 = vsel %vm567, %v609, -inf
        %663 = vmax.xlane.f32.xlu0 %v662
        %v664 = vpop.xlane.xlu0 %663
        %v665 = vsel %vm567, %v657, -inf
        %666 = vmax.xlane.f32.xlu0 %v665
        %v667 = vpop.xlane.xlu0 %666
        %v668 = vsub.f32 %v609, %v664
        %v669 = vsub.f32 %v657, %v667
        %v670 = vmul.f32 %v668, 1.442695
        %v671 = vpow.pop %v670
        %v672 = vmul.f32 %v669, 1.442695
        %v673 = vpow.pop %v672
        %v674 = vsel %vm567, %v671, 0.0
        %675 = vadd.xlane.f32.xlu0 %v674
        %v676 = vpop.xlane.xlu0 %675
        %v677 = vsel %vm567, %v673, 0.0
        %678 = vadd.xlane.f32.xlu0 %v677
        %v679 = vpop.xlane.xlu0 %678
        %v680 = vrcp.pop %v676
        %v681 = vrcp.pop %v679
        %v682 = vmul.f32 %v671, %v680
        %v683 = vmul.f32 %v673, %v681
        %v684 = vpack.c.bf16 %v682, %v682
        %v685 = vpack.c.bf16 %v683, %v683
        %686 = vrot.lane.b32.xlu0 %v563, 64
        %v687 = vpop.permute.xlu0 %686
        %v689 = vsel %vm567, %v684, 0
        %vm691 = vcmask 1043456
        %v693 = vsel %vm691, %v687, 0
        %695 = vmatprep.subr.bf16.mxu0 0
        %696 = vmatpush1.bf16.msra.mxu0 %v693
        %697 = vmatprep.subr.bf16.mxu0 0
        %698 = vmatpush1.bf16.msra.mxu0 0
        %699 = vmatprep.subr.bf16.mxu0 0
        %700 = vmatpush1.bf16.msra.mxu0 0
        %701 = vmatprep.subr.bf16.mxu0 0
        %702 = vmatpush1.bf16.msra.mxu0 0
        %703 = vmatprep.subr.bf16.mxu0 0
        %704 = vmatpush1.bf16.msra.mxu0 0
        %705 = vmatprep.subr.bf16.mxu0 0
        %706 = vmatpush1.bf16.msra.mxu0 0
        %707 = vmatprep.subr.bf16.mxu0 0
        %708 = vmatpush1.bf16.msra.mxu0 0
        %709 = vmatprep.subr.bf16.mxu0 0
        %710 = vmatpush1.bf16.msra.mxu0 0
        %711 = vmatprep.subr.bf16.mxu0 0
        %712 = vmatpush1.bf16.msra.mxu0 0
        %713 = vmatprep.subr.bf16.mxu0 0
        %714 = vmatpush1.bf16.msra.mxu0 0
        %715 = vmatprep.subr.bf16.mxu0 0
        %716 = vmatpush1.bf16.msra.mxu0 0
        %717 = vmatprep.subr.bf16.mxu0 0
        %718 = vmatpush1.bf16.msra.mxu0 0
        %719 = vmatprep.subr.bf16.mxu0 0
        %720 = vmatpush1.bf16.msra.mxu0 0
        %721 = vmatprep.subr.bf16.mxu0 0
        %722 = vmatpush1.bf16.msra.mxu0 0
        %723 = vmatprep.subr.bf16.mxu0 0
        %724 = vmatpush1.bf16.msra.mxu0 0
        %725 = vmatprep.subr.bf16.mxu0 0
        %726 = vmatpush1.bf16.msra.mxu0 0
        %727 = vmatprep.mubr.bf16.mxu0 0
        %728 = vmatmul.mubr.bf16.gmra.mrb[0].mxu0 %v689
        %v729 = vpop.f32.mrb[0].mxu0
        %v730 = vadd.f32 0.0, %v729
        %v731 = vpop.f32.mrb[0].mxu0
        %v732 = vpop.f32.mrb[0].mxu0
        %v733 = vpop.f32.mrb[0].mxu0
        %734 = vdwg.mxu0
        %735 = vrot.lane.b32.xlu0 %v564, 64
        %v736 = vpop.permute.xlu0 %735
        %v738 = vsel %vm567, %v685, 0
        %v741 = vsel %vm691, %v736, 0
        %743 = vmatprep.subr.bf16.mxu0 0
        %744 = vmatpush1.bf16.msra.mxu0 %v741
        %745 = vmatprep.subr.bf16.mxu0 0
        %746 = vmatpush1.bf16.msra.mxu0 0
        %747 = vmatprep.subr.bf16.mxu0 0
        %748 = vmatpush1.bf16.msra.mxu0 0
        %749 = vmatprep.subr.bf16.mxu0 0
        %750 = vmatpush1.bf16.msra.mxu0 0
        %751 = vmatprep.subr.bf16.mxu0 0
        %752 = vmatpush1.bf16.msra.mxu0 0
        %753 = vmatprep.subr.bf16.mxu0 0
        %754 = vmatpush1.bf16.msra.mxu0 0
        %755 = vmatprep.subr.bf16.mxu0 0
        %756 = vmatpush1.bf16.msra.mxu0 0
        %757 = vmatprep.subr.bf16.mxu0 0
        %758 = vmatpush1.bf16.msra.mxu0 0
        %759 = vmatprep.subr.bf16.mxu0 0
        %760 = vmatpush1.bf16.msra.mxu0 0
        %761 = vmatprep.subr.bf16.mxu0 0
        %762 = vmatpush1.bf16.msra.mxu0 0
        %763 = vmatprep.subr.bf16.mxu0 0
        %764 = vmatpush1.bf16.msra.mxu0 0
        %765 = vmatprep.subr.bf16.mxu0 0
        %766 = vmatpush1.bf16.msra.mxu0 0
        %767 = vmatprep.subr.bf16.mxu0 0
        %768 = vmatpush1.bf16.msra.mxu0 0
        %769 = vmatprep.subr.bf16.mxu0 0
        %770 = vmatpush1.bf16.msra.mxu0 0
        %771 = vmatprep.subr.bf16.mxu0 0
        %772 = vmatpush1.bf16.msra.mxu0 0
        %773 = vmatprep.subr.bf16.mxu0 0
        %774 = vmatpush1.bf16.msra.mxu0 0
        %775 = vmatprep.mubr.bf16.mxu0 0
        %776 = vmatmul.mubr.bf16.gmra.mrb[0].mxu0 %v738
        %v777 = vpop.f32.mrb[0].mxu0
        %v778 = vadd.f32 0.0, %v777
        %v779 = vpop.f32.mrb[0].mxu0
        %v780 = vpop.f32.mrb[0].mxu0
        %v781 = vpop.f32.mrb[0].mxu0
        %782 = vdwg.mxu0
        %v783 = vpack.c.bf16 %v778, %v730
        %784 = vrot.lane.b32.xlu0 %v563, 120
        %v785 = vpop.permute.xlu0 %784
        %786 = vrot.lane.b32.xlu0 %v563, 88
        %v787 = vpop.permute.xlu0 %786
        %v789 = vsel %vm567, %v785, 0
        %v792 = vsel %vm567, %v787, 0
        %794 = vmatprep.subr.bf16.mxu0 0
        %795 = vmatpush1.bf16.xpose.msra.mxu0 %v792
        %796 = vmatprep.subr.bf16.mxu0 0
        %797 = vmatpush1.bf16.xpose.msra.mxu0 0
        %798 = vmatprep.subr.bf16.mxu0 0
        %799 = vmatpush1.bf16.xpose.msra.mxu0 0
        %800 = vmatprep.subr.bf16.mxu0 0
        %801 = vmatpush1.bf16.xpose.msra.mxu0 0
        %802 = vmatprep.subr.bf16.mxu0 0
        %803 = vmatpush1.bf16.xpose.msra.mxu0 0
        %804 = vmatprep.subr.bf16.mxu0 0
        %805 = vmatpush1.bf16.xpose.msra.mxu0 0
        %806 = vmatprep.subr.bf16.mxu0 0
        %807 = vmatpush1.bf16.xpose.msra.mxu0 0
        %808 = vmatprep.subr.bf16.mxu0 0
        %809 = vmatpush1.bf16.xpose.msra.mxu0 0
        %810 = vmatprep.subr.bf16.mxu0 0
        %811 = vmatpush1.bf16.xpose.msra.mxu0 0
        %812 = vmatprep.subr.bf16.mxu0 0
        %813 = vmatpush1.bf16.xpose.msra.mxu0 0
        %814 = vmatprep.subr.bf16.mxu0 0
        %815 = vmatpush1.bf16.xpose.msra.mxu0 0
        %816 = vmatprep.subr.bf16.mxu0 0
        %817 = vmatpush1.bf16.xpose.msra.mxu0 0
        %818 = vmatprep.subr.bf16.mxu0 0
        %819 = vmatpush1.bf16.xpose.msra.mxu0 0
        %820 = vmatprep.subr.bf16.mxu0 0
        %821 = vmatpush1.bf16.xpose.msra.mxu0 0
        %822 = vmatprep.subr.bf16.mxu0 0
        %823 = vmatpush1.bf16.xpose.msra.mxu0 0
        %824 = vmatprep.subr.bf16.mxu0 0
        %825 = vmatpush1.bf16.xpose.msra.mxu0 0
        %826 = vmatprep.mubr.bf16.mxu0 0
        %827 = vmatmul.mubr.bf16.gmra.mrb[0].mxu0 %v789
        %v828 = vpop.f32.mrb[0].mxu0
        %v829 = vadd.f32 0.0, %v828
        %v830 = vpop.f32.mrb[0].mxu0
        %v831 = vpop.f32.mrb[0].mxu0
        %v832 = vpop.f32.mrb[0].mxu0
        %833 = vdwg.mxu0
        %834 = vrot.lane.b32.xlu0 %v564, 120
        %v835 = vpop.permute.xlu0 %834
        %836 = vrot.lane.b32.xlu0 %v564, 88
        %v837 = vpop.permute.xlu0 %836
        %v839 = vsel %vm567, %v835, 0
        %v842 = vsel %vm567, %v837, 0
        %844 = vmatprep.subr.bf16.mxu0 0
        %845 = vmatpush1.bf16.xpose.msra.mxu0 %v842
        %846 = vmatprep.subr.bf16.mxu0 0
        %847 = vmatpush1.bf16.xpose.msra.mxu0 0
        %848 = vmatprep.subr.bf16.mxu0 0
        %849 = vmatpush1.bf16.xpose.msra.mxu0 0
        %850 = vmatprep.subr.bf16.mxu0 0
        %851 = vmatpush1.bf16.xpose.msra.mxu0 0
        %852 = vmatprep.subr.bf16.mxu0 0
        %853 = vmatpush1.bf16.xpose.msra.mxu0 0
        %854 = vmatprep.subr.bf16.mxu0 0
        %855 = vmatpush1.bf16.xpose.msra.mxu0 0
        %856 = vmatprep.subr.bf16.mxu0 0
        %857 = vmatpush1.bf16.xpose.msra.mxu0 0
        %858 = vmatprep.subr.bf16.mxu0 0
        %859 = vmatpush1.bf16.xpose.msra.mxu0 0
        %860 = vmatprep.subr.bf16.mxu0 0
        %861 = vmatpush1.bf16.xpose.msra.mxu0 0
        %862 = vmatprep.subr.bf16.mxu0 0
        %863 = vmatpush1.bf16.xpose.msra.mxu0 0
        %864 = vmatprep.subr.bf16.mxu0 0
        %865 = vmatpush1.bf16.xpose.msra.mxu0 0
        %866 = vmatprep.subr.bf16.mxu0 0
        %867 = vmatpush1.bf16.xpose.msra.mxu0 0
        %868 = vmatprep.subr.bf16.mxu0 0
        %869 = vmatpush1.bf16.xpose.msra.mxu0 0
        %870 = vmatprep.subr.bf16.mxu0 0
        %871 = vmatpush1.bf16.xpose.msra.mxu0 0
        %872 = vmatprep.subr.bf16.mxu0 0
        %873 = vmatpush1.bf16.xpose.msra.mxu0 0
        %874 = vmatprep.subr.bf16.mxu0 0
        %875 = vmatpush1.bf16.xpose.msra.mxu0 0
        %876 = vmatprep.mubr.bf16.mxu0 0
        %877 = vmatmul.mubr.bf16.gmra.mrb[0].mxu0 %v839
        %v878 = vpop.f32.mrb[0].mxu0
        %v879 = vadd.f32 0.0, %v878
        %v880 = vpop.f32.mrb[0].mxu0
        %v881 = vpop.f32.mrb[0].mxu0
        %v882 = vpop.f32.mrb[0].mxu0
        %883 = vdwg.mxu0
        %v884 = vsel %vm567, %v829, -inf
        %885 = vmax.xlane.f32.xlu0 %v884
        %v886 = vpop.xlane.xlu0 %885
        %v887 = vsel %vm567, %v879, -inf
        %888 = vmax.xlane.f32.xlu0 %v887
        %v889 = vpop.xlane.xlu0 %888
        %v890 = vsub.f32 %v829, %v886
        %v891 = vsub.f32 %v879, %v889
        %v892 = vmul.f32 %v890, 1.442695
        %v893 = vpow.pop %v892
        %v894 = vmul.f32 %v891, 1.442695
        %v895 = vpow.pop %v894
        %v896 = vsel %vm567, %v893, 0.0
        %897 = vadd.xlane.f32.xlu0 %v896
        %v898 = vpop.xlane.xlu0 %897
        %v899 = vsel %vm567, %v895, 0.0
        %900 = vadd.xlane.f32.xlu0 %v899
        %v901 = vpop.xlane.xlu0 %900
        %v902 = vrcp.pop %v898
        %v903 = vrcp.pop %v901
        %v904 = vmul.f32 %v893, %v902
        %v905 = vmul.f32 %v895, %v903
        %v906 = vpack.c.bf16 %v904, %v904
        %v907 = vpack.c.bf16 %v905, %v905
        %908 = vrot.lane.b32.xlu0 %v563, 56
        %v909 = vpop.permute.xlu0 %908
        %v911 = vsel %vm567, %v906, 0
        %v914 = vsel %vm691, %v909, 0
        %916 = vmatprep.subr.bf16.mxu0 0
        %917 = vmatpush1.bf16.msra.mxu0 %v914
        %918 = vmatprep.subr.bf16.mxu0 0
        %919 = vmatpush1.bf16.msra.mxu0 0
        %920 = vmatprep.subr.bf16.mxu0 0
        %921 = vmatpush1.bf16.msra.mxu0 0
        %922 = vmatprep.subr.bf16.mxu0 0
        %923 = vmatpush1.bf16.msra.mxu0 0
        %924 = vmatprep.subr.bf16.mxu0 0
        %925 = vmatpush1.bf16.msra.mxu0 0
        %926 = vmatprep.subr.bf16.mxu0 0
        %927 = vmatpush1.bf16.msra.mxu0 0
        %928 = vmatprep.subr.bf16.mxu0 0
        %929 = vmatpush1.bf16.msra.mxu0 0
        %930 = vmatprep.subr.bf16.mxu0 0
        %931 = vmatpush1.bf16.msra.mxu0 0
        %932 = vmatprep.subr.bf16.mxu0 0
        %933 = vmatpush1.bf16.msra.mxu0 0
        %934 = vmatprep.subr.bf16.mxu0 0
        %935 = vmatpush1.bf16.msra.mxu0 0
        %936 = vmatprep.subr.bf16.mxu0 0
        %937 = vmatpush1.bf16.msra.mxu0 0
        %938 = vmatprep.subr.bf16.mxu0 0
        %939 = vmatpush1.bf16.msra.mxu0 0
        %940 = vmatprep.subr.bf16.mxu0 0
        %941 = vmatpush1.bf16.msra.mxu0 0
        %942 = vmatprep.subr.bf16.mxu0 0
        %943 = vmatpush1.bf16.msra.mxu0 0
        %944 = vmatprep.subr.bf16.mxu0 0
        %945 = vmatpush1.bf16.msra.mxu0 0
        %946 = vmatprep.subr.bf16.mxu0 0
        %947 = vmatpush1.bf16.msra.mxu0 0
        %948 = vmatprep.mubr.bf16.mxu0 0
        %949 = vmatmul.mubr.bf16.gmra.mrb[0].mxu0 %v911
        %v950 = vpop.f32.mrb[0].mxu0
        %v951 = vadd.f32 0.0, %v950
        %v952 = vpop.f32.mrb[0].mxu0
        %v953 = vpop.f32.mrb[0].mxu0
        %v954 = vpop.f32.mrb[0].mxu0
        %955 = vdwg.mxu0
        %956 = vrot.lane.b32.xlu0 %v564, 56
        %v957 = vpop.permute.xlu0 %956
        %v959 = vsel %vm567, %v907, 0
        %v962 = vsel %vm691, %v957, 0
        %964 = vmatprep.subr.bf16.mxu0 0
        %965 = vmatpush1.bf16.msra.mxu0 %v962
        %966 = vmatprep.subr.bf16.mxu0 0
        %967 = vmatpush1.bf16.msra.mxu0 0
        %968 = vmatprep.subr.bf16.mxu0 0
        %969 = vmatpush1.bf16.msra.mxu0 0
        %970 = vmatprep.subr.bf16.mxu0 0
        %971 = vmatpush1.bf16.msra.mxu0 0
        %972 = vmatprep.subr.bf16.mxu0 0
        %973 = vmatpush1.bf16.msra.mxu0 0
        %974 = vmatprep.subr.bf16.mxu0 0
        %975 = vmatpush1.bf16.msra.mxu0 0
        %976 = vmatprep.subr.bf16.mxu0 0
        %977 = vmatpush1.bf16.msra.mxu0 0
        %978 = vmatprep.subr.bf16.mxu0 0
        %979 = vmatpush1.bf16.msra.mxu0 0
        %980 = vmatprep.subr.bf16.mxu0 0
        %981 = vmatpush1.bf16.msra.mxu0 0
        %982 = vmatprep.subr.bf16.mxu0 0
        %983 = vmatpush1.bf16.msra.mxu0 0
        %984 = vmatprep.subr.bf16.mxu0 0
        %985 = vmatpush1.bf16.msra.mxu0 0
        %986 = vmatprep.subr.bf16.mxu0 0
        %987 = vmatpush1.bf16.msra.mxu0 0
        %988 = vmatprep.subr.bf16.mxu0 0
        %989 = vmatpush1.bf16.msra.mxu0 0
        %990 = vmatprep.subr.bf16.mxu0 0
        %991 = vmatpush1.bf16.msra.mxu0 0
        %992 = vmatprep.subr.bf16.mxu0 0
        %993 = vmatpush1.bf16.msra.mxu0 0
        %994 = vmatprep.subr.bf16.mxu0 0
        %995 = vmatpush1.bf16.msra.mxu0 0
        %996 = vmatprep.mubr.bf16.mxu0 0
        %997 = vmatmul.mubr.bf16.gmra.mrb[0].mxu0 %v959
        %v998 = vpop.f32.mrb[0].mxu0
        %v999 = vadd.f32 0.0, %v998
        %v1000 = vpop.f32.mrb[0].mxu0
        %v1001 = vpop.f32.mrb[0].mxu0
        %v1002 = vpop.f32.mrb[0].mxu0
        %1003 = vdwg.mxu0
        %v1004 = vpack.c.bf16 %v999, %v951
        %1005 = vrot.lane.b32.xlu0 %v563, 112
        %v1006 = vpop.permute.xlu0 %1005
        %1007 = vrot.lane.b32.xlu0 %v563, 80
        %v1008 = vpop.permute.xlu0 %1007
        %v1010 = vsel %vm567, %v1006, 0
        %v1013 = vsel %vm567, %v1008, 0
        %1015 = vmatprep.subr.bf16.mxu0 0
        %1016 = vmatpush1.bf16.xpose.msra.mxu0 %v1013
        %1017 = vmatprep.subr.bf16.mxu0 0
        %1018 = vmatpush1.bf16.xpose.msra.mxu0 0
        %1019 = vmatprep.subr.bf16.mxu0 0
        %1020 = vmatpush1.bf16.xpose.msra.mxu0 0
        %1021 = vmatprep.subr.bf16.mxu0 0
        %1022 = vmatpush1.bf16.xpose.msra.mxu0 0
        %1023 = vmatprep.subr.bf16.mxu0 0
        %1024 = vmatpush1.bf16.xpose.msra.mxu0 0
        %1025 = vmatprep.subr.bf16.mxu0 0
        %1026 = vmatpush1.bf16.xpose.msra.mxu0 0
        %1027 = vmatprep.subr.bf16.mxu0 0
        %1028 = vmatpush1.bf16.xpose.msra.mxu0 0
        %1029 = vmatprep.subr.bf16.mxu0 0
        %1030 = vmatpush1.bf16.xpose.msra.mxu0 0
        %1031 = vmatprep.subr.bf16.mxu0 0
        %1032 = vmatpush1.bf16.xpose.msra.mxu0 0
        %1033 = vmatprep.subr.bf16.mxu0 0
        %1034 = vmatpush1.bf16.xpose.msra.mxu0 0
        %1035 = vmatprep.subr.bf16.mxu0 0
        %1036 = vmatpush1.bf16.xpose.msra.mxu0 0
        %1037 = vmatprep.subr.bf16.mxu0 0
        %1038 = vmatpush1.bf16.xpose.msra.mxu0 0
        %1039 = vmatprep.subr.bf16.mxu0 0
        %1040 = vmatpush1.bf16.xpose.msra.mxu0 0
        %1041 = vmatprep.subr.bf16.mxu0 0
        %1042 = vmatpush1.bf16.xpose.msra.mxu0 0
        %1043 = vmatprep.subr.bf16.mxu0 0
        %1044 = vmatpush1.bf16.xpose.msra.mxu0 0
        %1045 = vmatprep.subr.bf16.mxu0 0
        %1046 = vmatpush1.bf16.xpose.msra.mxu0 0
        %1047 = vmatprep.mubr.bf16.mxu0 0
        %1048 = vmatmul.mubr.bf16.gmra.mrb[0].mxu0 %v1010
        %v1049 = vpop.f32.mrb[0].mxu0
        %v1050 = vadd.f32 0.0, %v1049
        %v1051 = vpop.f32.mrb[0].mxu0
        %v1052 = vpop.f32.mrb[0].mxu0
        %v1053 = vpop.f32.mrb[0].mxu0
        %1054 = vdwg.mxu0
        %1055 = vrot.lane.b32.xlu0 %v564, 112
        %v1056 = vpop.permute.xlu0 %1055
        %1057 = vrot.lane.b32.xlu0 %v564, 80
        %v1058 = vpop.permute.xlu0 %1057
        %v1060 = vsel %vm567, %v1056, 0
        %v1063 = vsel %vm567, %v1058, 0
        %1065 = vmatprep.subr.bf16.mxu0 0
        %1066 = vmatpush1.bf16.xpose.msra.mxu0 %v1063
        %1067 = vmatprep.subr.bf16.mxu0 0
        %1068 = vmatpush1.bf16.xpose.msra.mxu0 0
        %1069 = vmatprep.subr.bf16.mxu0 0
        %1070 = vmatpush1.bf16.xpose.msra.mxu0 0
        %1071 = vmatprep.subr.bf16.mxu0 0
        %1072 = vmatpush1.bf16.xpose.msra.mxu0 0
        %1073 = vmatprep.subr.bf16.mxu0 0
        %1074 = vmatpush1.bf16.xpose.msra.mxu0 0
        %1075 = vmatprep.subr.bf16.mxu0 0
        %1076 = vmatpush1.bf16.xpose.msra.mxu0 0
        %1077 = vmatprep.subr.bf16.mxu0 0
        %1078 = vmatpush1.bf16.xpose.msra.mxu0 0
        %1079 = vmatprep.subr.bf16.mxu0 0
        %1080 = vmatpush1.bf16.xpose.msra.mxu0 0
        %1081 = vmatprep.subr.bf16.mxu0 0
        %1082 = vmatpush1.bf16.xpose.msra.mxu0 0
        %1083 = vmatprep.subr.bf16.mxu0 0
        %1084 = vmatpush1.bf16.xpose.msra.mxu0 0
        %1085 = vmatprep.subr.bf16.mxu0 0
        %1086 = vmatpush1.bf16.xpose.msra.mxu0 0
        %1087 = vmatprep.subr.bf16.mxu0 0
        %1088 = vmatpush1.bf16.xpose.msra.mxu0 0
        %1089 = vmatprep.subr.bf16.mxu0 0
        %1090 = vmatpush1.bf16.xpose.msra.mxu0 0
        %1091 = vmatprep.subr.bf16.mxu0 0
        %1092 = vmatpush1.bf16.xpose.msra.mxu0 0
        %1093 = vmatprep.subr.bf16.mxu0 0
        %1094 = vmatpush1.bf16.xpose.msra.mxu0 0
        %1095 = vmatprep.subr.bf16.mxu0 0
        %1096 = vmatpush1.bf16.xpose.msra.mxu0 0
        %1097 = vmatprep.mubr.bf16.mxu0 0
        %1098 = vmatmul.mubr.bf16.gmra.mrb[0].mxu0 %v1060
        %v1099 = vpop.f32.mrb[0].mxu0
        %v1100 = vadd.f32 0.0, %v1099
        %v1101 = vpop.f32.mrb[0].mxu0
        %v1102 = vpop.f32.mrb[0].mxu0
        %v1103 = vpop.f32.mrb[0].mxu0
        %1104 = vdwg.mxu0
        %v1105 = vsel %vm567, %v1050, -inf
        %1106 = vmax.xlane.f32.xlu0 %v1105
        %v1107 = vpop.xlane.xlu0 %1106
        %v1108 = vsel %vm567, %v1100, -inf
        %1109 = vmax.xlane.f32.xlu0 %v1108
        %v1110 = vpop.xlane.xlu0 %1109
        %v1111 = vsub.f32 %v1050, %v1107
        %v1112 = vsub.f32 %v1100, %v1110
        %v1113 = vmul.f32 %v1111, 1.442695
        %v1114 = vpow.pop %v1113
        %v1115 = vmul.f32 %v1112, 1.442695
        %v1116 = vpow.pop %v1115
        %v1117 = vsel %vm567, %v1114, 0.0
        %1118 = vadd.xlane.f32.xlu0 %v1117
        %v1119 = vpop.xlane.xlu0 %1118
        %v1120 = vsel %vm567, %v1116, 0.0
        %1121 = vadd.xlane.f32.xlu0 %v1120
        %v1122 = vpop.xlane.xlu0 %1121
        %v1123 = vrcp.pop %v1119
        %v1124 = vrcp.pop %v1122
        %v1125 = vmul.f32 %v1114, %v1123
        %v1126 = vmul.f32 %v1116, %v1124
        %v1127 = vpack.c.bf16 %v1125, %v1125
        %v1128 = vpack.c.bf16 %v1126, %v1126
        %1129 = vrot.lane.b32.xlu0 %v563, 48
        %v1130 = vpop.permute.xlu0 %1129
        %v1132 = vsel %vm567, %v1127, 0
        %v1135 = vsel %vm691, %v1130, 0
        %1137 = vmatprep.subr.bf16.mxu0 0
        %1138 = vmatpush1.bf16.msra.mxu0 %v1135
        %1139 = vmatprep.subr.bf16.mxu0 0
        %1140 = vmatpush1.bf16.msra.mxu0 0
        %1141 = vmatprep.subr.bf16.mxu0 0
        %1142 = vmatpush1.bf16.msra.mxu0 0
        %1143 = vmatprep.subr.bf16.mxu0 0
        %1144 = vmatpush1.bf16.msra.mxu0 0
        %1145 = vmatprep.subr.bf16.mxu0 0
        %1146 = vmatpush1.bf16.msra.mxu0 0
        %1147 = vmatprep.subr.bf16.mxu0 0
        %1148 = vmatpush1.bf16.msra.mxu0 0
        %1149 = vmatprep.subr.bf16.mxu0 0
        %1150 = vmatpush1.bf16.msra.mxu0 0
        %1151 = vmatprep.subr.bf16.mxu0 0
        %1152 = vmatpush1.bf16.msra.mxu0 0
        %1153 = vmatprep.subr.bf16.mxu0 0
        %1154 = vmatpush1.bf16.msra.mxu0 0
        %1155 = vmatprep.subr.bf16.mxu0 0
        %1156 = vmatpush1.bf16.msra.mxu0 0
        %1157 = vmatprep.subr.bf16.mxu0 0
        %1158 = vmatpush1.bf16.msra.mxu0 0
        %1159 = vmatprep.subr.bf16.mxu0 0
        %1160 = vmatpush1.bf16.msra.mxu0 0
        %1161 = vmatprep.subr.bf16.mxu0 0
        %1162 = vmatpush1.bf16.msra.mxu0 0
        %1163 = vmatprep.subr.bf16.mxu0 0
        %1164 = vmatpush1.bf16.msra.mxu0 0
        %1165 = vmatprep.subr.bf16.mxu0 0
        %1166 = vmatpush1.bf16.msra.mxu0 0
        %1167 = vmatprep.subr.bf16.mxu0 0
        %1168 = vmatpush1.bf16.msra.mxu0 0
        %1169 = vmatprep.mubr.bf16.mxu0 0
        %1170 = vmatmul.mubr.bf16.gmra.mrb[0].mxu0 %v1132
        %v1171 = vpop.f32.mrb[0].mxu0
        %v1172 = vadd.f32 0.0, %v1171
        %v1173 = vpop.f32.mrb[0].mxu0
        %v1174 = vpop.f32.mrb[0].mxu0
        %v1175 = vpop.f32.mrb[0].mxu0
        %1176 = vdwg.mxu0
        %1177 = vrot.lane.b32.xlu0 %v564, 48
        %v1178 = vpop.permute.xlu0 %1177
        %v1180 = vsel %vm567, %v1128, 0
        %v1183 = vsel %vm691, %v1178, 0
        %1185 = vmatprep.subr.bf16.mxu0 0
        %1186 = vmatpush1.bf16.msra.mxu0 %v1183
        %1187 = vmatprep.subr.bf16.mxu0 0
        %1188 = vmatpush1.bf16.msra.mxu0 0
        %1189 = vmatprep.subr.bf16.mxu0 0
        %1190 = vmatpush1.bf16.msra.mxu0 0
        %1191 = vmatprep.subr.bf16.mxu0 0
        %1192 = vmatpush1.bf16.msra.mxu0 0
        %1193 = vmatprep.subr.bf16.mxu0 0
        %1194 = vmatpush1.bf16.msra.mxu0 0
        %1195 = vmatprep.subr.bf16.mxu0 0
        %1196 = vmatpush1.bf16.msra.mxu0 0
        %1197 = vmatprep.subr.bf16.mxu0 0
        %1198 = vmatpush1.bf16.msra.mxu0 0
        %1199 = vmatprep.subr.bf16.mxu0 0
        %1200 = vmatpush1.bf16.msra.mxu0 0
        %1201 = vmatprep.subr.bf16.mxu0 0
        %1202 = vmatpush1.bf16.msra.mxu0 0
        %1203 = vmatprep.subr.bf16.mxu0 0
        %1204 = vmatpush1.bf16.msra.mxu0 0
        %1205 = vmatprep.subr.bf16.mxu0 0
        %1206 = vmatpush1.bf16.msra.mxu0 0
        %1207 = vmatprep.subr.bf16.mxu0 0
        %1208 = vmatpush1.bf16.msra.mxu0 0
        %1209 = vmatprep.subr.bf16.mxu0 0
        %1210 = vmatpush1.bf16.msra.mxu0 0
        %1211 = vmatprep.subr.bf16.mxu0 0
        %1212 = vmatpush1.bf16.msra.mxu0 0
        %1213 = vmatprep.subr.bf16.mxu0 0
        %1214 = vmatpush1.bf16.msra.mxu0 0
        %1215 = vmatprep.subr.bf16.mxu0 0
        %1216 = vmatpush1.bf16.msra.mxu0 0
        %1217 = vmatprep.mubr.bf16.mxu0 0
        %1218 = vmatmul.mubr.bf16.gmra.mrb[0].mxu0 %v1180
        %v1219 = vpop.f32.mrb[0].mxu0
        %v1220 = vadd.f32 0.0, %v1219
        %v1221 = vpop.f32.mrb[0].mxu0
        %v1222 = vpop.f32.mrb[0].mxu0
        %v1223 = vpop.f32.mrb[0].mxu0
        %1224 = vdwg.mxu0
        %v1225 = vpack.c.bf16 %v1220, %v1172
        %1226 = vrot.lane.b32.xlu0 %v563, 104
        %v1227 = vpop.permute.xlu0 %1226
        %1228 = vrot.lane.b32.xlu0 %v563, 72
        %v1229 = vpop.permute.xlu0 %1228
        %v1231 = vsel %vm567, %v1227, 0
        %v1234 = vsel %vm567, %v1229, 0
        %1236 = vmatprep.subr.bf16.mxu0 0
        %1237 = vmatpush1.bf16.xpose.msra.mxu0 %v1234
        %1238 = vmatprep.subr.bf16.mxu0 0
        %1239 = vmatpush1.bf16.xpose.msra.mxu0 0
        %1240 = vmatprep.subr.bf16.mxu0 0
        %1241 = vmatpush1.bf16.xpose.msra.mxu0 0
        %1242 = vmatprep.subr.bf16.mxu0 0
        %1243 = vmatpush1.bf16.xpose.msra.mxu0 0
        %1244 = vmatprep.subr.bf16.mxu0 0
        %1245 = vmatpush1.bf16.xpose.msra.mxu0 0
        %1246 = vmatprep.subr.bf16.mxu0 0
        %1247 = vmatpush1.bf16.xpose.msra.mxu0 0
        %1248 = vmatprep.subr.bf16.mxu0 0
        %1249 = vmatpush1.bf16.xpose.msra.mxu0 0
        %1250 = vmatprep.subr.bf16.mxu0 0
        %1251 = vmatpush1.bf16.xpose.msra.mxu0 0
        %1252 = vmatprep.subr.bf16.mxu0 0
        %1253 = vmatpush1.bf16.xpose.msra.mxu0 0
        %1254 = vmatprep.subr.bf16.mxu0 0
        %1255 = vmatpush1.bf16.xpose.msra.mxu0 0
        %1256 = vmatprep.subr.bf16.mxu0 0
        %1257 = vmatpush1.bf16.xpose.msra.mxu0 0
        %1258 = vmatprep.subr.bf16.mxu0 0
        %1259 = vmatpush1.bf16.xpose.msra.mxu0 0
        %1260 = vmatprep.subr.bf16.mxu0 0
        %1261 = vmatpush1.bf16.xpose.msra.mxu0 0
        %1262 = vmatprep.subr.bf16.mxu0 0
        %1263 = vmatpush1.bf16.xpose.msra.mxu0 0
        %1264 = vmatprep.subr.bf16.mxu0 0
        %1265 = vmatpush1.bf16.xpose.msra.mxu0 0
        %1266 = vmatprep.subr.bf16.mxu0 0
        %1267 = vmatpush1.bf16.xpose.msra.mxu0 0
        %1268 = vmatprep.mubr.bf16.mxu0 0
        %1269 = vmatmul.mubr.bf16.gmra.mrb[0].mxu0 %v1231
        %v1270 = vpop.f32.mrb[0].mxu0
        %v1271 = vadd.f32 0.0, %v1270
        %v1272 = vpop.f32.mrb[0].mxu0
        %v1273 = vpop.f32.mrb[0].mxu0
        %v1274 = vpop.f32.mrb[0].mxu0
        %1275 = vdwg.mxu0
        %1276 = vrot.lane.b32.xlu0 %v564, 104
        %v1277 = vpop.permute.xlu0 %1276
        %1278 = vrot.lane.b32.xlu0 %v564, 72
        %v1279 = vpop.permute.xlu0 %1278
        %v1281 = vsel %vm567, %v1277, 0
        %v1284 = vsel %vm567, %v1279, 0
        %1286 = vmatprep.subr.bf16.mxu0 0
        %1287 = vmatpush1.bf16.xpose.msra.mxu0 %v1284
        %1288 = vmatprep.subr.bf16.mxu0 0
        %1289 = vmatpush1.bf16.xpose.msra.mxu0 0
        %1290 = vmatprep.subr.bf16.mxu0 0
        %1291 = vmatpush1.bf16.xpose.msra.mxu0 0
        %1292 = vmatprep.subr.bf16.mxu0 0
        %1293 = vmatpush1.bf16.xpose.msra.mxu0 0
        %1294 = vmatprep.subr.bf16.mxu0 0
        %1295 = vmatpush1.bf16.xpose.msra.mxu0 0
        %1296 = vmatprep.subr.bf16.mxu0 0
        %1297 = vmatpush1.bf16.xpose.msra.mxu0 0
        %1298 = vmatprep.subr.bf16.mxu0 0
        %1299 = vmatpush1.bf16.xpose.msra.mxu0 0
        %1300 = vmatprep.subr.bf16.mxu0 0
        %1301 = vmatpush1.bf16.xpose.msra.mxu0 0
        %1302 = vmatprep.subr.bf16.mxu0 0
        %1303 = vmatpush1.bf16.xpose.msra.mxu0 0
        %1304 = vmatprep.subr.bf16.mxu0 0
        %1305 = vmatpush1.bf16.xpose.msra.mxu0 0
        %1306 = vmatprep.subr.bf16.mxu0 0
        %1307 = vmatpush1.bf16.xpose.msra.mxu0 0
        %1308 = vmatprep.subr.bf16.mxu0 0
        %1309 = vmatpush1.bf16.xpose.msra.mxu0 0
        %1310 = vmatprep.subr.bf16.mxu0 0
        %1311 = vmatpush1.bf16.xpose.msra.mxu0 0
        %1312 = vmatprep.subr.bf16.mxu0 0
        %1313 = vmatpush1.bf16.xpose.msra.mxu0 0
        %1314 = vmatprep.subr.bf16.mxu0 0
        %1315 = vmatpush1.bf16.xpose.msra.mxu0 0
        %1316 = vmatprep.subr.bf16.mxu0 0
        %1317 = vmatpush1.bf16.xpose.msra.mxu0 0
        %1318 = vmatprep.mubr.bf16.mxu0 0
        %1319 = vmatmul.mubr.bf16.gmra.mrb[0].mxu0 %v1281
        %v1320 = vpop.f32.mrb[0].mxu0
        %v1321 = vadd.f32 0.0, %v1320
        %v1322 = vpop.f32.mrb[0].mxu0
        %v1323 = vpop.f32.mrb[0].mxu0
        %v1324 = vpop.f32.mrb[0].mxu0
        %1325 = vdwg.mxu0
        %v1326 = vsel %vm567, %v1271, -inf
        %1327 = vmax.xlane.f32.xlu0 %v1326
        %v1328 = vpop.xlane.xlu0 %1327
        %v1329 = vsel %vm567, %v1321, -inf
        %1330 = vmax.xlane.f32.xlu0 %v1329
        %v1331 = vpop.xlane.xlu0 %1330
        %v1332 = vsub.f32 %v1271, %v1328
        %v1333 = vsub.f32 %v1321, %v1331
        %v1334 = vmul.f32 %v1332, 1.442695
        %v1335 = vpow.pop %v1334
        %v1336 = vmul.f32 %v1333, 1.442695
        %v1337 = vpow.pop %v1336
        %v1338 = vsel %vm567, %v1335, 0.0
        %1339 = vadd.xlane.f32.xlu0 %v1338
        %v1340 = vpop.xlane.xlu0 %1339
        %v1341 = vsel %vm567, %v1337, 0.0
        %1342 = vadd.xlane.f32.xlu0 %v1341
        %v1343 = vpop.xlane.xlu0 %1342
        %v1344 = vrcp.pop %v1340
        %v1345 = vrcp.pop %v1343
        %v1346 = vmul.f32 %v1335, %v1344
        %v1347 = vmul.f32 %v1337, %v1345
        %v1348 = vpack.c.bf16 %v1346, %v1346
        %v1349 = vpack.c.bf16 %v1347, %v1347
        %1350 = vrot.lane.b32.xlu0 %v563, 40
        %v1351 = vpop.permute.xlu0 %1350
        %v1353 = vsel %vm567, %v1348, 0
        %v1356 = vsel %vm691, %v1351, 0
        %1358 = vmatprep.subr.bf16.mxu0 0
        %1359 = vmatpush1.bf16.msra.mxu0 %v1356
        %1360 = vmatprep.subr.bf16.mxu0 0
        %1361 = vmatpush1.bf16.msra.mxu0 0
        %1362 = vmatprep.subr.bf16.mxu0 0
        %1363 = vmatpush1.bf16.msra.mxu0 0
        %1364 = vmatprep.subr.bf16.mxu0 0
        %1365 = vmatpush1.bf16.msra.mxu0 0
        %1366 = vmatprep.subr.bf16.mxu0 0
        %1367 = vmatpush1.bf16.msra.mxu0 0
        %1368 = vmatprep.subr.bf16.mxu0 0
        %1369 = vmatpush1.bf16.msra.mxu0 0
        %1370 = vmatprep.subr.bf16.mxu0 0
        %1371 = vmatpush1.bf16.msra.mxu0 0
        %1372 = vmatprep.subr.bf16.mxu0 0
        %1373 = vmatpush1.bf16.msra.mxu0 0
        %1374 = vmatprep.subr.bf16.mxu0 0
        %1375 = vmatpush1.bf16.msra.mxu0 0
        %1376 = vmatprep.subr.bf16.mxu0 0
        %1377 = vmatpush1.bf16.msra.mxu0 0
        %1378 = vmatprep.subr.bf16.mxu0 0
        %1379 = vmatpush1.bf16.msra.mxu0 0
        %1380 = vmatprep.subr.bf16.mxu0 0
        %1381 = vmatpush1.bf16.msra.mxu0 0
        %1382 = vmatprep.subr.bf16.mxu0 0
        %1383 = vmatpush1.bf16.msra.mxu0 0
        %1384 = vmatprep.subr.bf16.mxu0 0
        %1385 = vmatpush1.bf16.msra.mxu0 0
        %1386 = vmatprep.subr.bf16.mxu0 0
        %1387 = vmatpush1.bf16.msra.mxu0 0
        %1388 = vmatprep.subr.bf16.mxu0 0
        %1389 = vmatpush1.bf16.msra.mxu0 0
        %1390 = vmatprep.mubr.bf16.mxu0 0
        %1391 = vmatmul.mubr.bf16.gmra.mrb[0].mxu0 %v1353
        %v1392 = vpop.f32.mrb[0].mxu0
        %v1393 = vadd.f32 0.0, %v1392
        %v1394 = vpop.f32.mrb[0].mxu0
        %v1395 = vpop.f32.mrb[0].mxu0
        %v1396 = vpop.f32.mrb[0].mxu0
        %1397 = vdwg.mxu0
        %1398 = vrot.lane.b32.xlu0 %v564, 40
        %v1399 = vpop.permute.xlu0 %1398
        %v1401 = vsel %vm567, %v1349, 0
        %v1404 = vsel %vm691, %v1399, 0
        %1406 = vmatprep.subr.bf16.mxu0 0
        %1407 = vmatpush1.bf16.msra.mxu0 %v1404
        %1408 = vmatprep.subr.bf16.mxu0 0
        %1409 = vmatpush1.bf16.msra.mxu0 0
        %1410 = vmatprep.subr.bf16.mxu0 0
        %1411 = vmatpush1.bf16.msra.mxu0 0
        %1412 = vmatprep.subr.bf16.mxu0 0
        %1413 = vmatpush1.bf16.msra.mxu0 0
        %1414 = vmatprep.subr.bf16.mxu0 0
        %1415 = vmatpush1.bf16.msra.mxu0 0
        %1416 = vmatprep.subr.bf16.mxu0 0
        %1417 = vmatpush1.bf16.msra.mxu0 0
        %1418 = vmatprep.subr.bf16.mxu0 0
        %1419 = vmatpush1.bf16.msra.mxu0 0
        %1420 = vmatprep.subr.bf16.mxu0 0
        %1421 = vmatpush1.bf16.msra.mxu0 0
        %1422 = vmatprep.subr.bf16.mxu0 0
        %1423 = vmatpush1.bf16.msra.mxu0 0
        %1424 = vmatprep.subr.bf16.mxu0 0
        %1425 = vmatpush1.bf16.msra.mxu0 0
        %1426 = vmatprep.subr.bf16.mxu0 0
        %1427 = vmatpush1.bf16.msra.mxu0 0
        %1428 = vmatprep.subr.bf16.mxu0 0
        %1429 = vmatpush1.bf16.msra.mxu0 0
        %1430 = vmatprep.subr.bf16.mxu0 0
        %1431 = vmatpush1.bf16.msra.mxu0 0
        %1432 = vmatprep.subr.bf16.mxu0 0
        %1433 = vmatpush1.bf16.msra.mxu0 0
        %1434 = vmatprep.subr.bf16.mxu0 0
        %1435 = vmatpush1.bf16.msra.mxu0 0
        %1436 = vmatprep.subr.bf16.mxu0 0
        %1437 = vmatpush1.bf16.msra.mxu0 0
        %1438 = vmatprep.mubr.bf16.mxu0 0
        %1439 = vmatmul.mubr.bf16.gmra.mrb[0].mxu0 %v1401
        %v1440 = vpop.f32.mrb[0].mxu0
        %v1441 = vadd.f32 0.0, %v1440
        %v1442 = vpop.f32.mrb[0].mxu0
        %v1443 = vpop.f32.mrb[0].mxu0
        %v1444 = vpop.f32.mrb[0].mxu0
        %1445 = vdwg.mxu0
        %v1446 = vpack.c.bf16 %v1441, %v1393
        %1448 = vrot.lane.b32.xlu0 %v1004, 8
        %v1449 = vpop.permute.xlu0 %1448
        %1451 = vrot.lane.b32.xlu0 %v1225, 16
        %v1452 = vpop.permute.xlu0 %1451
        %1454 = vrot.lane.b32.xlu0 %v1446, 24
        %v1455 = vpop.permute.xlu0 %1454
        %v1458 = vsel %vm567, %v783, %v1449
        %vm1459 = vcmask 130048
        %v1461 = vsel %vm1459, %v1458, %v1452
        %vm1462 = vcmask 195584
        %v1464 = vsel %vm1462, %v1461, %v1455
        %v1465 = vld [vmem:[%s5] sm:$0xf]
        %v1466 = vld [vmem:[%s5 + $0x4] sm:$0xf]
        %v1467 = vld [vmem:[%s5 + $0x8] sm:$0xf]
        %v1468 = vld [vmem:[%s5 + $0xc] sm:$0xf]
        %v1469 = vld [vmem:[%s6] sm:$0x1]
        %v1471 = vlaneseq
        %v1472 = vshrl.u32 %v1471, 7
        %v1473 = vsub.s32 0, %v1472
        %v1474 = vrot.slane %v1469, %v1473
        %v1480 = vunpack.c.l.b16 %v1465
        %v1481 = vunpack.c.l.b16 %v1466
        %v1482 = vunpack.c.l.b16 %v1467
        %v1483 = vunpack.c.l.b16 %v1468
        %v1484 = vpack.c.b16 %v1481, %v1480
        %v1485 = vpack.c.b16 %v1483, %v1482
        %v1488 = vsel %vm447, %v1464, 0
        %1490 = vmatprep.subr.bf16.mxu0 0
        %1491 = vmatpush1.bf16.msra.mxu0 %v1484
        %1492 = vmatprep.subr.bf16.mxu0 0
        %1493 = vmatpush1.bf16.msra.mxu0 %v1485
        %1494 = vmatprep.subr.bf16.mxu0 0
        %1495 = vmatpush1.bf16.msra.mxu0 0
        %1496 = vmatprep.subr.bf16.mxu0 0
        %1497 = vmatpush1.bf16.msra.mxu0 0
        %1498 = vmatprep.subr.bf16.mxu0 0
        %1499 = vmatpush1.bf16.msra.mxu0 0
        %1500 = vmatprep.subr.bf16.mxu0 0
        %1501 = vmatpush1.bf16.msra.mxu0 0
        %1502 = vmatprep.subr.bf16.mxu0 0
        %1503 = vmatpush1.bf16.msra.mxu0 0
        %1504 = vmatprep.subr.bf16.mxu0 0
        %1505 = vmatpush1.bf16.msra.mxu0 0
        %1506 = vmatprep.subr.bf16.mxu0 0
        %1507 = vmatpush1.bf16.msra.mxu0 0
        %1508 = vmatprep.subr.bf16.mxu0 0
        %1509 = vmatpush1.bf16.msra.mxu0 0
        %1510 = vmatprep.subr.bf16.mxu0 0
        %1511 = vmatpush1.bf16.msra.mxu0 0
        %1512 = vmatprep.subr.bf16.mxu0 0
        %1513 = vmatpush1.bf16.msra.mxu0 0
        %1514 = vmatprep.subr.bf16.mxu0 0
        %1515 = vmatpush1.bf16.msra.mxu0 0
        %1516 = vmatprep.subr.bf16.mxu0 0
        %1517 = vmatpush1.bf16.msra.mxu0 0
        %1518 = vmatprep.subr.bf16.mxu0 0
        %1519 = vmatpush1.bf16.msra.mxu0 0
        %1520 = vmatprep.subr.bf16.mxu0 0
        %1521 = vmatpush1.bf16.msra.mxu0 0
        %1522 = vmatprep.mubr.bf16.mxu0 0
        %1523 = vmatmul.mubr.bf16.gmra.mrb[0].mxu0 %v1488
        %v1524 = vpop.f32.mrb[0].mxu0
        %v1525 = vadd.f32 %v1474, %v1524
        %v1526 = vpop.f32.mrb[0].mxu0
        %v1527 = vpop.f32.mrb[0].mxu0
        %v1528 = vadd.f32 %v1474, %v1527
        %v1529 = vpop.f32.mrb[0].mxu0
        %1530 = vdwg.mxu0
        %v1531 = vadd.f32 %v443, %v1525
        %v1532 = vadd.f32 %v444, %v1528
        %v1533 = vld [vmem:[%s7] sm:$0x1]
        %v1534 = vld [vmem:[%s8] sm:$0x1]
        %v1535 = vsel %vm447, %v1531, 0.0
        %1536 = vadd.xlane.f32.xlu0 %v1535
        %v1537 = vpop.xlane.xlu0 %1536
        %v1538 = vsel %vm447, %v1532, 0.0
        %1539 = vadd.xlane.f32.xlu0 %v1538
        %v1540 = vpop.xlane.xlu0 %1539
        %v1541 = vmul.f32 %v1537, %v454
        %v1542 = vmul.f32 %v1540, %v454
        %v1543 = vsub.f32 %v1531, %v1541
        %v1544 = vsub.f32 %v1532, %v1542
        %v1545 = vmul.f32 %v1543, %v1543
        %v1546 = vmul.f32 %v1544, %v1544
        %v1547 = vsel %vm447, %v1545, 0.0
        %1548 = vadd.xlane.f32.xlu0 %v1547
        %v1549 = vpop.xlane.xlu0 %1548
        %v1550 = vsel %vm447, %v1546, 0.0
        %1551 = vadd.xlane.f32.xlu0 %v1550
        %v1552 = vpop.xlane.xlu0 %1551
        %v1553 = vmul.f32 %v1549, %v454
        %v1554 = vmul.f32 %v1552, %v454
        %v1555 = vadd.f32 %v1553, 1e-05
        %v1556 = vadd.f32 %v1554, 1e-05
        %v1557 = vrsqrt.pop %v1555
        %v1558 = vrsqrt.pop %v1556
        %v1559 = vmul.f32 %v1543, %v1557
        %v1560 = vmul.f32 %v1544, %v1558
        %v1562 = vlaneseq
        %v1563 = vshrl.u32 %v1562, 7
        %v1564 = vsub.s32 0, %v1563
        %v1565 = vrot.slane %v1533, %v1564
        %v1567 = vmul.f32 %v1559, %v1565
        %v1568 = vmul.f32 %v1560, %v1565
        %v1570 = vlaneseq
        %v1571 = vshrl.u32 %v1570, 7
        %v1572 = vsub.s32 0, %v1571
        %v1573 = vrot.slane %v1534, %v1572
        %v1575 = vadd.f32 %v1567, %v1573
        %v1576 = vadd.f32 %v1568, %v1573
        %v1577 = vpack.c.bf16 %v1576, %v1575
        %v1578 = vld [vmem:[%s9] sm:$0xf]
        %v1579 = vld [vmem:[%s9 + $0x4] sm:$0xf]
        %v1580 = vld [vmem:[%s9 + $0x8] sm:$0xf]
        %v1581 = vld [vmem:[%s9 + $0xc] sm:$0xf]
        %v1582 = vld [vmem:[%s10] sm:$0x1]
        %v1584 = vlaneseq
        %v1585 = vshrl.u32 %v1584, 7
        %v1586 = vsub.s32 0, %v1585
        %v1587 = vrot.slane %v1582, %v1586
        %v1593 = vunpack.c.l.b16 %v1578
        %v1594 = vunpack.c.l.b16 %v1579
        %v1595 = vunpack.c.l.b16 %v1580
        %v1596 = vunpack.c.l.b16 %v1581
        %v1597 = vpack.c.b16 %v1594, %v1593
        %v1598 = vpack.c.b16 %v1596, %v1595
        %v1602 = vsel %vm447, %v1577, 0
        %1604 = vmatprep.subr.bf16.mxu0 0
        %1605 = vmatpush1.bf16.msra.mxu0 %v1597
        %1606 = vmatprep.subr.bf16.mxu0 0
        %1607 = vmatpush1.bf16.msra.mxu0 %v1598
        %1608 = vmatprep.subr.bf16.mxu0 0
        %1609 = vmatpush1.bf16.msra.mxu0 0
        %1610 = vmatprep.subr.bf16.mxu0 0
        %1611 = vmatpush1.bf16.msra.mxu0 0
        %1612 = vmatprep.subr.bf16.mxu0 0
        %1613 = vmatpush1.bf16.msra.mxu0 0
        %1614 = vmatprep.subr.bf16.mxu0 0
        %1615 = vmatpush1.bf16.msra.mxu0 0
        %1616 = vmatprep.subr.bf16.mxu0 0
        %1617 = vmatpush1.bf16.msra.mxu0 0
        %1618 = vmatprep.subr.bf16.mxu0 0
        %1619 = vmatpush1.bf16.msra.mxu0 0
        %1620 = vmatprep.subr.bf16.mxu0 0
        %1621 = vmatpush1.bf16.msra.mxu0 0
        %1622 = vmatprep.subr.bf16.mxu0 0
        %1623 = vmatpush1.bf16.msra.mxu0 0
        %1624 = vmatprep.subr.bf16.mxu0 0
        %1625 = vmatpush1.bf16.msra.mxu0 0
        %1626 = vmatprep.subr.bf16.mxu0 0
        %1627 = vmatpush1.bf16.msra.mxu0 0
        %1628 = vmatprep.subr.bf16.mxu0 0
        %1629 = vmatpush1.bf16.msra.mxu0 0
        %1630 = vmatprep.subr.bf16.mxu0 0
        %1631 = vmatpush1.bf16.msra.mxu0 0
        %1632 = vmatprep.subr.bf16.mxu0 0
        %1633 = vmatpush1.bf16.msra.mxu0 0
        %1634 = vmatprep.subr.bf16.mxu0 0
        %1635 = vmatpush1.bf16.msra.mxu0 0
        %1636 = vmatprep.mubr.bf16.mxu0 0
        %1637 = vmatmul.mubr.bf16.gmra.mrb[0].mxu0 %v1602
        %v1638 = vpop.f32.mrb[0].mxu0
        %v1639 = vadd.f32 %v1587, %v1638
        %v1640 = vpop.f32.mrb[0].mxu0
        %v1641 = vpop.f32.mrb[0].mxu0
        %v1642 = vadd.f32 %v1587, %v1641
        %v1643 = vpop.f32.mrb[0].mxu0
        %1644 = vdwg.mxu0
        %v1645 = vmul.f32 %v1639, 0.5
        %v1646 = vmul.f32 %v1642, 0.5
        %v1647 = vmul.f32 %v1639, %v1639
        %v1648 = vmul.f32 %v1642, %v1642
        %v1649 = vmul.f32 %v1647, %v1639
        %v1650 = vmul.f32 %v1648, %v1642
        %v1651 = vmul.f32 %v1649, 0.044715
        %v1652 = vmul.f32 %v1650, 0.044715
        %v1653 = vadd.f32 %v1639, %v1651
        %v1654 = vadd.f32 %v1642, %v1652
        %v1655 = vmul.f32 %v1653, 0.7978846
        %v1656 = vmul.f32 %v1654, 0.7978846
        %v1657 = vtanh.pop %v1655
        %v1658 = vtanh.pop %v1656
        %v1659 = vadd.f32 %v1657, 1.0
        %v1660 = vadd.f32 %v1658, 1.0
        %v1661 = vmul.f32 %v1645, %v1659
        %v1662 = vmul.f32 %v1646, %v1660
        %v1663 = vpack.c.bf16 %v1662, %v1661
        %v1664 = vld [vmem:[%s11] sm:$0xf]
        %v1665 = vld [vmem:[%s11 + $0x4] sm:$0xf]
        %v1666 = vld [vmem:[%s11 + $0x8] sm:$0xf]
        %v1667 = vld [vmem:[%s11 + $0xc] sm:$0xf]
        %v1668 = vld [vmem:[%s11 + $0x10] sm:$0xf]
        %v1669 = vld [vmem:[%s11 + $0x14] sm:$0xf]
        %v1670 = vld [vmem:[%s11 + $0x18] sm:$0xf]
        %v1671 = vld [vmem:[%s11 + $0x1c] sm:$0xf]
        %v1672 = vld [vmem:[%s11 + $0x20] sm:$0xf]
        %v1673 = vld [vmem:[%s11 + $0x24] sm:$0xf]
        %v1674 = vld [vmem:[%s11 + $0x28] sm:$0xf]
        %v1675 = vld [vmem:[%s11 + $0x2c] sm:$0xf]
        %v1676 = vld [vmem:[%s11 + $0x30] sm:$0xf]
        %v1677 = vld [vmem:[%s11 + $0x34] sm:$0xf]
        %v1678 = vld [vmem:[%s11 + $0x38] sm:$0xf]
        %v1679 = vld [vmem:[%s11 + $0x3c] sm:$0xf]
        %v1680 = vld [vmem:[%s12] sm:$0x1]
        %v1682 = vlaneseq
        %v1683 = vshrl.u32 %v1682, 7
        %v1684 = vsub.s32 0, %v1683
        %v1685 = vrot.slane %v1680, %v1684
        %v1703 = vunpack.c.l.b16 %v1664
        %v1704 = vunpack.c.l.b16 %v1665
        %v1705 = vunpack.c.l.b16 %v1666
        %v1706 = vunpack.c.l.b16 %v1667
        %v1707 = vunpack.c.l.b16 %v1668
        %v1708 = vunpack.c.l.b16 %v1669
        %v1709 = vunpack.c.l.b16 %v1670
        %v1710 = vunpack.c.l.b16 %v1671
        %v1711 = vunpack.c.l.b16 %v1672
        %v1712 = vunpack.c.l.b16 %v1673
        %v1713 = vunpack.c.l.b16 %v1674
        %v1714 = vunpack.c.l.b16 %v1675
        %v1715 = vunpack.c.l.b16 %v1676
        %v1716 = vunpack.c.l.b16 %v1677
        %v1717 = vunpack.c.l.b16 %v1678
        %v1718 = vunpack.c.l.b16 %v1679
        %v1719 = vpack.c.b16 %v1704, %v1703
        %v1720 = vpack.c.b16 %v1706, %v1705
        %v1721 = vpack.c.b16 %v1708, %v1707
        %v1722 = vpack.c.b16 %v1710, %v1709
        %v1723 = vpack.c.b16 %v1712, %v1711
        %v1724 = vpack.c.b16 %v1714, %v1713
        %v1725 = vpack.c.b16 %v1716, %v1715
        %v1726 = vpack.c.b16 %v1718, %v1717
        %1735 = vmatprep.subr.bf16.mxu0 0
        %1736 = vmatpush1.bf16.msra.mxu0 %v1719
        %1737 = vmatprep.subr.bf16.mxu0 0
        %1738 = vmatpush1.bf16.msra.mxu0 %v1720
        %1739 = vmatprep.subr.bf16.mxu0 0
        %1740 = vmatpush1.bf16.msra.mxu0 %v1721
        %1741 = vmatprep.subr.bf16.mxu0 0
        %1742 = vmatpush1.bf16.msra.mxu0 %v1722
        %1743 = vmatprep.subr.bf16.mxu0 0
        %1744 = vmatpush1.bf16.msra.mxu0 %v1723
        %1745 = vmatprep.subr.bf16.mxu0 0
        %1746 = vmatpush1.bf16.msra.mxu0 %v1724
        %1747 = vmatprep.subr.bf16.mxu0 0
        %1748 = vmatpush1.bf16.msra.mxu0 %v1725
        %1749 = vmatprep.subr.bf16.mxu0 0
        %1750 = vmatpush1.bf16.msra.mxu0 %v1726
        %1751 = vmatprep.subr.bf16.mxu0 0
        %1752 = vmatpush1.bf16.msra.mxu0 0
        %1753 = vmatprep.subr.bf16.mxu0 0
        %1754 = vmatpush1.bf16.msra.mxu0 0
        %1755 = vmatprep.subr.bf16.mxu0 0
        %1756 = vmatpush1.bf16.msra.mxu0 0
        %1757 = vmatprep.subr.bf16.mxu0 0
        %1758 = vmatpush1.bf16.msra.mxu0 0
        %1759 = vmatprep.subr.bf16.mxu0 0
        %1760 = vmatpush1.bf16.msra.mxu0 0
        %1761 = vmatprep.subr.bf16.mxu0 0
        %1762 = vmatpush1.bf16.msra.mxu0 0
        %1763 = vmatprep.subr.bf16.mxu0 0
        %1764 = vmatpush1.bf16.msra.mxu0 0
        %1765 = vmatprep.subr.bf16.mxu0 0
        %1766 = vmatpush1.bf16.msra.mxu0 0
        %1767 = vmatprep.mubr.bf16.mxu0 0
        %1768 = vmatmul.mubr.bf16.gmra.mrb[0].mxu0 %v1663
        %v1769 = vpop.f32.mrb[0].mxu0
        %v1770 = vadd.f32 %v1685, %v1769
        %v1771 = vpop.f32.mrb[0].mxu0
        %v1772 = vpop.f32.mrb[0].mxu0
        %v1773 = vadd.f32 %v1685, %v1772
        %v1774 = vpop.f32.mrb[0].mxu0
        %1775 = vdwg.mxu0
        %v1776 = vadd.f32 %v1531, %v1770
        %v1777 = vadd.f32 %v1532, %v1773
        %1778 = vst.msk [vmem:[%s434] sm:$0xff] %vm447, %v1776
        %1779 = vst.msk [vmem:[%s434 + $0x8] sm:$0xff] %vm447, %v1777
        %s1780 = sand.u32 %s313, 1
        %s1781 = scalar_lea.sflag [#allocation3], %s1780
        %s1782 = sand.u32 %s313, 1
        %s1783 = smul.addr %s1782, 16
        %s1784 = scalar_lea.vmem [#allocation2], %s1783
        // Predicated region
        $region73: #{tpu_custom_call.1} parent=71 // pred_check
          %p1785 = pneg %p323
        $region74: #{tpu_custom_call.1} parent=71 // pred_check_branch
          %1787 = sbr.rel (%p1785) target = $region76
        $region75: #{tpu_custom_call.1} parent=71 // pred_region
          %s1788 = smul.u32 2, %s27
          %s1790 = ssub.s32 256, 256
          %1791 = vsyncadd %s1781, %s1790
          %s1792 = smul.addr %s1788, 128
          %s1793 = scalar_lea.hbm %s13, %s1792
          %s1794 = sshll.u32 %s1784, 4
          %s1795 = int_to_ptr.vmem [resolvable:$true] %s1794
          %1800 = dma.vmem_to_hbm [thread:$0]  %s1795, 256, %s1793, %s1781, 128, 128, 8
        $region76: #{tpu_custom_call.1} parent=71 // pred_fallthru
          _
      $region72: #{tpu_custom_call.1} parent=5 // pred_fallthru
        _
      %p1801 = scmp.le.s32.totalorder 2, %s22
      // Predicated region
      $region77: #{tpu_custom_call.1} parent=5 // pred_check
        %p1802 = pneg %p1801
      $region78: #{tpu_custom_call.1} parent=5 // pred_check_branch
        %1804 = sbr.rel (%p1802) target = $region80
      $region79: #{tpu_custom_call.1} parent=5 // pred_region
        %s1805 = ssub.s32 %s22, 2
        // Predicated region
        $region81: #{tpu_custom_call.1} parent=79 // pred_check
          %p1806 = pneg %p329
        $region82: #{tpu_custom_call.1} parent=79 // pred_check_branch
          %1808 = sbr.rel (%p1806) target = $region84
        $region83: #{tpu_custom_call.1} parent=79 // pred_region
          %s1809 = sand.u32 %s314, 1
          %s1810 = scalar_lea.sflag [#allocation3], %s1809
          %s1811 = sand.u32 %s314, 1
          %s1812 = smul.addr %s1811, 16
          %s1813 = scalar_lea.vmem [#allocation2], %s1812
          %1814 = dma.done %s1810, 256
        $region84: #{tpu_custom_call.1} parent=79 // pred_fallthru
          _
      $region80: #{tpu_custom_call.1} parent=5 // pred_fallthru
        _
    $region6: #{tpu_custom_call.1} parent=1 // loop_footer
      %s26 = sadd.s32 1, %s22
    $region7: #{tpu_custom_call.1} parent=1 // loop_footer_branch
      %21 = sbr.rel target = $region3
    $region8: #{tpu_custom_call.1} parent=1 // loop_exit
      _
    %1815 = vsyncpa [#allocation3], 1
    %s1816 = scalar_lea.sflag [#allocation3], 1
    %1817 = vsyncpa %s1816, 1

</llo_original>
